<compile_context>
chip_gen: v7x
topology: tpu7x:2x2x1
jax: 0.10.0
libtpu: 0.0.40
codegen_flags: <defaults>
</compile_context>

<pallas_src>
import jax
import jax.numpy as jnp
from jax.experimental import pallas as pl
from jax.experimental.pallas import tpu as pltpu


def _round_up(x, m):
    return (x + m - 1) // m * m


def _leaky_relu(x, slope=0.2):
    return jnp.where(x > 0, x, slope * x)


def _cdisc_kernel(img_ref, lbl_ref, w1i_ref, w1l_ref, w2_ref, w3_ref,
                  bias_ref, out_ref):
    # Packed small params: rows = [b1, b2, b3, w4_row, (b4, 0, ...)].
    biases = bias_ref[...]                          # (5, H) f32
    b1 = biases[0:1, :]
    b2 = biases[1:2, :]
    b3 = biases[2:3, :]
    w4 = biases[3:4, :]
    b4 = biases[4:5, 0:1]                           # (1, 1)

    # ---- linear1: img part on the MXU (bf16 in, f32 acc); label part (K=10)
    # as exact f32 rank-1 updates on the VPU (no pad, no unaligned-K matmul).
    x_img = img_ref[...].astype(jnp.bfloat16)       # cast in-kernel (no wrapper op)
    h = jnp.dot(x_img, w1i_ref[...], preferred_element_type=jnp.float32)

    lbl = lbl_ref[...]                              # (B, CLS) f32
    w1l = w1l_ref[...]                              # (CLS, H) f32
    for k in range(w1l.shape[0]):                   # CLS is small & static -> unroll
        h = h + lbl[:, k:k + 1] * w1l[k:k + 1, :]
    h = _leaky_relu(h + b1)

    # ---- linear2 -> dropout(eval: identity) -> leaky_relu(0.2)
    h = jnp.dot(h.astype(jnp.bfloat16), w2_ref[...],
                preferred_element_type=jnp.float32) + b2
    h = _leaky_relu(h)

    # ---- linear3 -> dropout(eval: identity) -> leaky_relu(0.2)
    h = jnp.dot(h.astype(jnp.bfloat16), w3_ref[...],
                preferred_element_type=jnp.float32) + b3
    h = _leaky_relu(h)

    # ---- linear4 (N=1): VPU broadcast-multiply + lane reduction, then sigmoid.
    logit = jnp.sum(h * w4, axis=-1, keepdims=True) + b4
    out_ref[...] = jax.nn.sigmoid(logit).astype(out_ref.dtype)


def prepare_params(params, img_features):
    """One-time conversion: split w1 into img/label parts, pad the img K-dim to a
    multiple of 128 only if needed, cast streamed weights to bf16, and coalesce
    the small per-layer vectors into one packed (5, H) f32 array."""
    D, H = params["w1"].shape
    lbl_features = D - img_features
    img_dp = _round_up(img_features, 128)

    w1_img = params["w1"][:img_features]
    if img_dp != img_features:
        w1_img = jnp.pad(w1_img, ((0, img_dp - img_features), (0, 0)))
    w1_img = w1_img.astype(jnp.bfloat16)
    w1_lbl = params["w1"][img_features:].astype(jnp.float32)   # (CLS, H), exact VPU path

    b4_row = jnp.zeros((H,), jnp.float32).at[0].set(params["b4"][0])
    biases = jnp.stack(
        [params["b1"], params["b2"], params["b3"],
         params["w4"].reshape(H), b4_row], axis=0).astype(jnp.float32)   # (5, H)

    return {
        "w1_img": w1_img,                               # (img_dp, H) bf16
        "w1_lbl": w1_lbl,                               # (CLS, H)   f32
        "w2": params["w2"].astype(jnp.bfloat16),        # (H, H)     bf16
        "w3": params["w3"].astype(jnp.bfloat16),        # (H, H)     bf16
        "biases": biases,                               # (5, H)     f32
    }


@jax.jit
def cdiscriminator_forward(img, label, kp):
    """img: (B, C, H, W) f32, label: (B, class_axis) f32, kp: prepare_params(...)"""
    B = img.shape[0]
    img_flat = img.reshape(B, -1)                       # bitcast-free reshape
    img_d = img_flat.shape[1]
    lbl_d = label.shape[1]

    img_dp, H = kp["w1_img"].shape
    assert kp["w1_lbl"].shape == (lbl_d, H)

    # Only pad when the image feature count is not already lane-aligned
    # (3*16*16 = 768 is a multiple of 128, so no wrapper op is emitted here).
    if img_dp != img_d:
        img_flat = jnp.pad(img_flat, ((0, 0), (0, img_dp - img_d)))

    full = lambda shape: pl.BlockSpec(shape, lambda: (0,) * len(shape))

    flops = 2 * B * (img_dp * H + lbl_d * H + 2 * H * H) + 2 * B * H
    bytes_accessed = (
        B * img_dp * 4 + B * lbl_d * 4                  # activations (f32 in)
        + img_dp * H * 2 + H * H * 2 + H * H * 2        # bf16 streamed weights
        + lbl_d * H * 4 + 5 * H * 4                     # f32 small params
        + B * 4)                                        # output

    out = pl.pallas_call(
        _cdisc_kernel,
        out_shape=jax.ShapeDtypeStruct((B, 1), jnp.float32),
        grid=(),
        in_specs=[
            full((B, img_dp)),          # img (f32, cast in-kernel)
            full((B, lbl_d)),           # label (natural shape, f32)
            full((img_dp, H)),          # w1 img part (bf16)
            full((lbl_d, H)),           # w1 label part (f32)
            full((H, H)),               # w2 (bf16, auto-DMA)
            full((H, H)),               # w3 (bf16, auto-DMA)
            full((5, H)),               # packed [b1,b2,b3,w4,b4] (one DMA)
        ],
        out_specs=full((B, 1)),
        compiler_params=pltpu.CompilerParams(vmem_limit_bytes=16 << 20),
        cost_estimate=pl.CostEstimate(flops=int(flops),
                                      transcendentals=int(B),
                                      bytes_accessed=int(bytes_accessed)),
    )(img_flat, label, kp["w1_img"], kp["w1_lbl"], kp["w2"], kp["w3"],
      kp["biases"])
    return out


def init_params(key, class_axis, patch_size, ch, hidden=512):
    """Deterministic PyTorch-style (uniform +-1/sqrt(fan_in)) init."""
    D = class_axis + patch_size * patch_size * ch

    def linear(k, fan_in, fan_out):
        kw, kb = jax.random.split(k)
        bound = 1.0 / jnp.sqrt(fan_in)
        w = jax.random.uniform(kw, (fan_in, fan_out), jnp.float32, -bound, bound)
        b = jax.random.uniform(kb, (fan_out,), jnp.float32, -bound, bound)
        return w, b

    k1, k2, k3, k4 = jax.random.split(key, 4)
    w1, b1 = linear(k1, D, hidden)
    w2, b2 = linear(k2, hidden, hidden)
    w3, b3 = linear(k3, hidden, hidden)
    w4, b4 = linear(k4, hidden, 1)
    return {"w1": w1, "b1": b1, "w2": w2, "b2": b2,
            "w3": w3, "b3": b3, "w4": w4, "b4": b4}


def reference_forward(img, label, params):
    """Pure-JAX f32 reference (eval-mode dropout = identity), matches PyTorch forward."""
    B = img.shape[0]
    x = jnp.concatenate([img.reshape(B, -1), label], axis=-1)
    x = _leaky_relu(x @ params["w1"] + params["b1"])
    x = _leaky_relu(x @ params["w2"] + params["b2"])
    x = _leaky_relu(x @ params["w3"] + params["b3"])
    return jax.nn.sigmoid(x @ params["w4"] + params["b4"])


if __name__ == "__main__":
    # Small shapes consistent with the module: batch=8, ch=3, patch=16, classes=10.
    B, C, P, CLASSES = 8, 3, 16, 10

    key = jax.random.PRNGKey(0)
    k_img, k_lbl, k_par = jax.random.split(key, 3)

    img = jax.random.normal(k_img, (B, C, P, P), jnp.float32)
    lbl_idx = jax.random.randint(k_lbl, (B,), 0, CLASSES)
    label = jax.nn.one_hot(lbl_idx, CLASSES, dtype=jnp.float32)

    params = init_params(k_par, CLASSES, P, C)
    kparams = prepare_params(params, img_features=C * P * P)

    out = cdiscriminator_forward(img, label, kparams)
    out = jax.block_until_ready(out)

    ref = reference_forward(img, label, params)
    assert out.shape == (B, 1), out.shape
    # bf16 weights/activations feeding the MXU -> loosened tolerance vs f32 ref.
    err = jnp.max(jnp.abs(out - ref))
    assert err < 2e-2, f"max abs err {err}"

    print("KERNEL_OK")
</pallas_src>

<mosaic_0001>
module attributes {stable_mosaic.version = 11 : i64} {
  func.func @_cdisc_kernel(%arg0: memref<8x768xf32, #tpu.memory_space<vmem>>, %arg1: memref<8x10xf32, #tpu.memory_space<vmem>>, %arg2: memref<768x512xbf16, #tpu.memory_space<vmem>>, %arg3: memref<10x512xf32, #tpu.memory_space<vmem>>, %arg4: memref<512x512xbf16, #tpu.memory_space<vmem>>, %arg5: memref<512x512xbf16, #tpu.memory_space<vmem>>, %arg6: memref<5x512xf32, #tpu.memory_space<vmem>>, %arg7: memref<8x1xf32, #tpu.memory_space<vmem>>) attributes {dimension_semantics = [], scalar_prefetch = 0 : i64, scratch_operands = 0 : i64, tpu.core_type = #tpu.core_type<tc>} {
    %c0 = arith.constant 0 : index
    %c0_0 = arith.constant 0 : index
    %0 = vector.load %arg6[%c0, %c0_0] : memref<5x512xf32, #tpu.memory_space<vmem>>, vector<5x512xf32>
    %1 = vector.extract_strided_slice %0 {offsets = [0, 0], sizes = [1, 512], strides = [1, 1]} : vector<5x512xf32> to vector<1x512xf32>
    %2 = vector.extract_strided_slice %0 {offsets = [1, 0], sizes = [1, 512], strides = [1, 1]} : vector<5x512xf32> to vector<1x512xf32>
    %3 = vector.extract_strided_slice %0 {offsets = [2, 0], sizes = [1, 512], strides = [1, 1]} : vector<5x512xf32> to vector<1x512xf32>
    %4 = vector.extract_strided_slice %0 {offsets = [3, 0], sizes = [1, 512], strides = [1, 1]} : vector<5x512xf32> to vector<1x512xf32>
    %5 = vector.extract_strided_slice %0 {offsets = [4, 0], sizes = [1, 1], strides = [1, 1]} : vector<5x512xf32> to vector<1x1xf32>
    %c0_1 = arith.constant 0 : index
    %c0_2 = arith.constant 0 : index
    %6 = vector.load %arg0[%c0_1, %c0_2] : memref<8x768xf32, #tpu.memory_space<vmem>>, vector<8x768xf32>
    %7 = arith.truncf %6 : vector<8x768xf32> to vector<8x768xbf16>
    %c0_3 = arith.constant 0 : index
    %c0_4 = arith.constant 0 : index
    %8 = vector.load %arg2[%c0_3, %c0_4] : memref<768x512xbf16, #tpu.memory_space<vmem>>, vector<768x512xbf16>
    %cst = arith.constant dense<0.000000e+00> : vector<8x512xf32>
    %9 = tpu.matmul %7, %8, %cst {dimension_numbers = #tpu.dot_dimension_numbers<[1], [0], [0], [1], [0, 0, 1, 1], [], []>} : vector<8x768xbf16>, vector<768x512xbf16>, vector<8x512xf32> -> vector<8x512xf32>
    %c0_5 = arith.constant 0 : index
    %c0_6 = arith.constant 0 : index
    %10 = vector.load %arg1[%c0_5, %c0_6] : memref<8x10xf32, #tpu.memory_space<vmem>>, vector<8x10xf32>
    %c0_7 = arith.constant 0 : index
    %c0_8 = arith.constant 0 : index
    %11 = vector.load %arg3[%c0_7, %c0_8] : memref<10x512xf32, #tpu.memory_space<vmem>>, vector<10x512xf32>
    %12 = vector.extract_strided_slice %10 {offsets = [0, 0], sizes = [8, 1], strides = [1, 1]} : vector<8x10xf32> to vector<8x1xf32>
    %13 = vector.extract_strided_slice %11 {offsets = [0, 0], sizes = [1, 512], strides = [1, 1]} : vector<10x512xf32> to vector<1x512xf32>
    %14 = vector.broadcast %12 : vector<8x1xf32> to vector<8x512xf32>
    %15 = vector.broadcast %13 : vector<1x512xf32> to vector<8x512xf32>
    %16 = arith.mulf %14, %15 : vector<8x512xf32>
    %17 = arith.addf %9, %16 : vector<8x512xf32>
    %18 = vector.extract_strided_slice %10 {offsets = [0, 1], sizes = [8, 1], strides = [1, 1]} : vector<8x10xf32> to vector<8x1xf32>
    %19 = vector.extract_strided_slice %11 {offsets = [1, 0], sizes = [1, 512], strides = [1, 1]} : vector<10x512xf32> to vector<1x512xf32>
    %20 = vector.broadcast %18 : vector<8x1xf32> to vector<8x512xf32>
    %21 = vector.broadcast %19 : vector<1x512xf32> to vector<8x512xf32>
    %22 = arith.mulf %20, %21 : vector<8x512xf32>
    %23 = arith.addf %17, %22 : vector<8x512xf32>
    %24 = vector.extract_strided_slice %10 {offsets = [0, 2], sizes = [8, 1], strides = [1, 1]} : vector<8x10xf32> to vector<8x1xf32>
    %25 = vector.extract_strided_slice %11 {offsets = [2, 0], sizes = [1, 512], strides = [1, 1]} : vector<10x512xf32> to vector<1x512xf32>
    %26 = vector.broadcast %24 : vector<8x1xf32> to vector<8x512xf32>
    %27 = vector.broadcast %25 : vector<1x512xf32> to vector<8x512xf32>
    %28 = arith.mulf %26, %27 : vector<8x512xf32>
    %29 = arith.addf %23, %28 : vector<8x512xf32>
    %30 = vector.extract_strided_slice %10 {offsets = [0, 3], sizes = [8, 1], strides = [1, 1]} : vector<8x10xf32> to vector<8x1xf32>
    %31 = vector.extract_strided_slice %11 {offsets = [3, 0], sizes = [1, 512], strides = [1, 1]} : vector<10x512xf32> to vector<1x512xf32>
    %32 = vector.broadcast %30 : vector<8x1xf32> to vector<8x512xf32>
    %33 = vector.broadcast %31 : vector<1x512xf32> to vector<8x512xf32>
    %34 = arith.mulf %32, %33 : vector<8x512xf32>
    %35 = arith.addf %29, %34 : vector<8x512xf32>
    %36 = vector.extract_strided_slice %10 {offsets = [0, 4], sizes = [8, 1], strides = [1, 1]} : vector<8x10xf32> to vector<8x1xf32>
    %37 = vector.extract_strided_slice %11 {offsets = [4, 0], sizes = [1, 512], strides = [1, 1]} : vector<10x512xf32> to vector<1x512xf32>
    %38 = vector.broadcast %36 : vector<8x1xf32> to vector<8x512xf32>
    %39 = vector.broadcast %37 : vector<1x512xf32> to vector<8x512xf32>
    %40 = arith.mulf %38, %39 : vector<8x512xf32>
    %41 = arith.addf %35, %40 : vector<8x512xf32>
    %42 = vector.extract_strided_slice %10 {offsets = [0, 5], sizes = [8, 1], strides = [1, 1]} : vector<8x10xf32> to vector<8x1xf32>
    %43 = vector.extract_strided_slice %11 {offsets = [5, 0], sizes = [1, 512], strides = [1, 1]} : vector<10x512xf32> to vector<1x512xf32>
    %44 = vector.broadcast %42 : vector<8x1xf32> to vector<8x512xf32>
    %45 = vector.broadcast %43 : vector<1x512xf32> to vector<8x512xf32>
    %46 = arith.mulf %44, %45 : vector<8x512xf32>
    %47 = arith.addf %41, %46 : vector<8x512xf32>
    %48 = vector.extract_strided_slice %10 {offsets = [0, 6], sizes = [8, 1], strides = [1, 1]} : vector<8x10xf32> to vector<8x1xf32>
    %49 = vector.extract_strided_slice %11 {offsets = [6, 0], sizes = [1, 512], strides = [1, 1]} : vector<10x512xf32> to vector<1x512xf32>
    %50 = vector.broadcast %48 : vector<8x1xf32> to vector<8x512xf32>
    %51 = vector.broadcast %49 : vector<1x512xf32> to vector<8x512xf32>
    %52 = arith.mulf %50, %51 : vector<8x512xf32>
    %53 = arith.addf %47, %52 : vector<8x512xf32>
    %54 = vector.extract_strided_slice %10 {offsets = [0, 7], sizes = [8, 1], strides = [1, 1]} : vector<8x10xf32> to vector<8x1xf32>
    %55 = vector.extract_strided_slice %11 {offsets = [7, 0], sizes = [1, 512], strides = [1, 1]} : vector<10x512xf32> to vector<1x512xf32>
    %56 = vector.broadcast %54 : vector<8x1xf32> to vector<8x512xf32>
    %57 = vector.broadcast %55 : vector<1x512xf32> to vector<8x512xf32>
    %58 = arith.mulf %56, %57 : vector<8x512xf32>
    %59 = arith.addf %53, %58 : vector<8x512xf32>
    %60 = vector.extract_strided_slice %10 {offsets = [0, 8], sizes = [8, 1], strides = [1, 1]} : vector<8x10xf32> to vector<8x1xf32>
    %61 = vector.extract_strided_slice %11 {offsets = [8, 0], sizes = [1, 512], strides = [1, 1]} : vector<10x512xf32> to vector<1x512xf32>
    %62 = vector.broadcast %60 : vector<8x1xf32> to vector<8x512xf32>
    %63 = vector.broadcast %61 : vector<1x512xf32> to vector<8x512xf32>
    %64 = arith.mulf %62, %63 : vector<8x512xf32>
    %65 = arith.addf %59, %64 : vector<8x512xf32>
    %66 = vector.extract_strided_slice %10 {offsets = [0, 9], sizes = [8, 1], strides = [1, 1]} : vector<8x10xf32> to vector<8x1xf32>
    %67 = vector.extract_strided_slice %11 {offsets = [9, 0], sizes = [1, 512], strides = [1, 1]} : vector<10x512xf32> to vector<1x512xf32>
    %68 = vector.broadcast %66 : vector<8x1xf32> to vector<8x512xf32>
    %69 = vector.broadcast %67 : vector<1x512xf32> to vector<8x512xf32>
    %70 = arith.mulf %68, %69 : vector<8x512xf32>
    %71 = arith.addf %65, %70 : vector<8x512xf32>
    %72 = vector.broadcast %1 : vector<1x512xf32> to vector<8x512xf32>
    %73 = arith.addf %71, %72 : vector<8x512xf32>
    %cst_9 = arith.constant 0.000000e+00 : f32
    %74 = vector.broadcast %cst_9 : f32 to vector<8x512xf32>
    %75 = arith.cmpf ogt, %73, %74 : vector<8x512xf32>
    %cst_10 = arith.constant 2.000000e-01 : f32
    %76 = vector.broadcast %cst_10 : f32 to vector<8x512xf32>
    %77 = arith.mulf %76, %73 : vector<8x512xf32>
    %78 = arith.select %75, %73, %77 : vector<8x512xi1>, vector<8x512xf32>
    %79 = arith.truncf %78 : vector<8x512xf32> to vector<8x512xbf16>
    %c0_11 = arith.constant 0 : index
    %c0_12 = arith.constant 0 : index
    %80 = vector.load %arg4[%c0_11, %c0_12] : memref<512x512xbf16, #tpu.memory_space<vmem>>, vector<512x512xbf16>
    %cst_13 = arith.constant dense<0.000000e+00> : vector<8x512xf32>
    %81 = tpu.matmul %79, %80, %cst_13 {dimension_numbers = #tpu.dot_dimension_numbers<[1], [0], [0], [1], [0, 0, 1, 1], [], []>} : vector<8x512xbf16>, vector<512x512xbf16>, vector<8x512xf32> -> vector<8x512xf32>
    %82 = vector.broadcast %2 : vector<1x512xf32> to vector<8x512xf32>
    %83 = arith.addf %81, %82 : vector<8x512xf32>
    %cst_14 = arith.constant 0.000000e+00 : f32
    %84 = vector.broadcast %cst_14 : f32 to vector<8x512xf32>
    %85 = arith.cmpf ogt, %83, %84 : vector<8x512xf32>
    %cst_15 = arith.constant 2.000000e-01 : f32
    %86 = vector.broadcast %cst_15 : f32 to vector<8x512xf32>
    %87 = arith.mulf %86, %83 : vector<8x512xf32>
    %88 = arith.select %85, %83, %87 : vector<8x512xi1>, vector<8x512xf32>
    %89 = arith.truncf %88 : vector<8x512xf32> to vector<8x512xbf16>
    %c0_16 = arith.constant 0 : index
    %c0_17 = arith.constant 0 : index
    %90 = vector.load %arg5[%c0_16, %c0_17] : memref<512x512xbf16, #tpu.memory_space<vmem>>, vector<512x512xbf16>
    %cst_18 = arith.constant dense<0.000000e+00> : vector<8x512xf32>
    %91 = tpu.matmul %89, %90, %cst_18 {dimension_numbers = #tpu.dot_dimension_numbers<[1], [0], [0], [1], [0, 0, 1, 1], [], []>} : vector<8x512xbf16>, vector<512x512xbf16>, vector<8x512xf32> -> vector<8x512xf32>
    %92 = vector.broadcast %3 : vector<1x512xf32> to vector<8x512xf32>
    %93 = arith.addf %91, %92 : vector<8x512xf32>
    %cst_19 = arith.constant 0.000000e+00 : f32
    %94 = vector.broadcast %cst_19 : f32 to vector<8x512xf32>
    %95 = arith.cmpf ogt, %93, %94 : vector<8x512xf32>
    %cst_20 = arith.constant 2.000000e-01 : f32
    %96 = vector.broadcast %cst_20 : f32 to vector<8x512xf32>
    %97 = arith.mulf %96, %93 : vector<8x512xf32>
    %98 = arith.select %95, %93, %97 : vector<8x512xi1>, vector<8x512xf32>
    %99 = vector.broadcast %4 : vector<1x512xf32> to vector<8x512xf32>
    %100 = arith.mulf %98, %99 : vector<8x512xf32>
    %cst_21 = arith.constant dense<0.000000e+00> : vector<8xf32>
    %101 = vector.multi_reduction <add>, %100, %cst_21 [1] : vector<8x512xf32> to vector<8xf32>
    %102 = vector.shape_cast %101 : vector<8xf32> to vector<8x1xf32>
    %103 = vector.broadcast %5 : vector<1x1xf32> to vector<8x1xf32>
    %104 = arith.addf %102, %103 : vector<8x1xf32>
    %105 = arith.negf %104 : vector<8x1xf32>
    %106 = math.exp %105 : vector<8x1xf32>
    %cst_22 = arith.constant 1.000000e+00 : f32
    %107 = vector.broadcast %cst_22 : f32 to vector<8x1xf32>
    %108 = arith.addf %107, %106 : vector<8x1xf32>
    %109 = arith.divf %107, %108 : vector<8x1xf32>
    %c0_23 = arith.constant 0 : index
    %c0_24 = arith.constant 0 : index
    %110 = vector.load %arg7[%c0_23, %c0_24] : memref<8x1xf32, #tpu.memory_space<vmem>>, vector<8x1xf32>
    tpu.vector_store %arg7[%c0_23, %c0_24], %109 {strides = array<i32>} : memref<8x1xf32, #tpu.memory_space<vmem>>, vector<8x1xf32>,
    return
  }
}

</mosaic_0001>

<llo_original>
// kernel: cdiscriminator_forward.1
$region0: #{cdiscriminator_forward.1}
  #allocation0 [shape = 'u32[]', space=smem, size = 0x4, offset = 0x4, fixed_abs, tag = 'smem constant byte address 0x4 - core index']
  #allocation1 [shape = 'u32[144,128]{1,0:T(1,128)}', space=vmem, size = 0x12000, scoped, tag = 'internal scratch']
  %s0 = inlined_call_operand.vmem [shape: f32[8,768], index: 0, kind: input, shape index: {}]
  %s1 = inlined_call_operand.vmem [shape: f32[8,10], index: 1, kind: input, shape index: {}]
  %s2 = inlined_call_operand.hbm [shape: bf16[768,512], index: 2, kind: input, shape index: {}]
  %s3 = inlined_call_operand.vmem [shape: f32[10,512], index: 3, kind: input, shape index: {}]
  %s4 = inlined_call_operand.hbm [shape: bf16[512,512], index: 4, kind: input, shape index: {}]
  %s5 = inlined_call_operand.hbm [shape: bf16[512,512], index: 5, kind: input, shape index: {}]
  %s6 = inlined_call_operand.vmem [shape: f32[5,512], index: 6, kind: input, shape index: {}]
  %s7 = inlined_call_operand.vmem [shape: f32[8,1], index: 7, kind: output, shape index: {}]
  %s8 = sld [smem:[#allocation0]]
  $region50: #{cdiscriminator_forward.1} parent=0
    _
  %s10 = ssub.s32 1, %s8
  %s11 = scalar_select 0, %s10, %s8
  $region1: #{cdiscriminator_forward.1} parent=0
    #allocation2 [shape = 'u8[786432]{0}', space=vmem, size = 0xc0000, scoped, tag = 'input window, operand 2, single buffered']
    #allocation3 [shape = 's32[1]{0}', space=sflag, size = 0x4, scoped, tag = 'scoped memory for cdiscriminator_forward.1']
    #allocation4 [shape = 'u8[524288]{0}', space=vmem, size = 0x80000, scoped, tag = 'input window, operand 4, single buffered']
    #allocation5 [shape = 's32[1]{0}', space=sflag, size = 0x4, scoped, tag = 'scoped memory for cdiscriminator_forward.1']
    #allocation6 [shape = 'u8[524288]{0}', space=vmem, size = 0x80000, scoped, tag = 'input window, operand 5, single buffered']
    %12 = vsyncpa [#allocation3], 0
    %13 = vsyncpa [#allocation5], 0
    // Predicated region
    $region2: #{cdiscriminator_forward.1} parent=1 // pred_check
      _
    $region3: #{cdiscriminator_forward.1} parent=1 // pred_check_branch
      %15 = sbr.rel (0) target = $region5
    $region4: #{cdiscriminator_forward.1} parent=1 // pred_region
      _
    $region5: #{cdiscriminator_forward.1} parent=1 // pred_fallthru
      _
    // Predicated region
    $region6: #{cdiscriminator_forward.1} parent=1 // pred_check
      _
    $region7: #{cdiscriminator_forward.1} parent=1 // pred_check_branch
      %17 = sbr.rel (0) target = $region9
    $region8: #{cdiscriminator_forward.1} parent=1 // pred_region
      _
    $region9: #{cdiscriminator_forward.1} parent=1 // pred_fallthru
      _
    // Predicated region
    $region10: #{cdiscriminator_forward.1} parent=1 // pred_check
      _
    $region11: #{cdiscriminator_forward.1} parent=1 // pred_check_branch
      %19 = sbr.rel (0) target = $region13
    $region12: #{cdiscriminator_forward.1} parent=1 // pred_region
      %s21 = ssub.s32 24576, 24576
      %22 = vsyncadd [#allocation3], %s21
      %s23 = sshll.u32 [#allocation2], 4
      %s24 = int_to_ptr.vmem [resolvable:$true] %s23
      %29 = dma.hbm_to_vmem [thread:$0]  %s2, 24576, %s24, [#allocation3], 256, 256, 16
    $region13: #{cdiscriminator_forward.1} parent=1 // pred_fallthru
      _
    // Predicated region
    $region14: #{cdiscriminator_forward.1} parent=1 // pred_check
      _
    $region15: #{cdiscriminator_forward.1} parent=1 // pred_check_branch
      %31 = sbr.rel (0) target = $region17
    $region16: #{cdiscriminator_forward.1} parent=1 // pred_region
      _
    $region17: #{cdiscriminator_forward.1} parent=1 // pred_fallthru
      _
    // Predicated region
    $region18: #{cdiscriminator_forward.1} parent=1 // pred_check
      _
    $region19: #{cdiscriminator_forward.1} parent=1 // pred_check_branch
      %33 = sbr.rel (0) target = $region21
    $region20: #{cdiscriminator_forward.1} parent=1 // pred_region
      %s35 = ssub.s32 16384, 16384
      %36 = vsyncadd [#allocation5], %s35
      %s37 = sshll.u32 [#allocation4], 4
      %s38 = int_to_ptr.vmem [resolvable:$true] %s37
      %43 = dma.hbm_to_vmem [thread:$0]  %s4, 16384, %s38, [#allocation5], 256, 256, 16
    $region21: #{cdiscriminator_forward.1} parent=1 // pred_fallthru
      _
    // Predicated region
    $region22: #{cdiscriminator_forward.1} parent=1 // pred_check
      _
    $region23: #{cdiscriminator_forward.1} parent=1 // pred_check_branch
      %45 = sbr.rel (0) target = $region25
    $region24: #{cdiscriminator_forward.1} parent=1 // pred_region
      %s47 = ssub.s32 16384, 16384
      %48 = vsyncadd [#allocation5], %s47
      %s49 = sshll.u32 [#allocation6], 4
      %s50 = int_to_ptr.vmem [resolvable:$true] %s49
      %55 = dma.hbm_to_vmem [thread:$0]  %s5, 16384, %s50, [#allocation5], 256, 256, 16
    $region25: #{cdiscriminator_forward.1} parent=1 // pred_fallthru
      _
    // Predicated region
    $region26: #{cdiscriminator_forward.1} parent=1 // pred_check
      _
    $region27: #{cdiscriminator_forward.1} parent=1 // pred_check_branch
      %57 = sbr.rel (0) target = $region29
    $region28: #{cdiscriminator_forward.1} parent=1 // pred_region
      _
    $region29: #{cdiscriminator_forward.1} parent=1 // pred_fallthru
      _
    // Predicated region
    $region30: #{cdiscriminator_forward.1} parent=1 // pred_check
      _
    $region31: #{cdiscriminator_forward.1} parent=1 // pred_check_branch
      %59 = sbr.rel (0) target = $region33
    $region32: #{cdiscriminator_forward.1} parent=1 // pred_region
      %60 = dma.done [#allocation3], 24576
    $region33: #{cdiscriminator_forward.1} parent=1 // pred_fallthru
      _
    // Predicated region
    $region34: #{cdiscriminator_forward.1} parent=1 // pred_check
      _
    $region35: #{cdiscriminator_forward.1} parent=1 // pred_check_branch
      %62 = sbr.rel (0) target = $region37
    $region36: #{cdiscriminator_forward.1} parent=1 // pred_region
      %63 = dma.done [#allocation5], 16384
    $region37: #{cdiscriminator_forward.1} parent=1 // pred_fallthru
      _
    // Predicated region
    $region38: #{cdiscriminator_forward.1} parent=1 // pred_check
      _
    $region39: #{cdiscriminator_forward.1} parent=1 // pred_check_branch
      %65 = sbr.rel (0) target = $region41
    $region40: #{cdiscriminator_forward.1} parent=1 // pred_region
      %66 = dma.done [#allocation5], 16384
    $region41: #{cdiscriminator_forward.1} parent=1 // pred_fallthru
      _
    %v67 = vld [vmem:[%s6] sm:$0x1f]
    %v68 = vld [vmem:[%s6 + $0x8] sm:$0x1f]
    %v69 = vld [vmem:[%s6 + $0x10] sm:$0x1f]
    %v70 = vld [vmem:[%s6 + $0x18] sm:$0x1f]
    %v71 = vld [vmem:[%s0] sm:$0xff]
    %v72 = vld [vmem:[%s0 + $0x8] sm:$0xff]
    %v73 = vld [vmem:[%s0 + $0x10] sm:$0xff]
    %v74 = vld [vmem:[%s0 + $0x18] sm:$0xff]
    %v75 = vld [vmem:[%s0 + $0x20] sm:$0xff]
    %v76 = vld [vmem:[%s0 + $0x28] sm:$0xff]
    %v77 = vpack.c.bf16 %v71, %v71
    %v78 = vpack.c.bf16 %v72, %v72
    %v79 = vpack.c.bf16 %v73, %v73
    %v80 = vpack.c.bf16 %v74, %v74
    %v81 = vpack.c.bf16 %v75, %v75
    %v82 = vpack.c.bf16 %v76, %v76
    %v83 = vld [vmem:[#allocation2] sm:$0xff]
    %v84 = vld [vmem:[#allocation2 + $0x8] sm:$0xff]
    %v85 = vld [vmem:[#allocation2 + $0x10] sm:$0xff]
    %v86 = vld [vmem:[#allocation2 + $0x18] sm:$0xff]
    %v87 = vld [vmem:[#allocation2 + $0x20] sm:$0xff]
    %v88 = vld [vmem:[#allocation2 + $0x28] sm:$0xff]
    %v89 = vld [vmem:[#allocation2 + $0x30] sm:$0xff]
    %v90 = vld [vmem:[#allocation2 + $0x38] sm:$0xff]
    %v91 = vld [vmem:[#allocation2 + $0x40] sm:$0xff]
    %v92 = vld [vmem:[#allocation2 + $0x48] sm:$0xff]
    %v93 = vld [vmem:[#allocation2 + $0x50] sm:$0xff]
    %v94 = vld [vmem:[#allocation2 + $0x58] sm:$0xff]
    %v95 = vld [vmem:[#allocation2 + $0x60] sm:$0xff]
    %v96 = vld [vmem:[#allocation2 + $0x68] sm:$0xff]
    %v97 = vld [vmem:[#allocation2 + $0x70] sm:$0xff]
    %v98 = vld [vmem:[#allocation2 + $0x78] sm:$0xff]
    %v99 = vld [vmem:[#allocation2 + $0x80] sm:$0xff]
    %v100 = vld [vmem:[#allocation2 + $0x88] sm:$0xff]
    %v101 = vld [vmem:[#allocation2 + $0x90] sm:$0xff]
    %v102 = vld [vmem:[#allocation2 + $0x98] sm:$0xff]
    %v103 = vld [vmem:[#allocation2 + $0xa0] sm:$0xff]
    %v104 = vld [vmem:[#allocation2 + $0xa8] sm:$0xff]
    %v105 = vld [vmem:[#allocation2 + $0xb0] sm:$0xff]
    %v106 = vld [vmem:[#allocation2 + $0xb8] sm:$0xff]
    %v107 = vld [vmem:[#allocation2 + $0xc0] sm:$0xff]
    %v108 = vld [vmem:[#allocation2 + $0xc8] sm:$0xff]
    %v109 = vld [vmem:[#allocation2 + $0xd0] sm:$0xff]
    %v110 = vld [vmem:[#allocation2 + $0xd8] sm:$0xff]
    %v111 = vld [vmem:[#allocation2 + $0xe0] sm:$0xff]
    %v112 = vld [vmem:[#allocation2 + $0xe8] sm:$0xff]
    %v113 = vld [vmem:[#allocation2 + $0xf0] sm:$0xff]
    %v114 = vld [vmem:[#allocation2 + $0xf8] sm:$0xff]
    %v115 = vld [vmem:[#allocation2 + $0x100] sm:$0xff]
    %v116 = vld [vmem:[#allocation2 + $0x108] sm:$0xff]
    %v117 = vld [vmem:[#allocation2 + $0x110] sm:$0xff]
    %v118 = vld [vmem:[#allocation2 + $0x118] sm:$0xff]
    %v119 = vld [vmem:[#allocation2 + $0x120] sm:$0xff]
    %v120 = vld [vmem:[#allocation2 + $0x128] sm:$0xff]
    %v121 = vld [vmem:[#allocation2 + $0x130] sm:$0xff]
    %v122 = vld [vmem:[#allocation2 + $0x138] sm:$0xff]
    %v123 = vld [vmem:[#allocation2 + $0x140] sm:$0xff]
    %v124 = vld [vmem:[#allocation2 + $0x148] sm:$0xff]
    %v125 = vld [vmem:[#allocation2 + $0x150] sm:$0xff]
    %v126 = vld [vmem:[#allocation2 + $0x158] sm:$0xff]
    %v127 = vld [vmem:[#allocation2 + $0x160] sm:$0xff]
    %v128 = vld [vmem:[#allocation2 + $0x168] sm:$0xff]
    %v129 = vld [vmem:[#allocation2 + $0x170] sm:$0xff]
    %v130 = vld [vmem:[#allocation2 + $0x178] sm:$0xff]
    %v131 = vld [vmem:[#allocation2 + $0x180] sm:$0xff]
    %v132 = vld [vmem:[#allocation2 + $0x188] sm:$0xff]
    %v133 = vld [vmem:[#allocation2 + $0x190] sm:$0xff]
    %v134 = vld [vmem:[#allocation2 + $0x198] sm:$0xff]
    %v135 = vld [vmem:[#allocation2 + $0x1a0] sm:$0xff]
    %v136 = vld [vmem:[#allocation2 + $0x1a8] sm:$0xff]
    %v137 = vld [vmem:[#allocation2 + $0x1b0] sm:$0xff]
    %v138 = vld [vmem:[#allocation2 + $0x1b8] sm:$0xff]
    %v139 = vld [vmem:[#allocation2 + $0x1c0] sm:$0xff]
    %v140 = vld [vmem:[#allocation2 + $0x1c8] sm:$0xff]
    %v141 = vld [vmem:[#allocation2 + $0x1d0] sm:$0xff]
    %v142 = vld [vmem:[#allocation2 + $0x1d8] sm:$0xff]
    %v143 = vld [vmem:[#allocation2 + $0x1e0] sm:$0xff]
    %v144 = vld [vmem:[#allocation2 + $0x1e8] sm:$0xff]
    %v145 = vld [vmem:[#allocation2 + $0x1f0] sm:$0xff]
    %v146 = vld [vmem:[#allocation2 + $0x1f8] sm:$0xff]
    %v147 = vld [vmem:[#allocation2 + $0x200] sm:$0xff]
    %v148 = vld [vmem:[#allocation2 + $0x208] sm:$0xff]
    %v149 = vld [vmem:[#allocation2 + $0x210] sm:$0xff]
    %v150 = vld [vmem:[#allocation2 + $0x218] sm:$0xff]
    %v151 = vld [vmem:[#allocation2 + $0x220] sm:$0xff]
    %v152 = vld [vmem:[#allocation2 + $0x228] sm:$0xff]
    %v153 = vld [vmem:[#allocation2 + $0x230] sm:$0xff]
    %v154 = vld [vmem:[#allocation2 + $0x238] sm:$0xff]
    %v155 = vld [vmem:[#allocation2 + $0x240] sm:$0xff]
    %v156 = vld [vmem:[#allocation2 + $0x248] sm:$0xff]
    %v157 = vld [vmem:[#allocation2 + $0x250] sm:$0xff]
    %v158 = vld [vmem:[#allocation2 + $0x258] sm:$0xff]
    %v159 = vld [vmem:[#allocation2 + $0x260] sm:$0xff]
    %v160 = vld [vmem:[#allocation2 + $0x268] sm:$0xff]
    %v161 = vld [vmem:[#allocation2 + $0x270] sm:$0xff]
    %v162 = vld [vmem:[#allocation2 + $0x278] sm:$0xff]
    %v163 = vld [vmem:[#allocation2 + $0x280] sm:$0xff]
    %v164 = vld [vmem:[#allocation2 + $0x288] sm:$0xff]
    %v165 = vld [vmem:[#allocation2 + $0x290] sm:$0xff]
    %v166 = vld [vmem:[#allocation2 + $0x298] sm:$0xff]
    %v167 = vld [vmem:[#allocation2 + $0x2a0] sm:$0xff]
    %v168 = vld [vmem:[#allocation2 + $0x2a8] sm:$0xff]
    %v169 = vld [vmem:[#allocation2 + $0x2b0] sm:$0xff]
    %v170 = vld [vmem:[#allocation2 + $0x2b8] sm:$0xff]
    %v171 = vld [vmem:[#allocation2 + $0x2c0] sm:$0xff]
    %v172 = vld [vmem:[#allocation2 + $0x2c8] sm:$0xff]
    %v173 = vld [vmem:[#allocation2 + $0x2d0] sm:$0xff]
    %v174 = vld [vmem:[#allocation2 + $0x2d8] sm:$0xff]
    %v175 = vld [vmem:[#allocation2 + $0x2e0] sm:$0xff]
    %v176 = vld [vmem:[#allocation2 + $0x2e8] sm:$0xff]
    %v177 = vld [vmem:[#allocation2 + $0x2f0] sm:$0xff]
    %v178 = vld [vmem:[#allocation2 + $0x2f8] sm:$0xff]
    %v179 = vld [vmem:[#allocation2 + $0x300] sm:$0xff]
    %v180 = vld [vmem:[#allocation2 + $0x308] sm:$0xff]
    %v181 = vld [vmem:[#allocation2 + $0x310] sm:$0xff]
    %v182 = vld [vmem:[#allocation2 + $0x318] sm:$0xff]
    %v183 = vld [vmem:[#allocation2 + $0x320] sm:$0xff]
    %v184 = vld [vmem:[#allocation2 + $0x328] sm:$0xff]
    %v185 = vld [vmem:[#allocation2 + $0x330] sm:$0xff]
    %v186 = vld [vmem:[#allocation2 + $0x338] sm:$0xff]
    %v187 = vld [vmem:[#allocation2 + $0x340] sm:$0xff]
    %v188 = vld [vmem:[#allocation2 + $0x348] sm:$0xff]
    %v189 = vld [vmem:[#allocation2 + $0x350] sm:$0xff]
    %v190 = vld [vmem:[#allocation2 + $0x358] sm:$0xff]
    %v191 = vld [vmem:[#allocation2 + $0x360] sm:$0xff]
    %v192 = vld [vmem:[#allocation2 + $0x368] sm:$0xff]
    %v193 = vld [vmem:[#allocation2 + $0x370] sm:$0xff]
    %v194 = vld [vmem:[#allocation2 + $0x378] sm:$0xff]
    %v195 = vld [vmem:[#allocation2 + $0x380] sm:$0xff]
    %v196 = vld [vmem:[#allocation2 + $0x388] sm:$0xff]
    %v197 = vld [vmem:[#allocation2 + $0x390] sm:$0xff]
    %v198 = vld [vmem:[#allocation2 + $0x398] sm:$0xff]
    %v199 = vld [vmem:[#allocation2 + $0x3a0] sm:$0xff]
    %v200 = vld [vmem:[#allocation2 + $0x3a8] sm:$0xff]
    %v201 = vld [vmem:[#allocation2 + $0x3b0] sm:$0xff]
    %v202 = vld [vmem:[#allocation2 + $0x3b8] sm:$0xff]
    %v203 = vld [vmem:[#allocation2 + $0x3c0] sm:$0xff]
    %v204 = vld [vmem:[#allocation2 + $0x3c8] sm:$0xff]
    %v205 = vld [vmem:[#allocation2 + $0x3d0] sm:$0xff]
    %v206 = vld [vmem:[#allocation2 + $0x3d8] sm:$0xff]
    %v207 = vld [vmem:[#allocation2 + $0x3e0] sm:$0xff]
    %v208 = vld [vmem:[#allocation2 + $0x3e8] sm:$0xff]
    %v209 = vld [vmem:[#allocation2 + $0x3f0] sm:$0xff]
    %v210 = vld [vmem:[#allocation2 + $0x3f8] sm:$0xff]
    %v211 = vld [vmem:[#allocation2 + $0x400] sm:$0xff]
    %v212 = vld [vmem:[#allocation2 + $0x408] sm:$0xff]
    %v213 = vld [vmem:[#allocation2 + $0x410] sm:$0xff]
    %v214 = vld [vmem:[#allocation2 + $0x418] sm:$0xff]
    %v215 = vld [vmem:[#allocation2 + $0x420] sm:$0xff]
    %v216 = vld [vmem:[#allocation2 + $0x428] sm:$0xff]
    %v217 = vld [vmem:[#allocation2 + $0x430] sm:$0xff]
    %v218 = vld [vmem:[#allocation2 + $0x438] sm:$0xff]
    %v219 = vld [vmem:[#allocation2 + $0x440] sm:$0xff]
    %v220 = vld [vmem:[#allocation2 + $0x448] sm:$0xff]
    %v221 = vld [vmem:[#allocation2 + $0x450] sm:$0xff]
    %v222 = vld [vmem:[#allocation2 + $0x458] sm:$0xff]
    %v223 = vld [vmem:[#allocation2 + $0x460] sm:$0xff]
    %v224 = vld [vmem:[#allocation2 + $0x468] sm:$0xff]
    %v225 = vld [vmem:[#allocation2 + $0x470] sm:$0xff]
    %v226 = vld [vmem:[#allocation2 + $0x478] sm:$0xff]
    %v227 = vld [vmem:[#allocation2 + $0x480] sm:$0xff]
    %v228 = vld [vmem:[#allocation2 + $0x488] sm:$0xff]
    %v229 = vld [vmem:[#allocation2 + $0x490] sm:$0xff]
    %v230 = vld [vmem:[#allocation2 + $0x498] sm:$0xff]
    %v231 = vld [vmem:[#allocation2 + $0x4a0] sm:$0xff]
    %v232 = vld [vmem:[#allocation2 + $0x4a8] sm:$0xff]
    %v233 = vld [vmem:[#allocation2 + $0x4b0] sm:$0xff]
    %v234 = vld [vmem:[#allocation2 + $0x4b8] sm:$0xff]
    %v235 = vld [vmem:[#allocation2 + $0x4c0] sm:$0xff]
    %v236 = vld [vmem:[#allocation2 + $0x4c8] sm:$0xff]
    %v237 = vld [vmem:[#allocation2 + $0x4d0] sm:$0xff]
    %v238 = vld [vmem:[#allocation2 + $0x4d8] sm:$0xff]
    %v239 = vld [vmem:[#allocation2 + $0x4e0] sm:$0xff]
    %v240 = vld [vmem:[#allocation2 + $0x4e8] sm:$0xff]
    %v241 = vld [vmem:[#allocation2 + $0x4f0] sm:$0xff]
    %v242 = vld [vmem:[#allocation2 + $0x4f8] sm:$0xff]
    %v243 = vld [vmem:[#allocation2 + $0x500] sm:$0xff]
    %v244 = vld [vmem:[#allocation2 + $0x508] sm:$0xff]
    %v245 = vld [vmem:[#allocation2 + $0x510] sm:$0xff]
    %v246 = vld [vmem:[#allocation2 + $0x518] sm:$0xff]
    %v247 = vld [vmem:[#allocation2 + $0x520] sm:$0xff]
    %v248 = vld [vmem:[#allocation2 + $0x528] sm:$0xff]
    %v249 = vld [vmem:[#allocation2 + $0x530] sm:$0xff]
    %v250 = vld [vmem:[#allocation2 + $0x538] sm:$0xff]
    %v251 = vld [vmem:[#allocation2 + $0x540] sm:$0xff]
    %v252 = vld [vmem:[#allocation2 + $0x548] sm:$0xff]
    %v253 = vld [vmem:[#allocation2 + $0x550] sm:$0xff]
    %v254 = vld [vmem:[#allocation2 + $0x558] sm:$0xff]
    %v255 = vld [vmem:[#allocation2 + $0x560] sm:$0xff]
    %v256 = vld [vmem:[#allocation2 + $0x568] sm:$0xff]
    %v257 = vld [vmem:[#allocation2 + $0x570] sm:$0xff]
    %v258 = vld [vmem:[#allocation2 + $0x578] sm:$0xff]
    %v259 = vld [vmem:[#allocation2 + $0x580] sm:$0xff]
    %v260 = vld [vmem:[#allocation2 + $0x588] sm:$0xff]
    %v261 = vld [vmem:[#allocation2 + $0x590] sm:$0xff]
    %v262 = vld [vmem:[#allocation2 + $0x598] sm:$0xff]
    %v263 = vld [vmem:[#allocation2 + $0x5a0] sm:$0xff]
    %v264 = vld [vmem:[#allocation2 + $0x5a8] sm:$0xff]
    %v265 = vld [vmem:[#allocation2 + $0x5b0] sm:$0xff]
    %v266 = vld [vmem:[#allocation2 + $0x5b8] sm:$0xff]
    %v267 = vld [vmem:[#allocation2 + $0x5c0] sm:$0xff]
    %v268 = vld [vmem:[#allocation2 + $0x5c8] sm:$0xff]
    %v269 = vld [vmem:[#allocation2 + $0x5d0] sm:$0xff]
    %v270 = vld [vmem:[#allocation2 + $0x5d8] sm:$0xff]
    %v271 = vld [vmem:[#allocation2 + $0x5e0] sm:$0xff]
    %v272 = vld [vmem:[#allocation2 + $0x5e8] sm:$0xff]
    %v273 = vld [vmem:[#allocation2 + $0x5f0] sm:$0xff]
    %v274 = vld [vmem:[#allocation2 + $0x5f8] sm:$0xff]
    %v275 = vld [vmem:[%s1] sm:$0xff]
    %v276 = vld [vmem:[%s3] sm:$0xff]
    %v277 = vld [vmem:[%s3 + $0x8] sm:$0xff]
    %v278 = vld [vmem:[%s3 + $0x10] sm:$0xff]
    %v279 = vld [vmem:[%s3 + $0x18] sm:$0xff]
    %v280 = vld [vmem:[%s3 + $0x20] sm:$0x3]
    %v281 = vld [vmem:[%s3 + $0x28] sm:$0x3]
    %v282 = vld [vmem:[%s3 + $0x30] sm:$0x3]
    %v283 = vld [vmem:[%s3 + $0x38] sm:$0x3]
    %285 = vset.pattern.permute.xlu0 0
    %286 = vperm.xlu0 %285, %v275
    %v287 = vpop.permute.xlu0 %286
    %v289 = vlaneseq
    %v290 = vshrl.u32 %v289, 7
    %v291 = vsub.s32 0, %v290
    %v292 = vrot.slane %v276, %v291
    %v293 = vlaneseq
    %v294 = vshrl.u32 %v293, 7
    %v295 = vsub.s32 0, %v294
    %v296 = vrot.slane %v277, %v295
    %v297 = vlaneseq
    %v298 = vshrl.u32 %v297, 7
    %v299 = vsub.s32 0, %v298
    %v300 = vrot.slane %v278, %v299
    %v301 = vlaneseq
    %v302 = vshrl.u32 %v301, 7
    %v303 = vsub.s32 0, %v302
    %v304 = vrot.slane %v279, %v303
    %v305 = vmul.f32 %v287, %v292
    %v306 = vmul.f32 %v287, %v296
    %v307 = vmul.f32 %v287, %v300
    %v308 = vmul.f32 %v287, %v304
    %v501 = vunpack.c.l.b16 %v83
    %v502 = vunpack.c.h.b16 %v83
    %v503 = vunpack.c.l.b16 %v84
    %v504 = vunpack.c.h.b16 %v84
    %v505 = vunpack.c.l.b16 %v85
    %v506 = vunpack.c.h.b16 %v85
    %v507 = vunpack.c.l.b16 %v86
    %v508 = vunpack.c.h.b16 %v86
    %v509 = vunpack.c.l.b16 %v87
    %v510 = vunpack.c.h.b16 %v87
    %v511 = vunpack.c.l.b16 %v88
    %v512 = vunpack.c.h.b16 %v88
    %v513 = vunpack.c.l.b16 %v89
    %v514 = vunpack.c.h.b16 %v89
    %v515 = vunpack.c.l.b16 %v90
    %v516 = vunpack.c.h.b16 %v90
    %v517 = vunpack.c.l.b16 %v91
    %v518 = vunpack.c.h.b16 %v91
    %v519 = vunpack.c.l.b16 %v92
    %v520 = vunpack.c.h.b16 %v92
    %v521 = vunpack.c.l.b16 %v93
    %v522 = vunpack.c.h.b16 %v93
    %v523 = vunpack.c.l.b16 %v94
    %v524 = vunpack.c.h.b16 %v94
    %v525 = vunpack.c.l.b16 %v95
    %v526 = vunpack.c.h.b16 %v95
    %v527 = vunpack.c.l.b16 %v96
    %v528 = vunpack.c.h.b16 %v96
    %v529 = vunpack.c.l.b16 %v97
    %v530 = vunpack.c.h.b16 %v97
    %v531 = vunpack.c.l.b16 %v98
    %v532 = vunpack.c.h.b16 %v98
    %v533 = vunpack.c.l.b16 %v99
    %v534 = vunpack.c.h.b16 %v99
    %v535 = vunpack.c.l.b16 %v100
    %v536 = vunpack.c.h.b16 %v100
    %v537 = vunpack.c.l.b16 %v101
    %v538 = vunpack.c.h.b16 %v101
    %v539 = vunpack.c.l.b16 %v102
    %v540 = vunpack.c.h.b16 %v102
    %v541 = vunpack.c.l.b16 %v103
    %v542 = vunpack.c.h.b16 %v103
    %v543 = vunpack.c.l.b16 %v104
    %v544 = vunpack.c.h.b16 %v104
    %v545 = vunpack.c.l.b16 %v105
    %v546 = vunpack.c.h.b16 %v105
    %v547 = vunpack.c.l.b16 %v106
    %v548 = vunpack.c.h.b16 %v106
    %v549 = vunpack.c.l.b16 %v107
    %v550 = vunpack.c.h.b16 %v107
    %v551 = vunpack.c.l.b16 %v108
    %v552 = vunpack.c.h.b16 %v108
    %v553 = vunpack.c.l.b16 %v109
    %v554 = vunpack.c.h.b16 %v109
    %v555 = vunpack.c.l.b16 %v110
    %v556 = vunpack.c.h.b16 %v110
    %v557 = vunpack.c.l.b16 %v111
    %v558 = vunpack.c.h.b16 %v111
    %v559 = vunpack.c.l.b16 %v112
    %v560 = vunpack.c.h.b16 %v112
    %v561 = vunpack.c.l.b16 %v113
    %v562 = vunpack.c.h.b16 %v113
    %v563 = vunpack.c.l.b16 %v114
    %v564 = vunpack.c.h.b16 %v114
    %v565 = vunpack.c.l.b16 %v115
    %v566 = vunpack.c.h.b16 %v115
    %v567 = vunpack.c.l.b16 %v116
    %v568 = vunpack.c.h.b16 %v116
    %v569 = vunpack.c.l.b16 %v117
    %v570 = vunpack.c.h.b16 %v117
    %v571 = vunpack.c.l.b16 %v118
    %v572 = vunpack.c.h.b16 %v118
    %v573 = vunpack.c.l.b16 %v119
    %v574 = vunpack.c.h.b16 %v119
    %v575 = vunpack.c.l.b16 %v120
    %v576 = vunpack.c.h.b16 %v120
    %v577 = vunpack.c.l.b16 %v121
    %v578 = vunpack.c.h.b16 %v121
    %v579 = vunpack.c.l.b16 %v122
    %v580 = vunpack.c.h.b16 %v122
    %v581 = vunpack.c.l.b16 %v123
    %v582 = vunpack.c.h.b16 %v123
    %v583 = vunpack.c.l.b16 %v124
    %v584 = vunpack.c.h.b16 %v124
    %v585 = vunpack.c.l.b16 %v125
    %v586 = vunpack.c.h.b16 %v125
    %v587 = vunpack.c.l.b16 %v126
    %v588 = vunpack.c.h.b16 %v126
    %v589 = vunpack.c.l.b16 %v127
    %v590 = vunpack.c.h.b16 %v127
    %v591 = vunpack.c.l.b16 %v128
    %v592 = vunpack.c.h.b16 %v128
    %v593 = vunpack.c.l.b16 %v129
    %v594 = vunpack.c.h.b16 %v129
    %v595 = vunpack.c.l.b16 %v130
    %v596 = vunpack.c.h.b16 %v130
    %v597 = vunpack.c.l.b16 %v131
    %v598 = vunpack.c.h.b16 %v131
    %v599 = vunpack.c.l.b16 %v132
    %v600 = vunpack.c.h.b16 %v132
    %v601 = vunpack.c.l.b16 %v133
    %v602 = vunpack.c.h.b16 %v133
    %v603 = vunpack.c.l.b16 %v134
    %v604 = vunpack.c.h.b16 %v134
    %v605 = vunpack.c.l.b16 %v135
    %v606 = vunpack.c.h.b16 %v135
    %v607 = vunpack.c.l.b16 %v136
    %v608 = vunpack.c.h.b16 %v136
    %v609 = vunpack.c.l.b16 %v137
    %v610 = vunpack.c.h.b16 %v137
    %v611 = vunpack.c.l.b16 %v138
    %v612 = vunpack.c.h.b16 %v138
    %v613 = vunpack.c.l.b16 %v139
    %v614 = vunpack.c.h.b16 %v139
    %v615 = vunpack.c.l.b16 %v140
    %v616 = vunpack.c.h.b16 %v140
    %v617 = vunpack.c.l.b16 %v141
    %v618 = vunpack.c.h.b16 %v141
    %v619 = vunpack.c.l.b16 %v142
    %v620 = vunpack.c.h.b16 %v142
    %v621 = vunpack.c.l.b16 %v143
    %v622 = vunpack.c.h.b16 %v143
    %v623 = vunpack.c.l.b16 %v144
    %v624 = vunpack.c.h.b16 %v144
    %v625 = vunpack.c.l.b16 %v145
    %v626 = vunpack.c.h.b16 %v145
    %v627 = vunpack.c.l.b16 %v146
    %v628 = vunpack.c.h.b16 %v146
    %v629 = vunpack.c.l.b16 %v147
    %v630 = vunpack.c.h.b16 %v147
    %v631 = vunpack.c.l.b16 %v148
    %v632 = vunpack.c.h.b16 %v148
    %v633 = vunpack.c.l.b16 %v149
    %v634 = vunpack.c.h.b16 %v149
    %v635 = vunpack.c.l.b16 %v150
    %v636 = vunpack.c.h.b16 %v150
    %v637 = vunpack.c.l.b16 %v151
    %v638 = vunpack.c.h.b16 %v151
    %v639 = vunpack.c.l.b16 %v152
    %v640 = vunpack.c.h.b16 %v152
    %v641 = vunpack.c.l.b16 %v153
    %v642 = vunpack.c.h.b16 %v153
    %v643 = vunpack.c.l.b16 %v154
    %v644 = vunpack.c.h.b16 %v154
    %v645 = vunpack.c.l.b16 %v155
    %v646 = vunpack.c.h.b16 %v155
    %v647 = vunpack.c.l.b16 %v156
    %v648 = vunpack.c.h.b16 %v156
    %v649 = vunpack.c.l.b16 %v157
    %v650 = vunpack.c.h.b16 %v157
    %v651 = vunpack.c.l.b16 %v158
    %v652 = vunpack.c.h.b16 %v158
    %v653 = vunpack.c.l.b16 %v159
    %v654 = vunpack.c.h.b16 %v159
    %v655 = vunpack.c.l.b16 %v160
    %v656 = vunpack.c.h.b16 %v160
    %v657 = vunpack.c.l.b16 %v161
    %v658 = vunpack.c.h.b16 %v161
    %v659 = vunpack.c.l.b16 %v162
    %v660 = vunpack.c.h.b16 %v162
    %v661 = vunpack.c.l.b16 %v163
    %v662 = vunpack.c.h.b16 %v163
    %v663 = vunpack.c.l.b16 %v164
    %v664 = vunpack.c.h.b16 %v164
    %v665 = vunpack.c.l.b16 %v165
    %v666 = vunpack.c.h.b16 %v165
    %v667 = vunpack.c.l.b16 %v166
    %v668 = vunpack.c.h.b16 %v166
    %v669 = vunpack.c.l.b16 %v167
    %v670 = vunpack.c.h.b16 %v167
    %v671 = vunpack.c.l.b16 %v168
    %v672 = vunpack.c.h.b16 %v168
    %v673 = vunpack.c.l.b16 %v169
    %v674 = vunpack.c.h.b16 %v169
    %v675 = vunpack.c.l.b16 %v170
    %v676 = vunpack.c.h.b16 %v170
    %v677 = vunpack.c.l.b16 %v171
    %v678 = vunpack.c.h.b16 %v171
    %v679 = vunpack.c.l.b16 %v172
    %v680 = vunpack.c.h.b16 %v172
    %v681 = vunpack.c.l.b16 %v173
    %v682 = vunpack.c.h.b16 %v173
    %v683 = vunpack.c.l.b16 %v174
    %v684 = vunpack.c.h.b16 %v174
    %v685 = vunpack.c.l.b16 %v175
    %v686 = vunpack.c.h.b16 %v175
    %v687 = vunpack.c.l.b16 %v176
    %v688 = vunpack.c.h.b16 %v176
    %v689 = vunpack.c.l.b16 %v177
    %v690 = vunpack.c.h.b16 %v177
    %v691 = vunpack.c.l.b16 %v178
    %v692 = vunpack.c.h.b16 %v178
    %v693 = vunpack.c.l.b16 %v179
    %v694 = vunpack.c.h.b16 %v179
    %v695 = vunpack.c.l.b16 %v180
    %v696 = vunpack.c.h.b16 %v180
    %v697 = vunpack.c.l.b16 %v181
    %v698 = vunpack.c.h.b16 %v181
    %v699 = vunpack.c.l.b16 %v182
    %v700 = vunpack.c.h.b16 %v182
    %v701 = vunpack.c.l.b16 %v183
    %v702 = vunpack.c.h.b16 %v183
    %v703 = vunpack.c.l.b16 %v184
    %v704 = vunpack.c.h.b16 %v184
    %v705 = vunpack.c.l.b16 %v185
    %v706 = vunpack.c.h.b16 %v185
    %v707 = vunpack.c.l.b16 %v186
    %v708 = vunpack.c.h.b16 %v186
    %v709 = vunpack.c.l.b16 %v187
    %v710 = vunpack.c.h.b16 %v187
    %v711 = vunpack.c.l.b16 %v188
    %v712 = vunpack.c.h.b16 %v188
    %v713 = vunpack.c.l.b16 %v189
    %v714 = vunpack.c.h.b16 %v189
    %v715 = vunpack.c.l.b16 %v190
    %v716 = vunpack.c.h.b16 %v190
    %v717 = vunpack.c.l.b16 %v191
    %v718 = vunpack.c.h.b16 %v191
    %v719 = vunpack.c.l.b16 %v192
    %v720 = vunpack.c.h.b16 %v192
    %v721 = vunpack.c.l.b16 %v193
    %v722 = vunpack.c.h.b16 %v193
    %v723 = vunpack.c.l.b16 %v194
    %v724 = vunpack.c.h.b16 %v194
    %v725 = vunpack.c.l.b16 %v195
    %v726 = vunpack.c.h.b16 %v195
    %v727 = vunpack.c.l.b16 %v196
    %v728 = vunpack.c.h.b16 %v196
    %v729 = vunpack.c.l.b16 %v197
    %v730 = vunpack.c.h.b16 %v197
    %v731 = vunpack.c.l.b16 %v198
    %v732 = vunpack.c.h.b16 %v198
    %v733 = vunpack.c.l.b16 %v199
    %v734 = vunpack.c.h.b16 %v199
    %v735 = vunpack.c.l.b16 %v200
    %v736 = vunpack.c.h.b16 %v200
    %v737 = vunpack.c.l.b16 %v201
    %v738 = vunpack.c.h.b16 %v201
    %v739 = vunpack.c.l.b16 %v202
    %v740 = vunpack.c.h.b16 %v202
    %v741 = vunpack.c.l.b16 %v203
    %v742 = vunpack.c.h.b16 %v203
    %v743 = vunpack.c.l.b16 %v204
    %v744 = vunpack.c.h.b16 %v204
    %v745 = vunpack.c.l.b16 %v205
    %v746 = vunpack.c.h.b16 %v205
    %v747 = vunpack.c.l.b16 %v206
    %v748 = vunpack.c.h.b16 %v206
    %v749 = vunpack.c.l.b16 %v207
    %v750 = vunpack.c.h.b16 %v207
    %v751 = vunpack.c.l.b16 %v208
    %v752 = vunpack.c.h.b16 %v208
    %v753 = vunpack.c.l.b16 %v209
    %v754 = vunpack.c.h.b16 %v209
    %v755 = vunpack.c.l.b16 %v210
    %v756 = vunpack.c.h.b16 %v210
    %v757 = vunpack.c.l.b16 %v211
    %v758 = vunpack.c.h.b16 %v211
    %v759 = vunpack.c.l.b16 %v212
    %v760 = vunpack.c.h.b16 %v212
    %v761 = vunpack.c.l.b16 %v213
    %v762 = vunpack.c.h.b16 %v213
    %v763 = vunpack.c.l.b16 %v214
    %v764 = vunpack.c.h.b16 %v214
    %v765 = vunpack.c.l.b16 %v215
    %v766 = vunpack.c.h.b16 %v215
    %v767 = vunpack.c.l.b16 %v216
    %v768 = vunpack.c.h.b16 %v216
    %v769 = vunpack.c.l.b16 %v217
    %v770 = vunpack.c.h.b16 %v217
    %v771 = vunpack.c.l.b16 %v218
    %v772 = vunpack.c.h.b16 %v218
    %v773 = vunpack.c.l.b16 %v219
    %v774 = vunpack.c.h.b16 %v219
    %v775 = vunpack.c.l.b16 %v220
    %v776 = vunpack.c.h.b16 %v220
    %v777 = vunpack.c.l.b16 %v221
    %v778 = vunpack.c.h.b16 %v221
    %v779 = vunpack.c.l.b16 %v222
    %v780 = vunpack.c.h.b16 %v222
    %v781 = vunpack.c.l.b16 %v223
    %v782 = vunpack.c.h.b16 %v223
    %v783 = vunpack.c.l.b16 %v224
    %v784 = vunpack.c.h.b16 %v224
    %v785 = vunpack.c.l.b16 %v225
    %v786 = vunpack.c.h.b16 %v225
    %v787 = vunpack.c.l.b16 %v226
    %v788 = vunpack.c.h.b16 %v226
    %v789 = vunpack.c.l.b16 %v227
    %v790 = vunpack.c.h.b16 %v227
    %v791 = vunpack.c.l.b16 %v228
    %v792 = vunpack.c.h.b16 %v228
    %v793 = vunpack.c.l.b16 %v229
    %v794 = vunpack.c.h.b16 %v229
    %v795 = vunpack.c.l.b16 %v230
    %v796 = vunpack.c.h.b16 %v230
    %v797 = vunpack.c.l.b16 %v231
    %v798 = vunpack.c.h.b16 %v231
    %v799 = vunpack.c.l.b16 %v232
    %v800 = vunpack.c.h.b16 %v232
    %v801 = vunpack.c.l.b16 %v233
    %v802 = vunpack.c.h.b16 %v233
    %v803 = vunpack.c.l.b16 %v234
    %v804 = vunpack.c.h.b16 %v234
    %v805 = vunpack.c.l.b16 %v235
    %v806 = vunpack.c.h.b16 %v235
    %v807 = vunpack.c.l.b16 %v236
    %v808 = vunpack.c.h.b16 %v236
    %v809 = vunpack.c.l.b16 %v237
    %v810 = vunpack.c.h.b16 %v237
    %v811 = vunpack.c.l.b16 %v238
    %v812 = vunpack.c.h.b16 %v238
    %v813 = vunpack.c.l.b16 %v239
    %v814 = vunpack.c.h.b16 %v239
    %v815 = vunpack.c.l.b16 %v240
    %v816 = vunpack.c.h.b16 %v240
    %v817 = vunpack.c.l.b16 %v241
    %v818 = vunpack.c.h.b16 %v241
    %v819 = vunpack.c.l.b16 %v242
    %v820 = vunpack.c.h.b16 %v242
    %v821 = vunpack.c.l.b16 %v243
    %v822 = vunpack.c.h.b16 %v243
    %v823 = vunpack.c.l.b16 %v244
    %v824 = vunpack.c.h.b16 %v244
    %v825 = vunpack.c.l.b16 %v245
    %v826 = vunpack.c.h.b16 %v245
    %v827 = vunpack.c.l.b16 %v246
    %v828 = vunpack.c.h.b16 %v246
    %v829 = vunpack.c.l.b16 %v247
    %v830 = vunpack.c.h.b16 %v247
    %v831 = vunpack.c.l.b16 %v248
    %v832 = vunpack.c.h.b16 %v248
    %v833 = vunpack.c.l.b16 %v249
    %v834 = vunpack.c.h.b16 %v249
    %v835 = vunpack.c.l.b16 %v250
    %v836 = vunpack.c.h.b16 %v250
    %v837 = vunpack.c.l.b16 %v251
    %v838 = vunpack.c.h.b16 %v251
    %v839 = vunpack.c.l.b16 %v252
    %v840 = vunpack.c.h.b16 %v252
    %v841 = vunpack.c.l.b16 %v253
    %v842 = vunpack.c.h.b16 %v253
    %v843 = vunpack.c.l.b16 %v254
    %v844 = vunpack.c.h.b16 %v254
    %v845 = vunpack.c.l.b16 %v255
    %v846 = vunpack.c.h.b16 %v255
    %v847 = vunpack.c.l.b16 %v256
    %v848 = vunpack.c.h.b16 %v256
    %v849 = vunpack.c.l.b16 %v257
    %v850 = vunpack.c.h.b16 %v257
    %v851 = vunpack.c.l.b16 %v258
    %v852 = vunpack.c.h.b16 %v258
    %v853 = vunpack.c.l.b16 %v259
    %v854 = vunpack.c.h.b16 %v259
    %v855 = vunpack.c.l.b16 %v260
    %v856 = vunpack.c.h.b16 %v260
    %v857 = vunpack.c.l.b16 %v261
    %v858 = vunpack.c.h.b16 %v261
    %v859 = vunpack.c.l.b16 %v262
    %v860 = vunpack.c.h.b16 %v262
    %v861 = vunpack.c.l.b16 %v263
    %v862 = vunpack.c.h.b16 %v263
    %v863 = vunpack.c.l.b16 %v264
    %v864 = vunpack.c.h.b16 %v264
    %v865 = vunpack.c.l.b16 %v265
    %v866 = vunpack.c.h.b16 %v265
    %v867 = vunpack.c.l.b16 %v266
    %v868 = vunpack.c.h.b16 %v266
    %v869 = vunpack.c.l.b16 %v267
    %v870 = vunpack.c.h.b16 %v267
    %v871 = vunpack.c.l.b16 %v268
    %v872 = vunpack.c.h.b16 %v268
    %v873 = vunpack.c.l.b16 %v269
    %v874 = vunpack.c.h.b16 %v269
    %v875 = vunpack.c.l.b16 %v270
    %v876 = vunpack.c.h.b16 %v270
    %v877 = vunpack.c.l.b16 %v271
    %v878 = vunpack.c.h.b16 %v271
    %v879 = vunpack.c.l.b16 %v272
    %v880 = vunpack.c.h.b16 %v272
    %v881 = vunpack.c.l.b16 %v273
    %v882 = vunpack.c.h.b16 %v273
    %v883 = vunpack.c.l.b16 %v274
    %v884 = vunpack.c.h.b16 %v274
    %v885 = vpack.c.b16 %v505, %v501
    %v886 = vpack.c.b16 %v506, %v502
    %v887 = vpack.c.b16 %v507, %v503
    %v888 = vpack.c.b16 %v508, %v504
    %v889 = vpack.c.b16 %v513, %v509
    %v890 = vpack.c.b16 %v514, %v510
    %v891 = vpack.c.b16 %v515, %v511
    %v892 = vpack.c.b16 %v516, %v512
    %v893 = vpack.c.b16 %v521, %v517
    %v894 = vpack.c.b16 %v522, %v518
    %v895 = vpack.c.b16 %v523, %v519
    %v896 = vpack.c.b16 %v524, %v520
    %v897 = vpack.c.b16 %v529, %v525
    %v898 = vpack.c.b16 %v530, %v526
    %v899 = vpack.c.b16 %v531, %v527
    %v900 = vpack.c.b16 %v532, %v528
    %v901 = vpack.c.b16 %v537, %v533
    %v902 = vpack.c.b16 %v538, %v534
    %v903 = vpack.c.b16 %v539, %v535
    %v904 = vpack.c.b16 %v540, %v536
    %v905 = vpack.c.b16 %v545, %v541
    %v906 = vpack.c.b16 %v546, %v542
    %v907 = vpack.c.b16 %v547, %v543
    %v908 = vpack.c.b16 %v548, %v544
    %v909 = vpack.c.b16 %v553, %v549
    %v910 = vpack.c.b16 %v554, %v550
    %v911 = vpack.c.b16 %v555, %v551
    %v912 = vpack.c.b16 %v556, %v552
    %v913 = vpack.c.b16 %v561, %v557
    %v914 = vpack.c.b16 %v562, %v558
    %v915 = vpack.c.b16 %v563, %v559
    %v916 = vpack.c.b16 %v564, %v560
    %v917 = vpack.c.b16 %v569, %v565
    %v918 = vpack.c.b16 %v570, %v566
    %v919 = vpack.c.b16 %v571, %v567
    %v920 = vpack.c.b16 %v572, %v568
    %v921 = vpack.c.b16 %v577, %v573
    %v922 = vpack.c.b16 %v578, %v574
    %v923 = vpack.c.b16 %v579, %v575
    %v924 = vpack.c.b16 %v580, %v576
    %v925 = vpack.c.b16 %v585, %v581
    %v926 = vpack.c.b16 %v586, %v582
    %v927 = vpack.c.b16 %v587, %v583
    %v928 = vpack.c.b16 %v588, %v584
    %v929 = vpack.c.b16 %v593, %v589
    %v930 = vpack.c.b16 %v594, %v590
    %v931 = vpack.c.b16 %v595, %v591
    %v932 = vpack.c.b16 %v596, %v592
    %v933 = vpack.c.b16 %v601, %v597
    %v934 = vpack.c.b16 %v602, %v598
    %v935 = vpack.c.b16 %v603, %v599
    %v936 = vpack.c.b16 %v604, %v600
    %v937 = vpack.c.b16 %v609, %v605
    %v938 = vpack.c.b16 %v610, %v606
    %v939 = vpack.c.b16 %v611, %v607
    %v940 = vpack.c.b16 %v612, %v608
    %v941 = vpack.c.b16 %v617, %v613
    %v942 = vpack.c.b16 %v618, %v614
    %v943 = vpack.c.b16 %v619, %v615
    %v944 = vpack.c.b16 %v620, %v616
    %v945 = vpack.c.b16 %v625, %v621
    %v946 = vpack.c.b16 %v626, %v622
    %v947 = vpack.c.b16 %v627, %v623
    %v948 = vpack.c.b16 %v628, %v624
    %v949 = vpack.c.b16 %v633, %v629
    %v950 = vpack.c.b16 %v634, %v630
    %v951 = vpack.c.b16 %v635, %v631
    %v952 = vpack.c.b16 %v636, %v632
    %v953 = vpack.c.b16 %v641, %v637
    %v954 = vpack.c.b16 %v642, %v638
    %v955 = vpack.c.b16 %v643, %v639
    %v956 = vpack.c.b16 %v644, %v640
    %v957 = vpack.c.b16 %v649, %v645
    %v958 = vpack.c.b16 %v650, %v646
    %v959 = vpack.c.b16 %v651, %v647
    %v960 = vpack.c.b16 %v652, %v648
    %v961 = vpack.c.b16 %v657, %v653
    %v962 = vpack.c.b16 %v658, %v654
    %v963 = vpack.c.b16 %v659, %v655
    %v964 = vpack.c.b16 %v660, %v656
    %v965 = vpack.c.b16 %v665, %v661
    %v966 = vpack.c.b16 %v666, %v662
    %v967 = vpack.c.b16 %v667, %v663
    %v968 = vpack.c.b16 %v668, %v664
    %v969 = vpack.c.b16 %v673, %v669
    %v970 = vpack.c.b16 %v674, %v670
    %v971 = vpack.c.b16 %v675, %v671
    %v972 = vpack.c.b16 %v676, %v672
    %v973 = vpack.c.b16 %v681, %v677
    %v974 = vpack.c.b16 %v682, %v678
    %v975 = vpack.c.b16 %v683, %v679
    %v976 = vpack.c.b16 %v684, %v680
    %v977 = vpack.c.b16 %v689, %v685
    %v978 = vpack.c.b16 %v690, %v686
    %v979 = vpack.c.b16 %v691, %v687
    %v980 = vpack.c.b16 %v692, %v688
    %v981 = vpack.c.b16 %v697, %v693
    %v982 = vpack.c.b16 %v698, %v694
    %v983 = vpack.c.b16 %v699, %v695
    %v984 = vpack.c.b16 %v700, %v696
    %v985 = vpack.c.b16 %v705, %v701
    %v986 = vpack.c.b16 %v706, %v702
    %v987 = vpack.c.b16 %v707, %v703
    %v988 = vpack.c.b16 %v708, %v704
    %v989 = vpack.c.b16 %v713, %v709
    %v990 = vpack.c.b16 %v714, %v710
    %v991 = vpack.c.b16 %v715, %v711
    %v992 = vpack.c.b16 %v716, %v712
    %v993 = vpack.c.b16 %v721, %v717
    %v994 = vpack.c.b16 %v722, %v718
    %v995 = vpack.c.b16 %v723, %v719
    %v996 = vpack.c.b16 %v724, %v720
    %v997 = vpack.c.b16 %v729, %v725
    %v998 = vpack.c.b16 %v730, %v726
    %v999 = vpack.c.b16 %v731, %v727
    %v1000 = vpack.c.b16 %v732, %v728
    %v1001 = vpack.c.b16 %v737, %v733
    %v1002 = vpack.c.b16 %v738, %v734
    %v1003 = vpack.c.b16 %v739, %v735
    %v1004 = vpack.c.b16 %v740, %v736
    %v1005 = vpack.c.b16 %v745, %v741
    %v1006 = vpack.c.b16 %v746, %v742
    %v1007 = vpack.c.b16 %v747, %v743
    %v1008 = vpack.c.b16 %v748, %v744
    %v1009 = vpack.c.b16 %v753, %v749
    %v1010 = vpack.c.b16 %v754, %v750
    %v1011 = vpack.c.b16 %v755, %v751
    %v1012 = vpack.c.b16 %v756, %v752
    %v1013 = vpack.c.b16 %v761, %v757
    %v1014 = vpack.c.b16 %v762, %v758
    %v1015 = vpack.c.b16 %v763, %v759
    %v1016 = vpack.c.b16 %v764, %v760
    %v1017 = vpack.c.b16 %v769, %v765
    %v1018 = vpack.c.b16 %v770, %v766
    %v1019 = vpack.c.b16 %v771, %v767
    %v1020 = vpack.c.b16 %v772, %v768
    %v1021 = vpack.c.b16 %v777, %v773
    %v1022 = vpack.c.b16 %v778, %v774
    %v1023 = vpack.c.b16 %v779, %v775
    %v1024 = vpack.c.b16 %v780, %v776
    %v1025 = vpack.c.b16 %v785, %v781
    %v1026 = vpack.c.b16 %v786, %v782
    %v1027 = vpack.c.b16 %v787, %v783
    %v1028 = vpack.c.b16 %v788, %v784
    %v1029 = vpack.c.b16 %v793, %v789
    %v1030 = vpack.c.b16 %v794, %v790
    %v1031 = vpack.c.b16 %v795, %v791
    %v1032 = vpack.c.b16 %v796, %v792
    %v1033 = vpack.c.b16 %v801, %v797
    %v1034 = vpack.c.b16 %v802, %v798
    %v1035 = vpack.c.b16 %v803, %v799
    %v1036 = vpack.c.b16 %v804, %v800
    %v1037 = vpack.c.b16 %v809, %v805
    %v1038 = vpack.c.b16 %v810, %v806
    %v1039 = vpack.c.b16 %v811, %v807
    %v1040 = vpack.c.b16 %v812, %v808
    %v1041 = vpack.c.b16 %v817, %v813
    %v1042 = vpack.c.b16 %v818, %v814
    %v1043 = vpack.c.b16 %v819, %v815
    %v1044 = vpack.c.b16 %v820, %v816
    %v1045 = vpack.c.b16 %v825, %v821
    %v1046 = vpack.c.b16 %v826, %v822
    %v1047 = vpack.c.b16 %v827, %v823
    %v1048 = vpack.c.b16 %v828, %v824
    %v1049 = vpack.c.b16 %v833, %v829
    %v1050 = vpack.c.b16 %v834, %v830
    %v1051 = vpack.c.b16 %v835, %v831
    %v1052 = vpack.c.b16 %v836, %v832
    %v1053 = vpack.c.b16 %v841, %v837
    %v1054 = vpack.c.b16 %v842, %v838
    %v1055 = vpack.c.b16 %v843, %v839
    %v1056 = vpack.c.b16 %v844, %v840
    %v1057 = vpack.c.b16 %v849, %v845
    %v1058 = vpack.c.b16 %v850, %v846
    %v1059 = vpack.c.b16 %v851, %v847
    %v1060 = vpack.c.b16 %v852, %v848
    %v1061 = vpack.c.b16 %v857, %v853
    %v1062 = vpack.c.b16 %v858, %v854
    %v1063 = vpack.c.b16 %v859, %v855
    %v1064 = vpack.c.b16 %v860, %v856
    %v1065 = vpack.c.b16 %v865, %v861
    %v1066 = vpack.c.b16 %v866, %v862
    %v1067 = vpack.c.b16 %v867, %v863
    %v1068 = vpack.c.b16 %v868, %v864
    %v1069 = vpack.c.b16 %v873, %v869
    %v1070 = vpack.c.b16 %v874, %v870
    %v1071 = vpack.c.b16 %v875, %v871
    %v1072 = vpack.c.b16 %v876, %v872
    %v1073 = vpack.c.b16 %v881, %v877
    %v1074 = vpack.c.b16 %v882, %v878
    %v1075 = vpack.c.b16 %v883, %v879
    %v1076 = vpack.c.b16 %v884, %v880
    %1269 = vmatprep.subr.bf16.mxu0 %v886
    %1270 = vmatpush1.bf16.msra.mxu0 %v885
    %1271 = vmatprep.subr.bf16.mxu0 %v890
    %1272 = vmatpush1.bf16.msra.mxu0 %v889
    %1273 = vmatprep.subr.bf16.mxu0 %v894
    %1274 = vmatpush1.bf16.msra.mxu0 %v893
    %1275 = vmatprep.subr.bf16.mxu0 %v898
    %1276 = vmatpush1.bf16.msra.mxu0 %v897
    %1277 = vmatprep.subr.bf16.mxu0 %v902
    %1278 = vmatpush1.bf16.msra.mxu0 %v901
    %1279 = vmatprep.subr.bf16.mxu0 %v906
    %1280 = vmatpush1.bf16.msra.mxu0 %v905
    %1281 = vmatprep.subr.bf16.mxu0 %v910
    %1282 = vmatpush1.bf16.msra.mxu0 %v909
    %1283 = vmatprep.subr.bf16.mxu0 %v914
    %1284 = vmatpush1.bf16.msra.mxu0 %v913
    %1285 = vmatprep.subr.bf16.mxu0 %v918
    %1286 = vmatpush1.bf16.msra.mxu0 %v917
    %1287 = vmatprep.subr.bf16.mxu0 %v922
    %1288 = vmatpush1.bf16.msra.mxu0 %v921
    %1289 = vmatprep.subr.bf16.mxu0 %v926
    %1290 = vmatpush1.bf16.msra.mxu0 %v925
    %1291 = vmatprep.subr.bf16.mxu0 %v930
    %1292 = vmatpush1.bf16.msra.mxu0 %v929
    %1293 = vmatprep.subr.bf16.mxu0 %v934
    %1294 = vmatpush1.bf16.msra.mxu0 %v933
    %1295 = vmatprep.subr.bf16.mxu0 %v938
    %1296 = vmatpush1.bf16.msra.mxu0 %v937
    %1297 = vmatprep.subr.bf16.mxu0 %v942
    %1298 = vmatpush1.bf16.msra.mxu0 %v941
    %1299 = vmatprep.subr.bf16.mxu0 %v946
    %1300 = vmatpush1.bf16.msra.mxu0 %v945
    %1301 = vmatprep.mubr.bf16.mxu0 %v78
    %1302 = vmatmul.mubr.bf16.gmra.mrb[0].mxu0 %v77
    %v1303 = vpop.f32.mrb[0].mxu0
    %v1304 = vadd.f32 %v305, %v1303
    %v1305 = vpop.f32.mrb[0].mxu0
    %v1306 = vadd.f32 %v306, %v1305
    %v1307 = vpop.f32.mrb[0].mxu0
    %v1308 = vpop.f32.mrb[0].mxu0
    %1309 = vdwg.mxu0
    %1310 = vmatprep.subr.bf16.mxu0 %v950
    %1311 = vmatpush1.bf16.msra.mxu0 %v949
    %1312 = vmatprep.subr.bf16.mxu0 %v954
    %1313 = vmatpush1.bf16.msra.mxu0 %v953
    %1314 = vmatprep.subr.bf16.mxu0 %v958
    %1315 = vmatpush1.bf16.msra.mxu0 %v957
    %1316 = vmatprep.subr.bf16.mxu0 %v962
    %1317 = vmatpush1.bf16.msra.mxu0 %v961
    %1318 = vmatprep.subr.bf16.mxu0 %v966
    %1319 = vmatpush1.bf16.msra.mxu0 %v965
    %1320 = vmatprep.subr.bf16.mxu0 %v970
    %1321 = vmatpush1.bf16.msra.mxu0 %v969
    %1322 = vmatprep.subr.bf16.mxu0 %v974
    %1323 = vmatpush1.bf16.msra.mxu0 %v973
    %1324 = vmatprep.subr.bf16.mxu0 %v978
    %1325 = vmatpush1.bf16.msra.mxu0 %v977
    %1326 = vmatprep.subr.bf16.mxu0 %v982
    %1327 = vmatpush1.bf16.msra.mxu0 %v981
    %1328 = vmatprep.subr.bf16.mxu0 %v986
    %1329 = vmatpush1.bf16.msra.mxu0 %v985
    %1330 = vmatprep.subr.bf16.mxu0 %v990
    %1331 = vmatpush1.bf16.msra.mxu0 %v989
    %1332 = vmatprep.subr.bf16.mxu0 %v994
    %1333 = vmatpush1.bf16.msra.mxu0 %v993
    %1334 = vmatprep.subr.bf16.mxu0 %v998
    %1335 = vmatpush1.bf16.msra.mxu0 %v997
    %1336 = vmatprep.subr.bf16.mxu0 %v1002
    %1337 = vmatpush1.bf16.msra.mxu0 %v1001
    %1338 = vmatprep.subr.bf16.mxu0 %v1006
    %1339 = vmatpush1.bf16.msra.mxu0 %v1005
    %1340 = vmatprep.subr.bf16.mxu0 %v1010
    %1341 = vmatpush1.bf16.msra.mxu0 %v1009
    %1342 = vmatprep.mubr.bf16.mxu0 %v80
    %1343 = vmatmul.mubr.bf16.gmra.mrb[0].mxu0 %v79
    %v1344 = vpop.f32.mrb[0].mxu0
    %v1345 = vadd.f32 %v1304, %v1344
    %v1346 = vpop.f32.mrb[0].mxu0
    %v1347 = vadd.f32 %v1306, %v1346
    %v1348 = vpop.f32.mrb[0].mxu0
    %v1349 = vpop.f32.mrb[0].mxu0
    %1350 = vdwg.mxu0
    %1351 = vmatprep.subr.bf16.mxu0 %v1014
    %1352 = vmatpush1.bf16.msra.mxu0 %v1013
    %1353 = vmatprep.subr.bf16.mxu0 %v1018
    %1354 = vmatpush1.bf16.msra.mxu0 %v1017
    %1355 = vmatprep.subr.bf16.mxu0 %v1022
    %1356 = vmatpush1.bf16.msra.mxu0 %v1021
    %1357 = vmatprep.subr.bf16.mxu0 %v1026
    %1358 = vmatpush1.bf16.msra.mxu0 %v1025
    %1359 = vmatprep.subr.bf16.mxu0 %v1030
    %1360 = vmatpush1.bf16.msra.mxu0 %v1029
    %1361 = vmatprep.subr.bf16.mxu0 %v1034
    %1362 = vmatpush1.bf16.msra.mxu0 %v1033
    %1363 = vmatprep.subr.bf16.mxu0 %v1038
    %1364 = vmatpush1.bf16.msra.mxu0 %v1037
    %1365 = vmatprep.subr.bf16.mxu0 %v1042
    %1366 = vmatpush1.bf16.msra.mxu0 %v1041
    %1367 = vmatprep.subr.bf16.mxu0 %v1046
    %1368 = vmatpush1.bf16.msra.mxu0 %v1045
    %1369 = vmatprep.subr.bf16.mxu0 %v1050
    %1370 = vmatpush1.bf16.msra.mxu0 %v1049
    %1371 = vmatprep.subr.bf16.mxu0 %v1054
    %1372 = vmatpush1.bf16.msra.mxu0 %v1053
    %1373 = vmatprep.subr.bf16.mxu0 %v1058
    %1374 = vmatpush1.bf16.msra.mxu0 %v1057
    %1375 = vmatprep.subr.bf16.mxu0 %v1062
    %1376 = vmatpush1.bf16.msra.mxu0 %v1061
    %1377 = vmatprep.subr.bf16.mxu0 %v1066
    %1378 = vmatpush1.bf16.msra.mxu0 %v1065
    %1379 = vmatprep.subr.bf16.mxu0 %v1070
    %1380 = vmatpush1.bf16.msra.mxu0 %v1069
    %1381 = vmatprep.subr.bf16.mxu0 %v1074
    %1382 = vmatpush1.bf16.msra.mxu0 %v1073
    %1383 = vmatprep.mubr.bf16.mxu0 %v82
    %1384 = vmatmul.mubr.bf16.gmra.mrb[0].mxu0 %v81
    %v1385 = vpop.f32.mrb[0].mxu0
    %v1386 = vadd.f32 %v1345, %v1385
    %v1387 = vpop.f32.mrb[0].mxu0
    %v1388 = vadd.f32 %v1347, %v1387
    %v1389 = vpop.f32.mrb[0].mxu0
    %v1390 = vpop.f32.mrb[0].mxu0
    %1391 = vdwg.mxu0
    %1392 = vmatprep.subr.bf16.mxu0 %v888
    %1393 = vmatpush1.bf16.msra.mxu0 %v887
    %1394 = vmatprep.subr.bf16.mxu0 %v892
    %1395 = vmatpush1.bf16.msra.mxu0 %v891
    %1396 = vmatprep.subr.bf16.mxu0 %v896
    %1397 = vmatpush1.bf16.msra.mxu0 %v895
    %1398 = vmatprep.subr.bf16.mxu0 %v900
    %1399 = vmatpush1.bf16.msra.mxu0 %v899
    %1400 = vmatprep.subr.bf16.mxu0 %v904
    %1401 = vmatpush1.bf16.msra.mxu0 %v903
    %1402 = vmatprep.subr.bf16.mxu0 %v908
    %1403 = vmatpush1.bf16.msra.mxu0 %v907
    %1404 = vmatprep.subr.bf16.mxu0 %v912
    %1405 = vmatpush1.bf16.msra.mxu0 %v911
    %1406 = vmatprep.subr.bf16.mxu0 %v916
    %1407 = vmatpush1.bf16.msra.mxu0 %v915
    %1408 = vmatprep.subr.bf16.mxu0 %v920
    %1409 = vmatpush1.bf16.msra.mxu0 %v919
    %1410 = vmatprep.subr.bf16.mxu0 %v924
    %1411 = vmatpush1.bf16.msra.mxu0 %v923
    %1412 = vmatprep.subr.bf16.mxu0 %v928
    %1413 = vmatpush1.bf16.msra.mxu0 %v927
    %1414 = vmatprep.subr.bf16.mxu0 %v932
    %1415 = vmatpush1.bf16.msra.mxu0 %v931
    %1416 = vmatprep.subr.bf16.mxu0 %v936
    %1417 = vmatpush1.bf16.msra.mxu0 %v935
    %1418 = vmatprep.subr.bf16.mxu0 %v940
    %1419 = vmatpush1.bf16.msra.mxu0 %v939
    %1420 = vmatprep.subr.bf16.mxu0 %v944
    %1421 = vmatpush1.bf16.msra.mxu0 %v943
    %1422 = vmatprep.subr.bf16.mxu0 %v948
    %1423 = vmatpush1.bf16.msra.mxu0 %v947
    %1424 = vmatprep.mubr.bf16.mxu0 %v78
    %1425 = vmatmul.mubr.bf16.gmra.mrb[0].mxu0 %v77
    %v1426 = vpop.f32.mrb[0].mxu0
    %v1427 = vadd.f32 %v307, %v1426
    %v1428 = vpop.f32.mrb[0].mxu0
    %v1429 = vadd.f32 %v308, %v1428
    %v1430 = vpop.f32.mrb[0].mxu0
    %v1431 = vpop.f32.mrb[0].mxu0
    %1432 = vdwg.mxu0
    %1433 = vmatprep.subr.bf16.mxu0 %v952
    %1434 = vmatpush1.bf16.msra.mxu0 %v951
    %1435 = vmatprep.subr.bf16.mxu0 %v956
    %1436 = vmatpush1.bf16.msra.mxu0 %v955
    %1437 = vmatprep.subr.bf16.mxu0 %v960
    %1438 = vmatpush1.bf16.msra.mxu0 %v959
    %1439 = vmatprep.subr.bf16.mxu0 %v964
    %1440 = vmatpush1.bf16.msra.mxu0 %v963
    %1441 = vmatprep.subr.bf16.mxu0 %v968
    %1442 = vmatpush1.bf16.msra.mxu0 %v967
    %1443 = vmatprep.subr.bf16.mxu0 %v972
    %1444 = vmatpush1.bf16.msra.mxu0 %v971
    %1445 = vmatprep.subr.bf16.mxu0 %v976
    %1446 = vmatpush1.bf16.msra.mxu0 %v975
    %1447 = vmatprep.subr.bf16.mxu0 %v980
    %1448 = vmatpush1.bf16.msra.mxu0 %v979
    %1449 = vmatprep.subr.bf16.mxu0 %v984
    %1450 = vmatpush1.bf16.msra.mxu0 %v983
    %1451 = vmatprep.subr.bf16.mxu0 %v988
    %1452 = vmatpush1.bf16.msra.mxu0 %v987
    %1453 = vmatprep.subr.bf16.mxu0 %v992
    %1454 = vmatpush1.bf16.msra.mxu0 %v991
    %1455 = vmatprep.subr.bf16.mxu0 %v996
    %1456 = vmatpush1.bf16.msra.mxu0 %v995
    %1457 = vmatprep.subr.bf16.mxu0 %v1000
    %1458 = vmatpush1.bf16.msra.mxu0 %v999
    %1459 = vmatprep.subr.bf16.mxu0 %v1004
    %1460 = vmatpush1.bf16.msra.mxu0 %v1003
    %1461 = vmatprep.subr.bf16.mxu0 %v1008
    %1462 = vmatpush1.bf16.msra.mxu0 %v1007
    %1463 = vmatprep.subr.bf16.mxu0 %v1012
    %1464 = vmatpush1.bf16.msra.mxu0 %v1011
    %1465 = vmatprep.mubr.bf16.mxu0 %v80
    %1466 = vmatmul.mubr.bf16.gmra.mrb[0].mxu0 %v79
    %v1467 = vpop.f32.mrb[0].mxu0
    %v1468 = vadd.f32 %v1427, %v1467
    %v1469 = vpop.f32.mrb[0].mxu0
    %v1470 = vadd.f32 %v1429, %v1469
    %v1471 = vpop.f32.mrb[0].mxu0
    %v1472 = vpop.f32.mrb[0].mxu0
    %1473 = vdwg.mxu0
    %1474 = vmatprep.subr.bf16.mxu0 %v1016
    %1475 = vmatpush1.bf16.msra.mxu0 %v1015
    %1476 = vmatprep.subr.bf16.mxu0 %v1020
    %1477 = vmatpush1.bf16.msra.mxu0 %v1019
    %1478 = vmatprep.subr.bf16.mxu0 %v1024
    %1479 = vmatpush1.bf16.msra.mxu0 %v1023
    %1480 = vmatprep.subr.bf16.mxu0 %v1028
    %1481 = vmatpush1.bf16.msra.mxu0 %v1027
    %1482 = vmatprep.subr.bf16.mxu0 %v1032
    %1483 = vmatpush1.bf16.msra.mxu0 %v1031
    %1484 = vmatprep.subr.bf16.mxu0 %v1036
    %1485 = vmatpush1.bf16.msra.mxu0 %v1035
    %1486 = vmatprep.subr.bf16.mxu0 %v1040
    %1487 = vmatpush1.bf16.msra.mxu0 %v1039
    %1488 = vmatprep.subr.bf16.mxu0 %v1044
    %1489 = vmatpush1.bf16.msra.mxu0 %v1043
    %1490 = vmatprep.subr.bf16.mxu0 %v1048
    %1491 = vmatpush1.bf16.msra.mxu0 %v1047
    %1492 = vmatprep.subr.bf16.mxu0 %v1052
    %1493 = vmatpush1.bf16.msra.mxu0 %v1051
    %1494 = vmatprep.subr.bf16.mxu0 %v1056
    %1495 = vmatpush1.bf16.msra.mxu0 %v1055
    %1496 = vmatprep.subr.bf16.mxu0 %v1060
    %1497 = vmatpush1.bf16.msra.mxu0 %v1059
    %1498 = vmatprep.subr.bf16.mxu0 %v1064
    %1499 = vmatpush1.bf16.msra.mxu0 %v1063
    %1500 = vmatprep.subr.bf16.mxu0 %v1068
    %1501 = vmatpush1.bf16.msra.mxu0 %v1067
    %1502 = vmatprep.subr.bf16.mxu0 %v1072
    %1503 = vmatpush1.bf16.msra.mxu0 %v1071
    %1504 = vmatprep.subr.bf16.mxu0 %v1076
    %1505 = vmatpush1.bf16.msra.mxu0 %v1075
    %1506 = vmatprep.mubr.bf16.mxu0 %v82
    %1507 = vmatmul.mubr.bf16.gmra.mrb[0].mxu0 %v81
    %v1508 = vpop.f32.mrb[0].mxu0
    %v1509 = vadd.f32 %v1468, %v1508
    %v1510 = vpop.f32.mrb[0].mxu0
    %v1511 = vadd.f32 %v1470, %v1510
    %v1512 = vpop.f32.mrb[0].mxu0
    %v1513 = vpop.f32.mrb[0].mxu0
    %1514 = vdwg.mxu0
    %1515 = vset.pattern.permute.xlu0 1
    %1516 = vperm.xlu0 %1515, %v275
    %v1517 = vpop.permute.xlu0 %1516
    %v1519 = vlaneseq
    %v1520 = vshrl.u32 %v1519, 7
    %v1521 = vsub.s32 1, %v1520
    %v1522 = vrot.slane %v276, %v1521
    %v1523 = vlaneseq
    %v1524 = vshrl.u32 %v1523, 7
    %v1525 = vsub.s32 1, %v1524
    %v1526 = vrot.slane %v277, %v1525
    %v1527 = vlaneseq
    %v1528 = vshrl.u32 %v1527, 7
    %v1529 = vsub.s32 1, %v1528
    %v1530 = vrot.slane %v278, %v1529
    %v1531 = vlaneseq
    %v1532 = vshrl.u32 %v1531, 7
    %v1533 = vsub.s32 1, %v1532
    %v1534 = vrot.slane %v279, %v1533
    %v1535 = vmul.f32 %v1517, %v1522
    %v1536 = vmul.f32 %v1517, %v1526
    %v1537 = vmul.f32 %v1517, %v1530
    %v1538 = vmul.f32 %v1517, %v1534
    %v1539 = vadd.f32 %v1386, %v1535
    %v1540 = vadd.f32 %v1388, %v1536
    %v1541 = vadd.f32 %v1509, %v1537
    %v1542 = vadd.f32 %v1511, %v1538
    %1543 = vset.pattern.permute.xlu0 2
    %1544 = vperm.xlu0 %1543, %v275
    %v1545 = vpop.permute.xlu0 %1544
    %v1547 = vlaneseq
    %v1548 = vshrl.u32 %v1547, 7
    %v1549 = vsub.s32 2, %v1548
    %v1550 = vrot.slane %v276, %v1549
    %v1551 = vlaneseq
    %v1552 = vshrl.u32 %v1551, 7
    %v1553 = vsub.s32 2, %v1552
    %v1554 = vrot.slane %v277, %v1553
    %v1555 = vlaneseq
    %v1556 = vshrl.u32 %v1555, 7
    %v1557 = vsub.s32 2, %v1556
    %v1558 = vrot.slane %v278, %v1557
    %v1559 = vlaneseq
    %v1560 = vshrl.u32 %v1559, 7
    %v1561 = vsub.s32 2, %v1560
    %v1562 = vrot.slane %v279, %v1561
    %v1563 = vmul.f32 %v1545, %v1550
    %v1564 = vmul.f32 %v1545, %v1554
    %v1565 = vmul.f32 %v1545, %v1558
    %v1566 = vmul.f32 %v1545, %v1562
    %v1567 = vadd.f32 %v1539, %v1563
    %v1568 = vadd.f32 %v1540, %v1564
    %v1569 = vadd.f32 %v1541, %v1565
    %v1570 = vadd.f32 %v1542, %v1566
    %1571 = vset.pattern.permute.xlu0 3
    %1572 = vperm.xlu0 %1571, %v275
    %v1573 = vpop.permute.xlu0 %1572
    %v1575 = vlaneseq
    %v1576 = vshrl.u32 %v1575, 7
    %v1577 = vsub.s32 3, %v1576
    %v1578 = vrot.slane %v276, %v1577
    %v1579 = vlaneseq
    %v1580 = vshrl.u32 %v1579, 7
    %v1581 = vsub.s32 3, %v1580
    %v1582 = vrot.slane %v277, %v1581
    %v1583 = vlaneseq
    %v1584 = vshrl.u32 %v1583, 7
    %v1585 = vsub.s32 3, %v1584
    %v1586 = vrot.slane %v278, %v1585
    %v1587 = vlaneseq
    %v1588 = vshrl.u32 %v1587, 7
    %v1589 = vsub.s32 3, %v1588
    %v1590 = vrot.slane %v279, %v1589
    %v1591 = vmul.f32 %v1573, %v1578
    %v1592 = vmul.f32 %v1573, %v1582
    %v1593 = vmul.f32 %v1573, %v1586
    %v1594 = vmul.f32 %v1573, %v1590
    %v1595 = vadd.f32 %v1567, %v1591
    %v1596 = vadd.f32 %v1568, %v1592
    %v1597 = vadd.f32 %v1569, %v1593
    %v1598 = vadd.f32 %v1570, %v1594
    %1599 = vset.pattern.permute.xlu0 4
    %1600 = vperm.xlu0 %1599, %v275
    %v1601 = vpop.permute.xlu0 %1600
    %v1603 = vlaneseq
    %v1604 = vshrl.u32 %v1603, 7
    %v1605 = vsub.s32 4, %v1604
    %v1606 = vrot.slane %v276, %v1605
    %v1607 = vlaneseq
    %v1608 = vshrl.u32 %v1607, 7
    %v1609 = vsub.s32 4, %v1608
    %v1610 = vrot.slane %v277, %v1609
    %v1611 = vlaneseq
    %v1612 = vshrl.u32 %v1611, 7
    %v1613 = vsub.s32 4, %v1612
    %v1614 = vrot.slane %v278, %v1613
    %v1615 = vlaneseq
    %v1616 = vshrl.u32 %v1615, 7
    %v1617 = vsub.s32 4, %v1616
    %v1618 = vrot.slane %v279, %v1617
    %v1619 = vmul.f32 %v1601, %v1606
    %v1620 = vmul.f32 %v1601, %v1610
    %v1621 = vmul.f32 %v1601, %v1614
    %v1622 = vmul.f32 %v1601, %v1618
    %v1623 = vadd.f32 %v1595, %v1619
    %v1624 = vadd.f32 %v1596, %v1620
    %v1625 = vadd.f32 %v1597, %v1621
    %v1626 = vadd.f32 %v1598, %v1622
    %1627 = vset.pattern.permute.xlu0 5
    %1628 = vperm.xlu0 %1627, %v275
    %v1629 = vpop.permute.xlu0 %1628
    %v1631 = vlaneseq
    %v1632 = vshrl.u32 %v1631, 7
    %v1633 = vsub.s32 5, %v1632
    %v1634 = vrot.slane %v276, %v1633
    %v1635 = vlaneseq
    %v1636 = vshrl.u32 %v1635, 7
    %v1637 = vsub.s32 5, %v1636
    %v1638 = vrot.slane %v277, %v1637
    %v1639 = vlaneseq
    %v1640 = vshrl.u32 %v1639, 7
    %v1641 = vsub.s32 5, %v1640
    %v1642 = vrot.slane %v278, %v1641
    %v1643 = vlaneseq
    %v1644 = vshrl.u32 %v1643, 7
    %v1645 = vsub.s32 5, %v1644
    %v1646 = vrot.slane %v279, %v1645
    %v1647 = vmul.f32 %v1629, %v1634
    %v1648 = vmul.f32 %v1629, %v1638
    %v1649 = vmul.f32 %v1629, %v1642
    %v1650 = vmul.f32 %v1629, %v1646
    %v1651 = vadd.f32 %v1623, %v1647
    %v1652 = vadd.f32 %v1624, %v1648
    %v1653 = vadd.f32 %v1625, %v1649
    %v1654 = vadd.f32 %v1626, %v1650
    %1655 = vset.pattern.permute.xlu0 6
    %1656 = vperm.xlu0 %1655, %v275
    %v1657 = vpop.permute.xlu0 %1656
    %v1659 = vlaneseq
    %v1660 = vshrl.u32 %v1659, 7
    %v1661 = vsub.s32 6, %v1660
    %v1662 = vrot.slane %v276, %v1661
    %v1663 = vlaneseq
    %v1664 = vshrl.u32 %v1663, 7
    %v1665 = vsub.s32 6, %v1664
    %v1666 = vrot.slane %v277, %v1665
    %v1667 = vlaneseq
    %v1668 = vshrl.u32 %v1667, 7
    %v1669 = vsub.s32 6, %v1668
    %v1670 = vrot.slane %v278, %v1669
    %v1671 = vlaneseq
    %v1672 = vshrl.u32 %v1671, 7
    %v1673 = vsub.s32 6, %v1672
    %v1674 = vrot.slane %v279, %v1673
    %v1675 = vmul.f32 %v1657, %v1662
    %v1676 = vmul.f32 %v1657, %v1666
    %v1677 = vmul.f32 %v1657, %v1670
    %v1678 = vmul.f32 %v1657, %v1674
    %v1679 = vadd.f32 %v1651, %v1675
    %v1680 = vadd.f32 %v1652, %v1676
    %v1681 = vadd.f32 %v1653, %v1677
    %v1682 = vadd.f32 %v1654, %v1678
    %1683 = vset.pattern.permute.xlu0 7
    %1684 = vperm.xlu0 %1683, %v275
    %v1685 = vpop.permute.xlu0 %1684
    %v1687 = vlaneseq
    %v1688 = vshrl.u32 %v1687, 7
    %v1689 = vsub.s32 7, %v1688
    %v1690 = vrot.slane %v276, %v1689
    %v1691 = vlaneseq
    %v1692 = vshrl.u32 %v1691, 7
    %v1693 = vsub.s32 7, %v1692
    %v1694 = vrot.slane %v277, %v1693
    %v1695 = vlaneseq
    %v1696 = vshrl.u32 %v1695, 7
    %v1697 = vsub.s32 7, %v1696
    %v1698 = vrot.slane %v278, %v1697
    %v1699 = vlaneseq
    %v1700 = vshrl.u32 %v1699, 7
    %v1701 = vsub.s32 7, %v1700
    %v1702 = vrot.slane %v279, %v1701
    %v1703 = vmul.f32 %v1685, %v1690
    %v1704 = vmul.f32 %v1685, %v1694
    %v1705 = vmul.f32 %v1685, %v1698
    %v1706 = vmul.f32 %v1685, %v1702
    %v1707 = vadd.f32 %v1679, %v1703
    %v1708 = vadd.f32 %v1680, %v1704
    %v1709 = vadd.f32 %v1681, %v1705
    %v1710 = vadd.f32 %v1682, %v1706
    %1711 = vset.pattern.permute.xlu0 8
    %1712 = vperm.xlu0 %1711, %v275
    %v1713 = vpop.permute.xlu0 %1712
    %v1715 = vlaneseq
    %v1716 = vshrl.u32 %v1715, 7
    %v1717 = vsub.s32 0, %v1716
    %v1718 = vrot.slane %v280, %v1717
    %v1719 = vlaneseq
    %v1720 = vshrl.u32 %v1719, 7
    %v1721 = vsub.s32 0, %v1720
    %v1722 = vrot.slane %v281, %v1721
    %v1723 = vlaneseq
    %v1724 = vshrl.u32 %v1723, 7
    %v1725 = vsub.s32 0, %v1724
    %v1726 = vrot.slane %v282, %v1725
    %v1727 = vlaneseq
    %v1728 = vshrl.u32 %v1727, 7
    %v1729 = vsub.s32 0, %v1728
    %v1730 = vrot.slane %v283, %v1729
    %v1731 = vmul.f32 %v1713, %v1718
    %v1732 = vmul.f32 %v1713, %v1722
    %v1733 = vmul.f32 %v1713, %v1726
    %v1734 = vmul.f32 %v1713, %v1730
    %v1735 = vadd.f32 %v1707, %v1731
    %v1736 = vadd.f32 %v1708, %v1732
    %v1737 = vadd.f32 %v1709, %v1733
    %v1738 = vadd.f32 %v1710, %v1734
    %1739 = vset.pattern.permute.xlu0 9
    %1740 = vperm.xlu0 %1739, %v275
    %v1741 = vpop.permute.xlu0 %1740
    %v1743 = vlaneseq
    %v1744 = vshrl.u32 %v1743, 7
    %v1745 = vsub.s32 1, %v1744
    %v1746 = vrot.slane %v280, %v1745
    %v1747 = vlaneseq
    %v1748 = vshrl.u32 %v1747, 7
    %v1749 = vsub.s32 1, %v1748
    %v1750 = vrot.slane %v281, %v1749
    %v1751 = vlaneseq
    %v1752 = vshrl.u32 %v1751, 7
    %v1753 = vsub.s32 1, %v1752
    %v1754 = vrot.slane %v282, %v1753
    %v1755 = vlaneseq
    %v1756 = vshrl.u32 %v1755, 7
    %v1757 = vsub.s32 1, %v1756
    %v1758 = vrot.slane %v283, %v1757
    %v1759 = vmul.f32 %v1741, %v1746
    %v1760 = vmul.f32 %v1741, %v1750
    %v1761 = vmul.f32 %v1741, %v1754
    %v1762 = vmul.f32 %v1741, %v1758
    %v1763 = vadd.f32 %v1735, %v1759
    %v1764 = vadd.f32 %v1736, %v1760
    %v1765 = vadd.f32 %v1737, %v1761
    %v1766 = vadd.f32 %v1738, %v1762
    %v1767 = vlaneseq
    %v1768 = vshrl.u32 %v1767, 7
    %v1769 = vsub.s32 0, %v1768
    %v1770 = vrot.slane %v67, %v1769
    %v1771 = vlaneseq
    %v1772 = vshrl.u32 %v1771, 7
    %v1773 = vsub.s32 0, %v1772
    %v1774 = vrot.slane %v68, %v1773
    %v1775 = vlaneseq
    %v1776 = vshrl.u32 %v1775, 7
    %v1777 = vsub.s32 0, %v1776
    %v1778 = vrot.slane %v69, %v1777
    %v1779 = vlaneseq
    %v1780 = vshrl.u32 %v1779, 7
    %v1781 = vsub.s32 0, %v1780
    %v1782 = vrot.slane %v70, %v1781
    %v1783 = vadd.f32 %v1763, %v1770
    %v1784 = vadd.f32 %v1764, %v1774
    %v1785 = vadd.f32 %v1765, %v1778
    %v1786 = vadd.f32 %v1766, %v1782
    %vm1787 = vcmp.gt.f32.partialorder %v1783, 0.0
    %vm1788 = vcmp.gt.f32.partialorder %v1784, 0.0
    %vm1789 = vcmp.gt.f32.partialorder %v1785, 0.0
    %vm1790 = vcmp.gt.f32.partialorder %v1786, 0.0
    %v1791 = vmul.f32 %v1783, 0.2
    %v1792 = vmul.f32 %v1784, 0.2
    %v1793 = vmul.f32 %v1785, 0.2
    %v1794 = vmul.f32 %v1786, 0.2
    %v1795 = vsel %vm1787, %v1783, %v1791
    %v1796 = vsel %vm1788, %v1784, %v1792
    %v1797 = vsel %vm1789, %v1785, %v1793
    %v1798 = vsel %vm1790, %v1786, %v1794
    %v1799 = vpack.c.bf16 %v1795, %v1795
    %v1800 = vpack.c.bf16 %v1796, %v1796
    %v1801 = vpack.c.bf16 %v1797, %v1797
    %v1802 = vpack.c.bf16 %v1798, %v1798
    %v1803 = vld [vmem:[#allocation4] sm:$0xff]
    %v1804 = vld [vmem:[#allocation4 + $0x8] sm:$0xff]
    %v1805 = vld [vmem:[#allocation4 + $0x10] sm:$0xff]
    %v1806 = vld [vmem:[#allocation4 + $0x18] sm:$0xff]
    %v1807 = vld [vmem:[#allocation4 + $0x20] sm:$0xff]
    %v1808 = vld [vmem:[#allocation4 + $0x28] sm:$0xff]
    %v1809 = vld [vmem:[#allocation4 + $0x30] sm:$0xff]
    %v1810 = vld [vmem:[#allocation4 + $0x38] sm:$0xff]
    %v1811 = vld [vmem:[#allocation4 + $0x40] sm:$0xff]
    %v1812 = vld [vmem:[#allocation4 + $0x48] sm:$0xff]
    %v1813 = vld [vmem:[#allocation4 + $0x50] sm:$0xff]
    %v1814 = vld [vmem:[#allocation4 + $0x58] sm:$0xff]
    %v1815 = vld [vmem:[#allocation4 + $0x60] sm:$0xff]
    %v1816 = vld [vmem:[#allocation4 + $0x68] sm:$0xff]
    %v1817 = vld [vmem:[#allocation4 + $0x70] sm:$0xff]
    %v1818 = vld [vmem:[#allocation4 + $0x78] sm:$0xff]
    %v1819 = vld [vmem:[#allocation4 + $0x80] sm:$0xff]
    %v1820 = vld [vmem:[#allocation4 + $0x88] sm:$0xff]
    %v1821 = vld [vmem:[#allocation4 + $0x90] sm:$0xff]
    %v1822 = vld [vmem:[#allocation4 + $0x98] sm:$0xff]
    %v1823 = vld [vmem:[#allocation4 + $0xa0] sm:$0xff]
    %v1824 = vld [vmem:[#allocation4 + $0xa8] sm:$0xff]
    %v1825 = vld [vmem:[#allocation4 + $0xb0] sm:$0xff]
    %v1826 = vld [vmem:[#allocation4 + $0xb8] sm:$0xff]
    %v1827 = vld [vmem:[#allocation4 + $0xc0] sm:$0xff]
    %v1828 = vld [vmem:[#allocation4 + $0xc8] sm:$0xff]
    %v1829 = vld [vmem:[#allocation4 + $0xd0] sm:$0xff]
    %v1830 = vld [vmem:[#allocation4 + $0xd8] sm:$0xff]
    %v1831 = vld [vmem:[#allocation4 + $0xe0] sm:$0xff]
    %v1832 = vld [vmem:[#allocation4 + $0xe8] sm:$0xff]
    %v1833 = vld [vmem:[#allocation4 + $0xf0] sm:$0xff]
    %v1834 = vld [vmem:[#allocation4 + $0xf8] sm:$0xff]
    %v1835 = vld [vmem:[#allocation4 + $0x100] sm:$0xff]
    %v1836 = vld [vmem:[#allocation4 + $0x108] sm:$0xff]
    %v1837 = vld [vmem:[#allocation4 + $0x110] sm:$0xff]
    %v1838 = vld [vmem:[#allocation4 + $0x118] sm:$0xff]
    %v1839 = vld [vmem:[#allocation4 + $0x120] sm:$0xff]
    %v1840 = vld [vmem:[#allocation4 + $0x128] sm:$0xff]
    %v1841 = vld [vmem:[#allocation4 + $0x130] sm:$0xff]
    %v1842 = vld [vmem:[#allocation4 + $0x138] sm:$0xff]
    %v1843 = vld [vmem:[#allocation4 + $0x140] sm:$0xff]
    %v1844 = vld [vmem:[#allocation4 + $0x148] sm:$0xff]
    %v1845 = vld [vmem:[#allocation4 + $0x150] sm:$0xff]
    %v1846 = vld [vmem:[#allocation4 + $0x158] sm:$0xff]
    %v1847 = vld [vmem:[#allocation4 + $0x160] sm:$0xff]
    %v1848 = vld [vmem:[#allocation4 + $0x168] sm:$0xff]
    %v1849 = vld [vmem:[#allocation4 + $0x170] sm:$0xff]
    %v1850 = vld [vmem:[#allocation4 + $0x178] sm:$0xff]
    %v1851 = vld [vmem:[#allocation4 + $0x180] sm:$0xff]
    %v1852 = vld [vmem:[#allocation4 + $0x188] sm:$0xff]
    %v1853 = vld [vmem:[#allocation4 + $0x190] sm:$0xff]
    %v1854 = vld [vmem:[#allocation4 + $0x198] sm:$0xff]
    %v1855 = vld [vmem:[#allocation4 + $0x1a0] sm:$0xff]
    %v1856 = vld [vmem:[#allocation4 + $0x1a8] sm:$0xff]
    %v1857 = vld [vmem:[#allocation4 + $0x1b0] sm:$0xff]
    %v1858 = vld [vmem:[#allocation4 + $0x1b8] sm:$0xff]
    %v1859 = vld [vmem:[#allocation4 + $0x1c0] sm:$0xff]
    %v1860 = vld [vmem:[#allocation4 + $0x1c8] sm:$0xff]
    %v1861 = vld [vmem:[#allocation4 + $0x1d0] sm:$0xff]
    %v1862 = vld [vmem:[#allocation4 + $0x1d8] sm:$0xff]
    %v1863 = vld [vmem:[#allocation4 + $0x1e0] sm:$0xff]
    %v1864 = vld [vmem:[#allocation4 + $0x1e8] sm:$0xff]
    %v1865 = vld [vmem:[#allocation4 + $0x1f0] sm:$0xff]
    %v1866 = vld [vmem:[#allocation4 + $0x1f8] sm:$0xff]
    %v1867 = vld [vmem:[#allocation4 + $0x200] sm:$0xff]
    %v1868 = vld [vmem:[#allocation4 + $0x208] sm:$0xff]
    %v1869 = vld [vmem:[#allocation4 + $0x210] sm:$0xff]
    %v1870 = vld [vmem:[#allocation4 + $0x218] sm:$0xff]
    %v1871 = vld [vmem:[#allocation4 + $0x220] sm:$0xff]
    %v1872 = vld [vmem:[#allocation4 + $0x228] sm:$0xff]
    %v1873 = vld [vmem:[#allocation4 + $0x230] sm:$0xff]
    %v1874 = vld [vmem:[#allocation4 + $0x238] sm:$0xff]
    %v1875 = vld [vmem:[#allocation4 + $0x240] sm:$0xff]
    %v1876 = vld [vmem:[#allocation4 + $0x248] sm:$0xff]
    %v1877 = vld [vmem:[#allocation4 + $0x250] sm:$0xff]
    %v1878 = vld [vmem:[#allocation4 + $0x258] sm:$0xff]
    %v1879 = vld [vmem:[#allocation4 + $0x260] sm:$0xff]
    %v1880 = vld [vmem:[#allocation4 + $0x268] sm:$0xff]
    %v1881 = vld [vmem:[#allocation4 + $0x270] sm:$0xff]
    %v1882 = vld [vmem:[#allocation4 + $0x278] sm:$0xff]
    %v1883 = vld [vmem:[#allocation4 + $0x280] sm:$0xff]
    %v1884 = vld [vmem:[#allocation4 + $0x288] sm:$0xff]
    %v1885 = vld [vmem:[#allocation4 + $0x290] sm:$0xff]
    %v1886 = vld [vmem:[#allocation4 + $0x298] sm:$0xff]
    %v1887 = vld [vmem:[#allocation4 + $0x2a0] sm:$0xff]
    %v1888 = vld [vmem:[#allocation4 + $0x2a8] sm:$0xff]
    %v1889 = vld [vmem:[#allocation4 + $0x2b0] sm:$0xff]
    %v1890 = vld [vmem:[#allocation4 + $0x2b8] sm:$0xff]
    %v1891 = vld [vmem:[#allocation4 + $0x2c0] sm:$0xff]
    %v1892 = vld [vmem:[#allocation4 + $0x2c8] sm:$0xff]
    %v1893 = vld [vmem:[#allocation4 + $0x2d0] sm:$0xff]
    %v1894 = vld [vmem:[#allocation4 + $0x2d8] sm:$0xff]
    %v1895 = vld [vmem:[#allocation4 + $0x2e0] sm:$0xff]
    %v1896 = vld [vmem:[#allocation4 + $0x2e8] sm:$0xff]
    %v1897 = vld [vmem:[#allocation4 + $0x2f0] sm:$0xff]
    %v1898 = vld [vmem:[#allocation4 + $0x2f8] sm:$0xff]
    %v1899 = vld [vmem:[#allocation4 + $0x300] sm:$0xff]
    %v1900 = vld [vmem:[#allocation4 + $0x308] sm:$0xff]
    %v1901 = vld [vmem:[#allocation4 + $0x310] sm:$0xff]
    %v1902 = vld [vmem:[#allocation4 + $0x318] sm:$0xff]
    %v1903 = vld [vmem:[#allocation4 + $0x320] sm:$0xff]
    %v1904 = vld [vmem:[#allocation4 + $0x328] sm:$0xff]
    %v1905 = vld [vmem:[#allocation4 + $0x330] sm:$0xff]
    %v1906 = vld [vmem:[#allocation4 + $0x338] sm:$0xff]
    %v1907 = vld [vmem:[#allocation4 + $0x340] sm:$0xff]
    %v1908 = vld [vmem:[#allocation4 + $0x348] sm:$0xff]
    %v1909 = vld [vmem:[#allocation4 + $0x350] sm:$0xff]
    %v1910 = vld [vmem:[#allocation4 + $0x358] sm:$0xff]
    %v1911 = vld [vmem:[#allocation4 + $0x360] sm:$0xff]
    %v1912 = vld [vmem:[#allocation4 + $0x368] sm:$0xff]
    %v1913 = vld [vmem:[#allocation4 + $0x370] sm:$0xff]
    %v1914 = vld [vmem:[#allocation4 + $0x378] sm:$0xff]
    %v1915 = vld [vmem:[#allocation4 + $0x380] sm:$0xff]
    %v1916 = vld [vmem:[#allocation4 + $0x388] sm:$0xff]
    %v1917 = vld [vmem:[#allocation4 + $0x390] sm:$0xff]
    %v1918 = vld [vmem:[#allocation4 + $0x398] sm:$0xff]
    %v1919 = vld [vmem:[#allocation4 + $0x3a0] sm:$0xff]
    %v1920 = vld [vmem:[#allocation4 + $0x3a8] sm:$0xff]
    %v1921 = vld [vmem:[#allocation4 + $0x3b0] sm:$0xff]
    %v1922 = vld [vmem:[#allocation4 + $0x3b8] sm:$0xff]
    %v1923 = vld [vmem:[#allocation4 + $0x3c0] sm:$0xff]
    %v1924 = vld [vmem:[#allocation4 + $0x3c8] sm:$0xff]
    %v1925 = vld [vmem:[#allocation4 + $0x3d0] sm:$0xff]
    %v1926 = vld [vmem:[#allocation4 + $0x3d8] sm:$0xff]
    %v1927 = vld [vmem:[#allocation4 + $0x3e0] sm:$0xff]
    %v1928 = vld [vmem:[#allocation4 + $0x3e8] sm:$0xff]
    %v1929 = vld [vmem:[#allocation4 + $0x3f0] sm:$0xff]
    %v1930 = vld [vmem:[#allocation4 + $0x3f8] sm:$0xff]
    %v1931 = vlaneseq
    %v1932 = vshrl.u32 %v1931, 7
    %v1933 = vsub.s32 1, %v1932
    %v1934 = vrot.slane %v67, %v1933
    %v1935 = vlaneseq
    %v1936 = vshrl.u32 %v1935, 7
    %v1937 = vsub.s32 1, %v1936
    %v1938 = vrot.slane %v68, %v1937
    %v1939 = vlaneseq
    %v1940 = vshrl.u32 %v1939, 7
    %v1941 = vsub.s32 1, %v1940
    %v1942 = vrot.slane %v69, %v1941
    %v1943 = vlaneseq
    %v1944 = vshrl.u32 %v1943, 7
    %v1945 = vsub.s32 1, %v1944
    %v1946 = vrot.slane %v70, %v1945
    %v2075 = vunpack.c.l.b16 %v1803
    %v2076 = vunpack.c.h.b16 %v1803
    %v2077 = vunpack.c.l.b16 %v1804
    %v2078 = vunpack.c.h.b16 %v1804
    %v2079 = vunpack.c.l.b16 %v1805
    %v2080 = vunpack.c.h.b16 %v1805
    %v2081 = vunpack.c.l.b16 %v1806
    %v2082 = vunpack.c.h.b16 %v1806
    %v2083 = vunpack.c.l.b16 %v1807
    %v2084 = vunpack.c.h.b16 %v1807
    %v2085 = vunpack.c.l.b16 %v1808
    %v2086 = vunpack.c.h.b16 %v1808
    %v2087 = vunpack.c.l.b16 %v1809
    %v2088 = vunpack.c.h.b16 %v1809
    %v2089 = vunpack.c.l.b16 %v1810
    %v2090 = vunpack.c.h.b16 %v1810
    %v2091 = vunpack.c.l.b16 %v1811
    %v2092 = vunpack.c.h.b16 %v1811
    %v2093 = vunpack.c.l.b16 %v1812
    %v2094 = vunpack.c.h.b16 %v1812
    %v2095 = vunpack.c.l.b16 %v1813
    %v2096 = vunpack.c.h.b16 %v1813
    %v2097 = vunpack.c.l.b16 %v1814
    %v2098 = vunpack.c.h.b16 %v1814
    %v2099 = vunpack.c.l.b16 %v1815
    %v2100 = vunpack.c.h.b16 %v1815
    %v2101 = vunpack.c.l.b16 %v1816
    %v2102 = vunpack.c.h.b16 %v1816
    %v2103 = vunpack.c.l.b16 %v1817
    %v2104 = vunpack.c.h.b16 %v1817
    %v2105 = vunpack.c.l.b16 %v1818
    %v2106 = vunpack.c.h.b16 %v1818
    %v2107 = vunpack.c.l.b16 %v1819
    %v2108 = vunpack.c.h.b16 %v1819
    %v2109 = vunpack.c.l.b16 %v1820
    %v2110 = vunpack.c.h.b16 %v1820
    %v2111 = vunpack.c.l.b16 %v1821
    %v2112 = vunpack.c.h.b16 %v1821
    %v2113 = vunpack.c.l.b16 %v1822
    %v2114 = vunpack.c.h.b16 %v1822
    %v2115 = vunpack.c.l.b16 %v1823
    %v2116 = vunpack.c.h.b16 %v1823
    %v2117 = vunpack.c.l.b16 %v1824
    %v2118 = vunpack.c.h.b16 %v1824
    %v2119 = vunpack.c.l.b16 %v1825
    %v2120 = vunpack.c.h.b16 %v1825
    %v2121 = vunpack.c.l.b16 %v1826
    %v2122 = vunpack.c.h.b16 %v1826
    %v2123 = vunpack.c.l.b16 %v1827
    %v2124 = vunpack.c.h.b16 %v1827
    %v2125 = vunpack.c.l.b16 %v1828
    %v2126 = vunpack.c.h.b16 %v1828
    %v2127 = vunpack.c.l.b16 %v1829
    %v2128 = vunpack.c.h.b16 %v1829
    %v2129 = vunpack.c.l.b16 %v1830
    %v2130 = vunpack.c.h.b16 %v1830
    %v2131 = vunpack.c.l.b16 %v1831
    %v2132 = vunpack.c.h.b16 %v1831
    %v2133 = vunpack.c.l.b16 %v1832
    %v2134 = vunpack.c.h.b16 %v1832
    %v2135 = vunpack.c.l.b16 %v1833
    %v2136 = vunpack.c.h.b16 %v1833
    %v2137 = vunpack.c.l.b16 %v1834
    %v2138 = vunpack.c.h.b16 %v1834
    %v2139 = vunpack.c.l.b16 %v1835
    %v2140 = vunpack.c.h.b16 %v1835
    %v2141 = vunpack.c.l.b16 %v1836
    %v2142 = vunpack.c.h.b16 %v1836
    %v2143 = vunpack.c.l.b16 %v1837
    %v2144 = vunpack.c.h.b16 %v1837
    %v2145 = vunpack.c.l.b16 %v1838
    %v2146 = vunpack.c.h.b16 %v1838
    %v2147 = vunpack.c.l.b16 %v1839
    %v2148 = vunpack.c.h.b16 %v1839
    %v2149 = vunpack.c.l.b16 %v1840
    %v2150 = vunpack.c.h.b16 %v1840
    %v2151 = vunpack.c.l.b16 %v1841
    %v2152 = vunpack.c.h.b16 %v1841
    %v2153 = vunpack.c.l.b16 %v1842
    %v2154 = vunpack.c.h.b16 %v1842
    %v2155 = vunpack.c.l.b16 %v1843
    %v2156 = vunpack.c.h.b16 %v1843
    %v2157 = vunpack.c.l.b16 %v1844
    %v2158 = vunpack.c.h.b16 %v1844
    %v2159 = vunpack.c.l.b16 %v1845
    %v2160 = vunpack.c.h.b16 %v1845
    %v2161 = vunpack.c.l.b16 %v1846
    %v2162 = vunpack.c.h.b16 %v1846
    %v2163 = vunpack.c.l.b16 %v1847
    %v2164 = vunpack.c.h.b16 %v1847
    %v2165 = vunpack.c.l.b16 %v1848
    %v2166 = vunpack.c.h.b16 %v1848
    %v2167 = vunpack.c.l.b16 %v1849
    %v2168 = vunpack.c.h.b16 %v1849
    %v2169 = vunpack.c.l.b16 %v1850
    %v2170 = vunpack.c.h.b16 %v1850
    %v2171 = vunpack.c.l.b16 %v1851
    %v2172 = vunpack.c.h.b16 %v1851
    %v2173 = vunpack.c.l.b16 %v1852
    %v2174 = vunpack.c.h.b16 %v1852
    %v2175 = vunpack.c.l.b16 %v1853
    %v2176 = vunpack.c.h.b16 %v1853
    %v2177 = vunpack.c.l.b16 %v1854
    %v2178 = vunpack.c.h.b16 %v1854
    %v2179 = vunpack.c.l.b16 %v1855
    %v2180 = vunpack.c.h.b16 %v1855
    %v2181 = vunpack.c.l.b16 %v1856
    %v2182 = vunpack.c.h.b16 %v1856
    %v2183 = vunpack.c.l.b16 %v1857
    %v2184 = vunpack.c.h.b16 %v1857
    %v2185 = vunpack.c.l.b16 %v1858
    %v2186 = vunpack.c.h.b16 %v1858
    %v2187 = vunpack.c.l.b16 %v1859
    %v2188 = vunpack.c.h.b16 %v1859
    %v2189 = vunpack.c.l.b16 %v1860
    %v2190 = vunpack.c.h.b16 %v1860
    %v2191 = vunpack.c.l.b16 %v1861
    %v2192 = vunpack.c.h.b16 %v1861
    %v2193 = vunpack.c.l.b16 %v1862
    %v2194 = vunpack.c.h.b16 %v1862
    %v2195 = vunpack.c.l.b16 %v1863
    %v2196 = vunpack.c.h.b16 %v1863
    %v2197 = vunpack.c.l.b16 %v1864
    %v2198 = vunpack.c.h.b16 %v1864
    %v2199 = vunpack.c.l.b16 %v1865
    %v2200 = vunpack.c.h.b16 %v1865
    %v2201 = vunpack.c.l.b16 %v1866
    %v2202 = vunpack.c.h.b16 %v1866
    %v2203 = vunpack.c.l.b16 %v1867
    %v2204 = vunpack.c.h.b16 %v1867
    %v2205 = vunpack.c.l.b16 %v1868
    %v2206 = vunpack.c.h.b16 %v1868
    %v2207 = vunpack.c.l.b16 %v1869
    %v2208 = vunpack.c.h.b16 %v1869
    %v2209 = vunpack.c.l.b16 %v1870
    %v2210 = vunpack.c.h.b16 %v1870
    %v2211 = vunpack.c.l.b16 %v1871
    %v2212 = vunpack.c.h.b16 %v1871
    %v2213 = vunpack.c.l.b16 %v1872
    %v2214 = vunpack.c.h.b16 %v1872
    %v2215 = vunpack.c.l.b16 %v1873
    %v2216 = vunpack.c.h.b16 %v1873
    %v2217 = vunpack.c.l.b16 %v1874
    %v2218 = vunpack.c.h.b16 %v1874
    %v2219 = vunpack.c.l.b16 %v1875
    %v2220 = vunpack.c.h.b16 %v1875
    %v2221 = vunpack.c.l.b16 %v1876
    %v2222 = vunpack.c.h.b16 %v1876
    %v2223 = vunpack.c.l.b16 %v1877
    %v2224 = vunpack.c.h.b16 %v1877
    %v2225 = vunpack.c.l.b16 %v1878
    %v2226 = vunpack.c.h.b16 %v1878
    %v2227 = vunpack.c.l.b16 %v1879
    %v2228 = vunpack.c.h.b16 %v1879
    %v2229 = vunpack.c.l.b16 %v1880
    %v2230 = vunpack.c.h.b16 %v1880
    %v2231 = vunpack.c.l.b16 %v1881
    %v2232 = vunpack.c.h.b16 %v1881
    %v2233 = vunpack.c.l.b16 %v1882
    %v2234 = vunpack.c.h.b16 %v1882
    %v2235 = vunpack.c.l.b16 %v1883
    %v2236 = vunpack.c.h.b16 %v1883
    %v2237 = vunpack.c.l.b16 %v1884
    %v2238 = vunpack.c.h.b16 %v1884
    %v2239 = vunpack.c.l.b16 %v1885
    %v2240 = vunpack.c.h.b16 %v1885
    %v2241 = vunpack.c.l.b16 %v1886
    %v2242 = vunpack.c.h.b16 %v1886
    %v2243 = vunpack.c.l.b16 %v1887
    %v2244 = vunpack.c.h.b16 %v1887
    %v2245 = vunpack.c.l.b16 %v1888
    %v2246 = vunpack.c.h.b16 %v1888
    %v2247 = vunpack.c.l.b16 %v1889
    %v2248 = vunpack.c.h.b16 %v1889
    %v2249 = vunpack.c.l.b16 %v1890
    %v2250 = vunpack.c.h.b16 %v1890
    %v2251 = vunpack.c.l.b16 %v1891
    %v2252 = vunpack.c.h.b16 %v1891
    %v2253 = vunpack.c.l.b16 %v1892
    %v2254 = vunpack.c.h.b16 %v1892
    %v2255 = vunpack.c.l.b16 %v1893
    %v2256 = vunpack.c.h.b16 %v1893
    %v2257 = vunpack.c.l.b16 %v1894
    %v2258 = vunpack.c.h.b16 %v1894
    %v2259 = vunpack.c.l.b16 %v1895
    %v2260 = vunpack.c.h.b16 %v1895
    %v2261 = vunpack.c.l.b16 %v1896
    %v2262 = vunpack.c.h.b16 %v1896
    %v2263 = vunpack.c.l.b16 %v1897
    %v2264 = vunpack.c.h.b16 %v1897
    %v2265 = vunpack.c.l.b16 %v1898
    %v2266 = vunpack.c.h.b16 %v1898
    %v2267 = vunpack.c.l.b16 %v1899
    %v2268 = vunpack.c.h.b16 %v1899
    %v2269 = vunpack.c.l.b16 %v1900
    %v2270 = vunpack.c.h.b16 %v1900
    %v2271 = vunpack.c.l.b16 %v1901
    %v2272 = vunpack.c.h.b16 %v1901
    %v2273 = vunpack.c.l.b16 %v1902
    %v2274 = vunpack.c.h.b16 %v1902
    %v2275 = vunpack.c.l.b16 %v1903
    %v2276 = vunpack.c.h.b16 %v1903
    %v2277 = vunpack.c.l.b16 %v1904
    %v2278 = vunpack.c.h.b16 %v1904
    %v2279 = vunpack.c.l.b16 %v1905
    %v2280 = vunpack.c.h.b16 %v1905
    %v2281 = vunpack.c.l.b16 %v1906
    %v2282 = vunpack.c.h.b16 %v1906
    %v2283 = vunpack.c.l.b16 %v1907
    %v2284 = vunpack.c.h.b16 %v1907
    %v2285 = vunpack.c.l.b16 %v1908
    %v2286 = vunpack.c.h.b16 %v1908
    %v2287 = vunpack.c.l.b16 %v1909
    %v2288 = vunpack.c.h.b16 %v1909
    %v2289 = vunpack.c.l.b16 %v1910
    %v2290 = vunpack.c.h.b16 %v1910
    %v2291 = vunpack.c.l.b16 %v1911
    %v2292 = vunpack.c.h.b16 %v1911
    %v2293 = vunpack.c.l.b16 %v1912
    %v2294 = vunpack.c.h.b16 %v1912
    %v2295 = vunpack.c.l.b16 %v1913
    %v2296 = vunpack.c.h.b16 %v1913
    %v2297 = vunpack.c.l.b16 %v1914
    %v2298 = vunpack.c.h.b16 %v1914
    %v2299 = vunpack.c.l.b16 %v1915
    %v2300 = vunpack.c.h.b16 %v1915
    %v2301 = vunpack.c.l.b16 %v1916
    %v2302 = vunpack.c.h.b16 %v1916
    %v2303 = vunpack.c.l.b16 %v1917
    %v2304 = vunpack.c.h.b16 %v1917
    %v2305 = vunpack.c.l.b16 %v1918
    %v2306 = vunpack.c.h.b16 %v1918
    %v2307 = vunpack.c.l.b16 %v1919
    %v2308 = vunpack.c.h.b16 %v1919
    %v2309 = vunpack.c.l.b16 %v1920
    %v2310 = vunpack.c.h.b16 %v1920
    %v2311 = vunpack.c.l.b16 %v1921
    %v2312 = vunpack.c.h.b16 %v1921
    %v2313 = vunpack.c.l.b16 %v1922
    %v2314 = vunpack.c.h.b16 %v1922
    %v2315 = vunpack.c.l.b16 %v1923
    %v2316 = vunpack.c.h.b16 %v1923
    %v2317 = vunpack.c.l.b16 %v1924
    %v2318 = vunpack.c.h.b16 %v1924
    %v2319 = vunpack.c.l.b16 %v1925
    %v2320 = vunpack.c.h.b16 %v1925
    %v2321 = vunpack.c.l.b16 %v1926
    %v2322 = vunpack.c.h.b16 %v1926
    %v2323 = vunpack.c.l.b16 %v1927
    %v2324 = vunpack.c.h.b16 %v1927
    %v2325 = vunpack.c.l.b16 %v1928
    %v2326 = vunpack.c.h.b16 %v1928
    %v2327 = vunpack.c.l.b16 %v1929
    %v2328 = vunpack.c.h.b16 %v1929
    %v2329 = vunpack.c.l.b16 %v1930
    %v2330 = vunpack.c.h.b16 %v1930
    %v2331 = vpack.c.b16 %v2079, %v2075
    %v2332 = vpack.c.b16 %v2080, %v2076
    %v2333 = vpack.c.b16 %v2081, %v2077
    %v2334 = vpack.c.b16 %v2082, %v2078
    %v2335 = vpack.c.b16 %v2087, %v2083
    %v2336 = vpack.c.b16 %v2088, %v2084
    %v2337 = vpack.c.b16 %v2089, %v2085
    %v2338 = vpack.c.b16 %v2090, %v2086
    %v2339 = vpack.c.b16 %v2095, %v2091
    %v2340 = vpack.c.b16 %v2096, %v2092
    %v2341 = vpack.c.b16 %v2097, %v2093
    %v2342 = vpack.c.b16 %v2098, %v2094
    %v2343 = vpack.c.b16 %v2103, %v2099
    %v2344 = vpack.c.b16 %v2104, %v2100
    %v2345 = vpack.c.b16 %v2105, %v2101
    %v2346 = vpack.c.b16 %v2106, %v2102
    %v2347 = vpack.c.b16 %v2111, %v2107
    %v2348 = vpack.c.b16 %v2112, %v2108
    %v2349 = vpack.c.b16 %v2113, %v2109
    %v2350 = vpack.c.b16 %v2114, %v2110
    %v2351 = vpack.c.b16 %v2119, %v2115
    %v2352 = vpack.c.b16 %v2120, %v2116
    %v2353 = vpack.c.b16 %v2121, %v2117
    %v2354 = vpack.c.b16 %v2122, %v2118
    %v2355 = vpack.c.b16 %v2127, %v2123
    %v2356 = vpack.c.b16 %v2128, %v2124
    %v2357 = vpack.c.b16 %v2129, %v2125
    %v2358 = vpack.c.b16 %v2130, %v2126
    %v2359 = vpack.c.b16 %v2135, %v2131
    %v2360 = vpack.c.b16 %v2136, %v2132
    %v2361 = vpack.c.b16 %v2137, %v2133
    %v2362 = vpack.c.b16 %v2138, %v2134
    %v2363 = vpack.c.b16 %v2143, %v2139
    %v2364 = vpack.c.b16 %v2144, %v2140
    %v2365 = vpack.c.b16 %v2145, %v2141
    %v2366 = vpack.c.b16 %v2146, %v2142
    %v2367 = vpack.c.b16 %v2151, %v2147
    %v2368 = vpack.c.b16 %v2152, %v2148
    %v2369 = vpack.c.b16 %v2153, %v2149
    %v2370 = vpack.c.b16 %v2154, %v2150
    %v2371 = vpack.c.b16 %v2159, %v2155
    %v2372 = vpack.c.b16 %v2160, %v2156
    %v2373 = vpack.c.b16 %v2161, %v2157
    %v2374 = vpack.c.b16 %v2162, %v2158
    %v2375 = vpack.c.b16 %v2167, %v2163
    %v2376 = vpack.c.b16 %v2168, %v2164
    %v2377 = vpack.c.b16 %v2169, %v2165
    %v2378 = vpack.c.b16 %v2170, %v2166
    %v2379 = vpack.c.b16 %v2175, %v2171
    %v2380 = vpack.c.b16 %v2176, %v2172
    %v2381 = vpack.c.b16 %v2177, %v2173
    %v2382 = vpack.c.b16 %v2178, %v2174
    %v2383 = vpack.c.b16 %v2183, %v2179
    %v2384 = vpack.c.b16 %v2184, %v2180
    %v2385 = vpack.c.b16 %v2185, %v2181
    %v2386 = vpack.c.b16 %v2186, %v2182
    %v2387 = vpack.c.b16 %v2191, %v2187
    %v2388 = vpack.c.b16 %v2192, %v2188
    %v2389 = vpack.c.b16 %v2193, %v2189
    %v2390 = vpack.c.b16 %v2194, %v2190
    %v2391 = vpack.c.b16 %v2199, %v2195
    %v2392 = vpack.c.b16 %v2200, %v2196
    %v2393 = vpack.c.b16 %v2201, %v2197
    %v2394 = vpack.c.b16 %v2202, %v2198
    %v2395 = vpack.c.b16 %v2207, %v2203
    %v2396 = vpack.c.b16 %v2208, %v2204
    %v2397 = vpack.c.b16 %v2209, %v2205
    %v2398 = vpack.c.b16 %v2210, %v2206
    %v2399 = vpack.c.b16 %v2215, %v2211
    %v2400 = vpack.c.b16 %v2216, %v2212
    %v2401 = vpack.c.b16 %v2217, %v2213
    %v2402 = vpack.c.b16 %v2218, %v2214
    %v2403 = vpack.c.b16 %v2223, %v2219
    %v2404 = vpack.c.b16 %v2224, %v2220
    %v2405 = vpack.c.b16 %v2225, %v2221
    %v2406 = vpack.c.b16 %v2226, %v2222
    %v2407 = vpack.c.b16 %v2231, %v2227
    %v2408 = vpack.c.b16 %v2232, %v2228
    %v2409 = vpack.c.b16 %v2233, %v2229
    %v2410 = vpack.c.b16 %v2234, %v2230
    %v2411 = vpack.c.b16 %v2239, %v2235
    %v2412 = vpack.c.b16 %v2240, %v2236
    %v2413 = vpack.c.b16 %v2241, %v2237
    %v2414 = vpack.c.b16 %v2242, %v2238
    %v2415 = vpack.c.b16 %v2247, %v2243
    %v2416 = vpack.c.b16 %v2248, %v2244
    %v2417 = vpack.c.b16 %v2249, %v2245
    %v2418 = vpack.c.b16 %v2250, %v2246
    %v2419 = vpack.c.b16 %v2255, %v2251
    %v2420 = vpack.c.b16 %v2256, %v2252
    %v2421 = vpack.c.b16 %v2257, %v2253
    %v2422 = vpack.c.b16 %v2258, %v2254
    %v2423 = vpack.c.b16 %v2263, %v2259
    %v2424 = vpack.c.b16 %v2264, %v2260
    %v2425 = vpack.c.b16 %v2265, %v2261
    %v2426 = vpack.c.b16 %v2266, %v2262
    %v2427 = vpack.c.b16 %v2271, %v2267
    %v2428 = vpack.c.b16 %v2272, %v2268
    %v2429 = vpack.c.b16 %v2273, %v2269
    %v2430 = vpack.c.b16 %v2274, %v2270
    %v2431 = vpack.c.b16 %v2279, %v2275
    %v2432 = vpack.c.b16 %v2280, %v2276
    %v2433 = vpack.c.b16 %v2281, %v2277
    %v2434 = vpack.c.b16 %v2282, %v2278
    %v2435 = vpack.c.b16 %v2287, %v2283
    %v2436 = vpack.c.b16 %v2288, %v2284
    %v2437 = vpack.c.b16 %v2289, %v2285
    %v2438 = vpack.c.b16 %v2290, %v2286
    %v2439 = vpack.c.b16 %v2295, %v2291
    %v2440 = vpack.c.b16 %v2296, %v2292
    %v2441 = vpack.c.b16 %v2297, %v2293
    %v2442 = vpack.c.b16 %v2298, %v2294
    %v2443 = vpack.c.b16 %v2303, %v2299
    %v2444 = vpack.c.b16 %v2304, %v2300
    %v2445 = vpack.c.b16 %v2305, %v2301
    %v2446 = vpack.c.b16 %v2306, %v2302
    %v2447 = vpack.c.b16 %v2311, %v2307
    %v2448 = vpack.c.b16 %v2312, %v2308
    %v2449 = vpack.c.b16 %v2313, %v2309
    %v2450 = vpack.c.b16 %v2314, %v2310
    %v2451 = vpack.c.b16 %v2319, %v2315
    %v2452 = vpack.c.b16 %v2320, %v2316
    %v2453 = vpack.c.b16 %v2321, %v2317
    %v2454 = vpack.c.b16 %v2322, %v2318
    %v2455 = vpack.c.b16 %v2327, %v2323
    %v2456 = vpack.c.b16 %v2328, %v2324
    %v2457 = vpack.c.b16 %v2329, %v2325
    %v2458 = vpack.c.b16 %v2330, %v2326
    %2587 = vmatprep.subr.bf16.mxu0 %v2332
    %2588 = vmatpush1.bf16.msra.mxu0 %v2331
    %2589 = vmatprep.subr.bf16.mxu0 %v2336
    %2590 = vmatpush1.bf16.msra.mxu0 %v2335
    %2591 = vmatprep.subr.bf16.mxu0 %v2340
    %2592 = vmatpush1.bf16.msra.mxu0 %v2339
    %2593 = vmatprep.subr.bf16.mxu0 %v2344
    %2594 = vmatpush1.bf16.msra.mxu0 %v2343
    %2595 = vmatprep.subr.bf16.mxu0 %v2348
    %2596 = vmatpush1.bf16.msra.mxu0 %v2347
    %2597 = vmatprep.subr.bf16.mxu0 %v2352
    %2598 = vmatpush1.bf16.msra.mxu0 %v2351
    %2599 = vmatprep.subr.bf16.mxu0 %v2356
    %2600 = vmatpush1.bf16.msra.mxu0 %v2355
    %2601 = vmatprep.subr.bf16.mxu0 %v2360
    %2602 = vmatpush1.bf16.msra.mxu0 %v2359
    %2603 = vmatprep.subr.bf16.mxu0 %v2364
    %2604 = vmatpush1.bf16.msra.mxu0 %v2363
    %2605 = vmatprep.subr.bf16.mxu0 %v2368
    %2606 = vmatpush1.bf16.msra.mxu0 %v2367
    %2607 = vmatprep.subr.bf16.mxu0 %v2372
    %2608 = vmatpush1.bf16.msra.mxu0 %v2371
    %2609 = vmatprep.subr.bf16.mxu0 %v2376
    %2610 = vmatpush1.bf16.msra.mxu0 %v2375
    %2611 = vmatprep.subr.bf16.mxu0 %v2380
    %2612 = vmatpush1.bf16.msra.mxu0 %v2379
    %2613 = vmatprep.subr.bf16.mxu0 %v2384
    %2614 = vmatpush1.bf16.msra.mxu0 %v2383
    %2615 = vmatprep.subr.bf16.mxu0 %v2388
    %2616 = vmatpush1.bf16.msra.mxu0 %v2387
    %2617 = vmatprep.subr.bf16.mxu0 %v2392
    %2618 = vmatpush1.bf16.msra.mxu0 %v2391
    %2619 = vmatprep.mubr.bf16.mxu0 %v1800
    %2620 = vmatmul.mubr.bf16.gmra.mrb[0].mxu0 %v1799
    %v2621 = vpop.f32.mrb[0].mxu0
    %v2622 = vadd.f32 %v1934, %v2621
    %v2623 = vpop.f32.mrb[0].mxu0
    %v2624 = vadd.f32 %v1938, %v2623
    %v2625 = vpop.f32.mrb[0].mxu0
    %v2626 = vpop.f32.mrb[0].mxu0
    %2627 = vdwg.mxu0
    %2628 = vmatprep.subr.bf16.mxu0 %v2396
    %2629 = vmatpush1.bf16.msra.mxu0 %v2395
    %2630 = vmatprep.subr.bf16.mxu0 %v2400
    %2631 = vmatpush1.bf16.msra.mxu0 %v2399
    %2632 = vmatprep.subr.bf16.mxu0 %v2404
    %2633 = vmatpush1.bf16.msra.mxu0 %v2403
    %2634 = vmatprep.subr.bf16.mxu0 %v2408
    %2635 = vmatpush1.bf16.msra.mxu0 %v2407
    %2636 = vmatprep.subr.bf16.mxu0 %v2412
    %2637 = vmatpush1.bf16.msra.mxu0 %v2411
    %2638 = vmatprep.subr.bf16.mxu0 %v2416
    %2639 = vmatpush1.bf16.msra.mxu0 %v2415
    %2640 = vmatprep.subr.bf16.mxu0 %v2420
    %2641 = vmatpush1.bf16.msra.mxu0 %v2419
    %2642 = vmatprep.subr.bf16.mxu0 %v2424
    %2643 = vmatpush1.bf16.msra.mxu0 %v2423
    %2644 = vmatprep.subr.bf16.mxu0 %v2428
    %2645 = vmatpush1.bf16.msra.mxu0 %v2427
    %2646 = vmatprep.subr.bf16.mxu0 %v2432
    %2647 = vmatpush1.bf16.msra.mxu0 %v2431
    %2648 = vmatprep.subr.bf16.mxu0 %v2436
    %2649 = vmatpush1.bf16.msra.mxu0 %v2435
    %2650 = vmatprep.subr.bf16.mxu0 %v2440
    %2651 = vmatpush1.bf16.msra.mxu0 %v2439
    %2652 = vmatprep.subr.bf16.mxu0 %v2444
    %2653 = vmatpush1.bf16.msra.mxu0 %v2443
    %2654 = vmatprep.subr.bf16.mxu0 %v2448
    %2655 = vmatpush1.bf16.msra.mxu0 %v2447
    %2656 = vmatprep.subr.bf16.mxu0 %v2452
    %2657 = vmatpush1.bf16.msra.mxu0 %v2451
    %2658 = vmatprep.subr.bf16.mxu0 %v2456
    %2659 = vmatpush1.bf16.msra.mxu0 %v2455
    %2660 = vmatprep.mubr.bf16.mxu0 %v1802
    %2661 = vmatmul.mubr.bf16.gmra.mrb[0].mxu0 %v1801
    %v2662 = vpop.f32.mrb[0].mxu0
    %v2663 = vadd.f32 %v2622, %v2662
    %v2664 = vpop.f32.mrb[0].mxu0
    %v2665 = vadd.f32 %v2624, %v2664
    %v2666 = vpop.f32.mrb[0].mxu0
    %v2667 = vpop.f32.mrb[0].mxu0
    %2668 = vdwg.mxu0
    %2669 = vmatprep.subr.bf16.mxu0 %v2334
    %2670 = vmatpush1.bf16.msra.mxu0 %v2333
    %2671 = vmatprep.subr.bf16.mxu0 %v2338
    %2672 = vmatpush1.bf16.msra.mxu0 %v2337
    %2673 = vmatprep.subr.bf16.mxu0 %v2342
    %2674 = vmatpush1.bf16.msra.mxu0 %v2341
    %2675 = vmatprep.subr.bf16.mxu0 %v2346
    %2676 = vmatpush1.bf16.msra.mxu0 %v2345
    %2677 = vmatprep.subr.bf16.mxu0 %v2350
    %2678 = vmatpush1.bf16.msra.mxu0 %v2349
    %2679 = vmatprep.subr.bf16.mxu0 %v2354
    %2680 = vmatpush1.bf16.msra.mxu0 %v2353
    %2681 = vmatprep.subr.bf16.mxu0 %v2358
    %2682 = vmatpush1.bf16.msra.mxu0 %v2357
    %2683 = vmatprep.subr.bf16.mxu0 %v2362
    %2684 = vmatpush1.bf16.msra.mxu0 %v2361
    %2685 = vmatprep.subr.bf16.mxu0 %v2366
    %2686 = vmatpush1.bf16.msra.mxu0 %v2365
    %2687 = vmatprep.subr.bf16.mxu0 %v2370
    %2688 = vmatpush1.bf16.msra.mxu0 %v2369
    %2689 = vmatprep.subr.bf16.mxu0 %v2374
    %2690 = vmatpush1.bf16.msra.mxu0 %v2373
    %2691 = vmatprep.subr.bf16.mxu0 %v2378
    %2692 = vmatpush1.bf16.msra.mxu0 %v2377
    %2693 = vmatprep.subr.bf16.mxu0 %v2382
    %2694 = vmatpush1.bf16.msra.mxu0 %v2381
    %2695 = vmatprep.subr.bf16.mxu0 %v2386
    %2696 = vmatpush1.bf16.msra.mxu0 %v2385
    %2697 = vmatprep.subr.bf16.mxu0 %v2390
    %2698 = vmatpush1.bf16.msra.mxu0 %v2389
    %2699 = vmatprep.subr.bf16.mxu0 %v2394
    %2700 = vmatpush1.bf16.msra.mxu0 %v2393
    %2701 = vmatprep.mubr.bf16.mxu0 %v1800
    %2702 = vmatmul.mubr.bf16.gmra.mrb[0].mxu0 %v1799
    %v2703 = vpop.f32.mrb[0].mxu0
    %v2704 = vadd.f32 %v1942, %v2703
    %v2705 = vpop.f32.mrb[0].mxu0
    %v2706 = vadd.f32 %v1946, %v2705
    %v2707 = vpop.f32.mrb[0].mxu0
    %v2708 = vpop.f32.mrb[0].mxu0
    %2709 = vdwg.mxu0
    %2710 = vmatprep.subr.bf16.mxu0 %v2398
    %2711 = vmatpush1.bf16.msra.mxu0 %v2397
    %2712 = vmatprep.subr.bf16.mxu0 %v2402
    %2713 = vmatpush1.bf16.msra.mxu0 %v2401
    %2714 = vmatprep.subr.bf16.mxu0 %v2406
    %2715 = vmatpush1.bf16.msra.mxu0 %v2405
    %2716 = vmatprep.subr.bf16.mxu0 %v2410
    %2717 = vmatpush1.bf16.msra.mxu0 %v2409
    %2718 = vmatprep.subr.bf16.mxu0 %v2414
    %2719 = vmatpush1.bf16.msra.mxu0 %v2413
    %2720 = vmatprep.subr.bf16.mxu0 %v2418
    %2721 = vmatpush1.bf16.msra.mxu0 %v2417
    %2722 = vmatprep.subr.bf16.mxu0 %v2422
    %2723 = vmatpush1.bf16.msra.mxu0 %v2421
    %2724 = vmatprep.subr.bf16.mxu0 %v2426
    %2725 = vmatpush1.bf16.msra.mxu0 %v2425
    %2726 = vmatprep.subr.bf16.mxu0 %v2430
    %2727 = vmatpush1.bf16.msra.mxu0 %v2429
    %2728 = vmatprep.subr.bf16.mxu0 %v2434
    %2729 = vmatpush1.bf16.msra.mxu0 %v2433
    %2730 = vmatprep.subr.bf16.mxu0 %v2438
    %2731 = vmatpush1.bf16.msra.mxu0 %v2437
    %2732 = vmatprep.subr.bf16.mxu0 %v2442
    %2733 = vmatpush1.bf16.msra.mxu0 %v2441
    %2734 = vmatprep.subr.bf16.mxu0 %v2446
    %2735 = vmatpush1.bf16.msra.mxu0 %v2445
    %2736 = vmatprep.subr.bf16.mxu0 %v2450
    %2737 = vmatpush1.bf16.msra.mxu0 %v2449
    %2738 = vmatprep.subr.bf16.mxu0 %v2454
    %2739 = vmatpush1.bf16.msra.mxu0 %v2453
    %2740 = vmatprep.subr.bf16.mxu0 %v2458
    %2741 = vmatpush1.bf16.msra.mxu0 %v2457
    %2742 = vmatprep.mubr.bf16.mxu0 %v1802
    %2743 = vmatmul.mubr.bf16.gmra.mrb[0].mxu0 %v1801
    %v2744 = vpop.f32.mrb[0].mxu0
    %v2745 = vadd.f32 %v2704, %v2744
    %v2746 = vpop.f32.mrb[0].mxu0
    %v2747 = vadd.f32 %v2706, %v2746
    %v2748 = vpop.f32.mrb[0].mxu0
    %v2749 = vpop.f32.mrb[0].mxu0
    %2750 = vdwg.mxu0
    %vm2751 = vcmp.gt.f32.partialorder %v2663, 0.0
    %vm2752 = vcmp.gt.f32.partialorder %v2665, 0.0
    %vm2753 = vcmp.gt.f32.partialorder %v2745, 0.0
    %vm2754 = vcmp.gt.f32.partialorder %v2747, 0.0
    %v2755 = vmul.f32 %v2663, 0.2
    %v2756 = vmul.f32 %v2665, 0.2
    %v2757 = vmul.f32 %v2745, 0.2
    %v2758 = vmul.f32 %v2747, 0.2
    %v2759 = vsel %vm2751, %v2663, %v2755
    %v2760 = vsel %vm2752, %v2665, %v2756
    %v2761 = vsel %vm2753, %v2745, %v2757
    %v2762 = vsel %vm2754, %v2747, %v2758
    %v2763 = vpack.c.bf16 %v2759, %v2759
    %v2764 = vpack.c.bf16 %v2760, %v2760
    %v2765 = vpack.c.bf16 %v2761, %v2761
    %v2766 = vpack.c.bf16 %v2762, %v2762
    %v2767 = vld [vmem:[#allocation6] sm:$0xff]
    %v2768 = vld [vmem:[#allocation6 + $0x8] sm:$0xff]
    %v2769 = vld [vmem:[#allocation6 + $0x10] sm:$0xff]
    %v2770 = vld [vmem:[#allocation6 + $0x18] sm:$0xff]
    %v2771 = vld [vmem:[#allocation6 + $0x20] sm:$0xff]
    %v2772 = vld [vmem:[#allocation6 + $0x28] sm:$0xff]
    %v2773 = vld [vmem:[#allocation6 + $0x30] sm:$0xff]
    %v2774 = vld [vmem:[#allocation6 + $0x38] sm:$0xff]
    %v2775 = vld [vmem:[#allocation6 + $0x40] sm:$0xff]
    %v2776 = vld [vmem:[#allocation6 + $0x48] sm:$0xff]
    %v2777 = vld [vmem:[#allocation6 + $0x50] sm:$0xff]
    %v2778 = vld [vmem:[#allocation6 + $0x58] sm:$0xff]
    %v2779 = vld [vmem:[#allocation6 + $0x60] sm:$0xff]
    %v2780 = vld [vmem:[#allocation6 + $0x68] sm:$0xff]
    %v2781 = vld [vmem:[#allocation6 + $0x70] sm:$0xff]
    %v2782 = vld [vmem:[#allocation6 + $0x78] sm:$0xff]
    %v2783 = vld [vmem:[#allocation6 + $0x80] sm:$0xff]
    %v2784 = vld [vmem:[#allocation6 + $0x88] sm:$0xff]
    %v2785 = vld [vmem:[#allocation6 + $0x90] sm:$0xff]
    %v2786 = vld [vmem:[#allocation6 + $0x98] sm:$0xff]
    %v2787 = vld [vmem:[#allocation6 + $0xa0] sm:$0xff]
    %v2788 = vld [vmem:[#allocation6 + $0xa8] sm:$0xff]
    %v2789 = vld [vmem:[#allocation6 + $0xb0] sm:$0xff]
    %v2790 = vld [vmem:[#allocation6 + $0xb8] sm:$0xff]
    %v2791 = vld [vmem:[#allocation6 + $0xc0] sm:$0xff]
    %v2792 = vld [vmem:[#allocation6 + $0xc8] sm:$0xff]
    %v2793 = vld [vmem:[#allocation6 + $0xd0] sm:$0xff]
    %v2794 = vld [vmem:[#allocation6 + $0xd8] sm:$0xff]
    %v2795 = vld [vmem:[#allocation6 + $0xe0] sm:$0xff]
    %v2796 = vld [vmem:[#allocation6 + $0xe8] sm:$0xff]
    %v2797 = vld [vmem:[#allocation6 + $0xf0] sm:$0xff]
    %v2798 = vld [vmem:[#allocation6 + $0xf8] sm:$0xff]
    %v2799 = vld [vmem:[#allocation6 + $0x100] sm:$0xff]
    %v2800 = vld [vmem:[#allocation6 + $0x108] sm:$0xff]
    %v2801 = vld [vmem:[#allocation6 + $0x110] sm:$0xff]
    %v2802 = vld [vmem:[#allocation6 + $0x118] sm:$0xff]
    %v2803 = vld [vmem:[#allocation6 + $0x120] sm:$0xff]
    %v2804 = vld [vmem:[#allocation6 + $0x128] sm:$0xff]
    %v2805 = vld [vmem:[#allocation6 + $0x130] sm:$0xff]
    %v2806 = vld [vmem:[#allocation6 + $0x138] sm:$0xff]
    %v2807 = vld [vmem:[#allocation6 + $0x140] sm:$0xff]
    %v2808 = vld [vmem:[#allocation6 + $0x148] sm:$0xff]
    %v2809 = vld [vmem:[#allocation6 + $0x150] sm:$0xff]
    %v2810 = vld [vmem:[#allocation6 + $0x158] sm:$0xff]
    %v2811 = vld [vmem:[#allocation6 + $0x160] sm:$0xff]
    %v2812 = vld [vmem:[#allocation6 + $0x168] sm:$0xff]
    %v2813 = vld [vmem:[#allocation6 + $0x170] sm:$0xff]
    %v2814 = vld [vmem:[#allocation6 + $0x178] sm:$0xff]
    %v2815 = vld [vmem:[#allocation6 + $0x180] sm:$0xff]
    %v2816 = vld [vmem:[#allocation6 + $0x188] sm:$0xff]
    %v2817 = vld [vmem:[#allocation6 + $0x190] sm:$0xff]
    %v2818 = vld [vmem:[#allocation6 + $0x198] sm:$0xff]
    %v2819 = vld [vmem:[#allocation6 + $0x1a0] sm:$0xff]
    %v2820 = vld [vmem:[#allocation6 + $0x1a8] sm:$0xff]
    %v2821 = vld [vmem:[#allocation6 + $0x1b0] sm:$0xff]
    %v2822 = vld [vmem:[#allocation6 + $0x1b8] sm:$0xff]
    %v2823 = vld [vmem:[#allocation6 + $0x1c0] sm:$0xff]
    %v2824 = vld [vmem:[#allocation6 + $0x1c8] sm:$0xff]
    %v2825 = vld [vmem:[#allocation6 + $0x1d0] sm:$0xff]
    %v2826 = vld [vmem:[#allocation6 + $0x1d8] sm:$0xff]
    %v2827 = vld [vmem:[#allocation6 + $0x1e0] sm:$0xff]
    %v2828 = vld [vmem:[#allocation6 + $0x1e8] sm:$0xff]
    %v2829 = vld [vmem:[#allocation6 + $0x1f0] sm:$0xff]
    %v2830 = vld [vmem:[#allocation6 + $0x1f8] sm:$0xff]
    %v2831 = vld [vmem:[#allocation6 + $0x200] sm:$0xff]
    %v2832 = vld [vmem:[#allocation6 + $0x208] sm:$0xff]
    %v2833 = vld [vmem:[#allocation6 + $0x210] sm:$0xff]
    %v2834 = vld [vmem:[#allocation6 + $0x218] sm:$0xff]
    %v2835 = vld [vmem:[#allocation6 + $0x220] sm:$0xff]
    %v2836 = vld [vmem:[#allocation6 + $0x228] sm:$0xff]
    %v2837 = vld [vmem:[#allocation6 + $0x230] sm:$0xff]
    %v2838 = vld [vmem:[#allocation6 + $0x238] sm:$0xff]
    %v2839 = vld [vmem:[#allocation6 + $0x240] sm:$0xff]
    %v2840 = vld [vmem:[#allocation6 + $0x248] sm:$0xff]
    %v2841 = vld [vmem:[#allocation6 + $0x250] sm:$0xff]
    %v2842 = vld [vmem:[#allocation6 + $0x258] sm:$0xff]
    %v2843 = vld [vmem:[#allocation6 + $0x260] sm:$0xff]
    %v2844 = vld [vmem:[#allocation6 + $0x268] sm:$0xff]
    %v2845 = vld [vmem:[#allocation6 + $0x270] sm:$0xff]
    %v2846 = vld [vmem:[#allocation6 + $0x278] sm:$0xff]
    %v2847 = vld [vmem:[#allocation6 + $0x280] sm:$0xff]
    %v2848 = vld [vmem:[#allocation6 + $0x288] sm:$0xff]
    %v2849 = vld [vmem:[#allocation6 + $0x290] sm:$0xff]
    %v2850 = vld [vmem:[#allocation6 + $0x298] sm:$0xff]
    %v2851 = vld [vmem:[#allocation6 + $0x2a0] sm:$0xff]
    %v2852 = vld [vmem:[#allocation6 + $0x2a8] sm:$0xff]
    %v2853 = vld [vmem:[#allocation6 + $0x2b0] sm:$0xff]
    %v2854 = vld [vmem:[#allocation6 + $0x2b8] sm:$0xff]
    %v2855 = vld [vmem:[#allocation6 + $0x2c0] sm:$0xff]
    %v2856 = vld [vmem:[#allocation6 + $0x2c8] sm:$0xff]
    %v2857 = vld [vmem:[#allocation6 + $0x2d0] sm:$0xff]
    %v2858 = vld [vmem:[#allocation6 + $0x2d8] sm:$0xff]
    %v2859 = vld [vmem:[#allocation6 + $0x2e0] sm:$0xff]
    %v2860 = vld [vmem:[#allocation6 + $0x2e8] sm:$0xff]
    %v2861 = vld [vmem:[#allocation6 + $0x2f0] sm:$0xff]
    %v2862 = vld [vmem:[#allocation6 + $0x2f8] sm:$0xff]
    %v2863 = vld [vmem:[#allocation6 + $0x300] sm:$0xff]
    %v2864 = vld [vmem:[#allocation6 + $0x308] sm:$0xff]
    %v2865 = vld [vmem:[#allocation6 + $0x310] sm:$0xff]
    %v2866 = vld [vmem:[#allocation6 + $0x318] sm:$0xff]
    %v2867 = vld [vmem:[#allocation6 + $0x320] sm:$0xff]
    %v2868 = vld [vmem:[#allocation6 + $0x328] sm:$0xff]
    %v2869 = vld [vmem:[#allocation6 + $0x330] sm:$0xff]
    %v2870 = vld [vmem:[#allocation6 + $0x338] sm:$0xff]
    %v2871 = vld [vmem:[#allocation6 + $0x340] sm:$0xff]
    %v2872 = vld [vmem:[#allocation6 + $0x348] sm:$0xff]
    %v2873 = vld [vmem:[#allocation6 + $0x350] sm:$0xff]
    %v2874 = vld [vmem:[#allocation6 + $0x358] sm:$0xff]
    %v2875 = vld [vmem:[#allocation6 + $0x360] sm:$0xff]
    %v2876 = vld [vmem:[#allocation6 + $0x368] sm:$0xff]
    %v2877 = vld [vmem:[#allocation6 + $0x370] sm:$0xff]
    %v2878 = vld [vmem:[#allocation6 + $0x378] sm:$0xff]
    %v2879 = vld [vmem:[#allocation6 + $0x380] sm:$0xff]
    %v2880 = vld [vmem:[#allocation6 + $0x388] sm:$0xff]
    %v2881 = vld [vmem:[#allocation6 + $0x390] sm:$0xff]
    %v2882 = vld [vmem:[#allocation6 + $0x398] sm:$0xff]
    %v2883 = vld [vmem:[#allocation6 + $0x3a0] sm:$0xff]
    %v2884 = vld [vmem:[#allocation6 + $0x3a8] sm:$0xff]
    %v2885 = vld [vmem:[#allocation6 + $0x3b0] sm:$0xff]
    %v2886 = vld [vmem:[#allocation6 + $0x3b8] sm:$0xff]
    %v2887 = vld [vmem:[#allocation6 + $0x3c0] sm:$0xff]
    %v2888 = vld [vmem:[#allocation6 + $0x3c8] sm:$0xff]
    %v2889 = vld [vmem:[#allocation6 + $0x3d0] sm:$0xff]
    %v2890 = vld [vmem:[#allocation6 + $0x3d8] sm:$0xff]
    %v2891 = vld [vmem:[#allocation6 + $0x3e0] sm:$0xff]
    %v2892 = vld [vmem:[#allocation6 + $0x3e8] sm:$0xff]
    %v2893 = vld [vmem:[#allocation6 + $0x3f0] sm:$0xff]
    %v2894 = vld [vmem:[#allocation6 + $0x3f8] sm:$0xff]
    %v2895 = vlaneseq
    %v2896 = vshrl.u32 %v2895, 7
    %v2897 = vsub.s32 2, %v2896
    %v2898 = vrot.slane %v67, %v2897
    %v2899 = vlaneseq
    %v2900 = vshrl.u32 %v2899, 7
    %v2901 = vsub.s32 2, %v2900
    %v2902 = vrot.slane %v68, %v2901
    %v2903 = vlaneseq
    %v2904 = vshrl.u32 %v2903, 7
    %v2905 = vsub.s32 2, %v2904
    %v2906 = vrot.slane %v69, %v2905
    %v2907 = vlaneseq
    %v2908 = vshrl.u32 %v2907, 7
    %v2909 = vsub.s32 2, %v2908
    %v2910 = vrot.slane %v70, %v2909
    %v3039 = vunpack.c.l.b16 %v2767
    %v3040 = vunpack.c.h.b16 %v2767
    %v3041 = vunpack.c.l.b16 %v2768
    %v3042 = vunpack.c.h.b16 %v2768
    %v3043 = vunpack.c.l.b16 %v2769
    %v3044 = vunpack.c.h.b16 %v2769
    %v3045 = vunpack.c.l.b16 %v2770
    %v3046 = vunpack.c.h.b16 %v2770
    %v3047 = vunpack.c.l.b16 %v2771
    %v3048 = vunpack.c.h.b16 %v2771
    %v3049 = vunpack.c.l.b16 %v2772
    %v3050 = vunpack.c.h.b16 %v2772
    %v3051 = vunpack.c.l.b16 %v2773
    %v3052 = vunpack.c.h.b16 %v2773
    %v3053 = vunpack.c.l.b16 %v2774
    %v3054 = vunpack.c.h.b16 %v2774
    %v3055 = vunpack.c.l.b16 %v2775
    %v3056 = vunpack.c.h.b16 %v2775
    %v3057 = vunpack.c.l.b16 %v2776
    %v3058 = vunpack.c.h.b16 %v2776
    %v3059 = vunpack.c.l.b16 %v2777
    %v3060 = vunpack.c.h.b16 %v2777
    %v3061 = vunpack.c.l.b16 %v2778
    %v3062 = vunpack.c.h.b16 %v2778
    %v3063 = vunpack.c.l.b16 %v2779
    %v3064 = vunpack.c.h.b16 %v2779
    %v3065 = vunpack.c.l.b16 %v2780
    %v3066 = vunpack.c.h.b16 %v2780
    %v3067 = vunpack.c.l.b16 %v2781
    %v3068 = vunpack.c.h.b16 %v2781
    %v3069 = vunpack.c.l.b16 %v2782
    %v3070 = vunpack.c.h.b16 %v2782
    %v3071 = vunpack.c.l.b16 %v2783
    %v3072 = vunpack.c.h.b16 %v2783
    %v3073 = vunpack.c.l.b16 %v2784
    %v3074 = vunpack.c.h.b16 %v2784
    %v3075 = vunpack.c.l.b16 %v2785
    %v3076 = vunpack.c.h.b16 %v2785
    %v3077 = vunpack.c.l.b16 %v2786
    %v3078 = vunpack.c.h.b16 %v2786
    %v3079 = vunpack.c.l.b16 %v2787
    %v3080 = vunpack.c.h.b16 %v2787
    %v3081 = vunpack.c.l.b16 %v2788
    %v3082 = vunpack.c.h.b16 %v2788
    %v3083 = vunpack.c.l.b16 %v2789
    %v3084 = vunpack.c.h.b16 %v2789
    %v3085 = vunpack.c.l.b16 %v2790
    %v3086 = vunpack.c.h.b16 %v2790
    %v3087 = vunpack.c.l.b16 %v2791
    %v3088 = vunpack.c.h.b16 %v2791
    %v3089 = vunpack.c.l.b16 %v2792
    %v3090 = vunpack.c.h.b16 %v2792
    %v3091 = vunpack.c.l.b16 %v2793
    %v3092 = vunpack.c.h.b16 %v2793
    %v3093 = vunpack.c.l.b16 %v2794
    %v3094 = vunpack.c.h.b16 %v2794
    %v3095 = vunpack.c.l.b16 %v2795
    %v3096 = vunpack.c.h.b16 %v2795
    %v3097 = vunpack.c.l.b16 %v2796
    %v3098 = vunpack.c.h.b16 %v2796
    %v3099 = vunpack.c.l.b16 %v2797
    %v3100 = vunpack.c.h.b16 %v2797
    %v3101 = vunpack.c.l.b16 %v2798
    %v3102 = vunpack.c.h.b16 %v2798
    %v3103 = vunpack.c.l.b16 %v2799
    %v3104 = vunpack.c.h.b16 %v2799
    %v3105 = vunpack.c.l.b16 %v2800
    %v3106 = vunpack.c.h.b16 %v2800
    %v3107 = vunpack.c.l.b16 %v2801
    %v3108 = vunpack.c.h.b16 %v2801
    %v3109 = vunpack.c.l.b16 %v2802
    %v3110 = vunpack.c.h.b16 %v2802
    %v3111 = vunpack.c.l.b16 %v2803
    %v3112 = vunpack.c.h.b16 %v2803
    %v3113 = vunpack.c.l.b16 %v2804
    %v3114 = vunpack.c.h.b16 %v2804
    %v3115 = vunpack.c.l.b16 %v2805
    %v3116 = vunpack.c.h.b16 %v2805
    %v3117 = vunpack.c.l.b16 %v2806
    %v3118 = vunpack.c.h.b16 %v2806
    %v3119 = vunpack.c.l.b16 %v2807
    %v3120 = vunpack.c.h.b16 %v2807
    %v3121 = vunpack.c.l.b16 %v2808
    %v3122 = vunpack.c.h.b16 %v2808
    %v3123 = vunpack.c.l.b16 %v2809
    %v3124 = vunpack.c.h.b16 %v2809
    %v3125 = vunpack.c.l.b16 %v2810
    %v3126 = vunpack.c.h.b16 %v2810
    %v3127 = vunpack.c.l.b16 %v2811
    %v3128 = vunpack.c.h.b16 %v2811
    %v3129 = vunpack.c.l.b16 %v2812
    %v3130 = vunpack.c.h.b16 %v2812
    %v3131 = vunpack.c.l.b16 %v2813
    %v3132 = vunpack.c.h.b16 %v2813
    %v3133 = vunpack.c.l.b16 %v2814
    %v3134 = vunpack.c.h.b16 %v2814
    %v3135 = vunpack.c.l.b16 %v2815
    %v3136 = vunpack.c.h.b16 %v2815
    %v3137 = vunpack.c.l.b16 %v2816
    %v3138 = vunpack.c.h.b16 %v2816
    %v3139 = vunpack.c.l.b16 %v2817
    %v3140 = vunpack.c.h.b16 %v2817
    %v3141 = vunpack.c.l.b16 %v2818
    %v3142 = vunpack.c.h.b16 %v2818
    %v3143 = vunpack.c.l.b16 %v2819
    %v3144 = vunpack.c.h.b16 %v2819
    %v3145 = vunpack.c.l.b16 %v2820
    %v3146 = vunpack.c.h.b16 %v2820
    %v3147 = vunpack.c.l.b16 %v2821
    %v3148 = vunpack.c.h.b16 %v2821
    %v3149 = vunpack.c.l.b16 %v2822
    %v3150 = vunpack.c.h.b16 %v2822
    %v3151 = vunpack.c.l.b16 %v2823
    %v3152 = vunpack.c.h.b16 %v2823
    %v3153 = vunpack.c.l.b16 %v2824
    %v3154 = vunpack.c.h.b16 %v2824
    %v3155 = vunpack.c.l.b16 %v2825
    %v3156 = vunpack.c.h.b16 %v2825
    %v3157 = vunpack.c.l.b16 %v2826
    %v3158 = vunpack.c.h.b16 %v2826
    %v3159 = vunpack.c.l.b16 %v2827
    %v3160 = vunpack.c.h.b16 %v2827
    %v3161 = vunpack.c.l.b16 %v2828
    %v3162 = vunpack.c.h.b16 %v2828
    %v3163 = vunpack.c.l.b16 %v2829
    %v3164 = vunpack.c.h.b16 %v2829
    %v3165 = vunpack.c.l.b16 %v2830
    %v3166 = vunpack.c.h.b16 %v2830
    %v3167 = vunpack.c.l.b16 %v2831
    %v3168 = vunpack.c.h.b16 %v2831
    %v3169 = vunpack.c.l.b16 %v2832
    %v3170 = vunpack.c.h.b16 %v2832
    %v3171 = vunpack.c.l.b16 %v2833
    %v3172 = vunpack.c.h.b16 %v2833
    %v3173 = vunpack.c.l.b16 %v2834
    %v3174 = vunpack.c.h.b16 %v2834
    %v3175 = vunpack.c.l.b16 %v2835
    %v3176 = vunpack.c.h.b16 %v2835
    %v3177 = vunpack.c.l.b16 %v2836
    %v3178 = vunpack.c.h.b16 %v2836
    %v3179 = vunpack.c.l.b16 %v2837
    %v3180 = vunpack.c.h.b16 %v2837
    %v3181 = vunpack.c.l.b16 %v2838
    %v3182 = vunpack.c.h.b16 %v2838
    %v3183 = vunpack.c.l.b16 %v2839
    %v3184 = vunpack.c.h.b16 %v2839
    %v3185 = vunpack.c.l.b16 %v2840
    %v3186 = vunpack.c.h.b16 %v2840
    %v3187 = vunpack.c.l.b16 %v2841
    %v3188 = vunpack.c.h.b16 %v2841
    %v3189 = vunpack.c.l.b16 %v2842
    %v3190 = vunpack.c.h.b16 %v2842
    %v3191 = vunpack.c.l.b16 %v2843
    %v3192 = vunpack.c.h.b16 %v2843
    %v3193 = vunpack.c.l.b16 %v2844
    %v3194 = vunpack.c.h.b16 %v2844
    %v3195 = vunpack.c.l.b16 %v2845
    %v3196 = vunpack.c.h.b16 %v2845
    %v3197 = vunpack.c.l.b16 %v2846
    %v3198 = vunpack.c.h.b16 %v2846
    %v3199 = vunpack.c.l.b16 %v2847
    %v3200 = vunpack.c.h.b16 %v2847
    %v3201 = vunpack.c.l.b16 %v2848
    %v3202 = vunpack.c.h.b16 %v2848
    %v3203 = vunpack.c.l.b16 %v2849
    %v3204 = vunpack.c.h.b16 %v2849
    %v3205 = vunpack.c.l.b16 %v2850
    %v3206 = vunpack.c.h.b16 %v2850
    %v3207 = vunpack.c.l.b16 %v2851
    %v3208 = vunpack.c.h.b16 %v2851
    %v3209 = vunpack.c.l.b16 %v2852
    %v3210 = vunpack.c.h.b16 %v2852
    %v3211 = vunpack.c.l.b16 %v2853
    %v3212 = vunpack.c.h.b16 %v2853
    %v3213 = vunpack.c.l.b16 %v2854
    %v3214 = vunpack.c.h.b16 %v2854
    %v3215 = vunpack.c.l.b16 %v2855
    %v3216 = vunpack.c.h.b16 %v2855
    %v3217 = vunpack.c.l.b16 %v2856
    %v3218 = vunpack.c.h.b16 %v2856
    %v3219 = vunpack.c.l.b16 %v2857
    %v3220 = vunpack.c.h.b16 %v2857
    %v3221 = vunpack.c.l.b16 %v2858
    %v3222 = vunpack.c.h.b16 %v2858
    %v3223 = vunpack.c.l.b16 %v2859
    %v3224 = vunpack.c.h.b16 %v2859
    %v3225 = vunpack.c.l.b16 %v2860
    %v3226 = vunpack.c.h.b16 %v2860
    %v3227 = vunpack.c.l.b16 %v2861
    %v3228 = vunpack.c.h.b16 %v2861
    %v3229 = vunpack.c.l.b16 %v2862
    %v3230 = vunpack.c.h.b16 %v2862
    %v3231 = vunpack.c.l.b16 %v2863
    %v3232 = vunpack.c.h.b16 %v2863
    %v3233 = vunpack.c.l.b16 %v2864
    %v3234 = vunpack.c.h.b16 %v2864
    %v3235 = vunpack.c.l.b16 %v2865
    %v3236 = vunpack.c.h.b16 %v2865
    %v3237 = vunpack.c.l.b16 %v2866
    %v3238 = vunpack.c.h.b16 %v2866
    %v3239 = vunpack.c.l.b16 %v2867
    %v3240 = vunpack.c.h.b16 %v2867
    %v3241 = vunpack.c.l.b16 %v2868
    %v3242 = vunpack.c.h.b16 %v2868
    %v3243 = vunpack.c.l.b16 %v2869
    %v3244 = vunpack.c.h.b16 %v2869
    %v3245 = vunpack.c.l.b16 %v2870
    %v3246 = vunpack.c.h.b16 %v2870
    %v3247 = vunpack.c.l.b16 %v2871
    %v3248 = vunpack.c.h.b16 %v2871
    %v3249 = vunpack.c.l.b16 %v2872
    %v3250 = vunpack.c.h.b16 %v2872
    %v3251 = vunpack.c.l.b16 %v2873
    %v3252 = vunpack.c.h.b16 %v2873
    %v3253 = vunpack.c.l.b16 %v2874
    %v3254 = vunpack.c.h.b16 %v2874
    %v3255 = vunpack.c.l.b16 %v2875
    %v3256 = vunpack.c.h.b16 %v2875
    %v3257 = vunpack.c.l.b16 %v2876
    %v3258 = vunpack.c.h.b16 %v2876
    %v3259 = vunpack.c.l.b16 %v2877
    %v3260 = vunpack.c.h.b16 %v2877
    %v3261 = vunpack.c.l.b16 %v2878
    %v3262 = vunpack.c.h.b16 %v2878
    %v3263 = vunpack.c.l.b16 %v2879
    %v3264 = vunpack.c.h.b16 %v2879
    %v3265 = vunpack.c.l.b16 %v2880
    %v3266 = vunpack.c.h.b16 %v2880
    %v3267 = vunpack.c.l.b16 %v2881
    %v3268 = vunpack.c.h.b16 %v2881
    %v3269 = vunpack.c.l.b16 %v2882
    %v3270 = vunpack.c.h.b16 %v2882
    %v3271 = vunpack.c.l.b16 %v2883
    %v3272 = vunpack.c.h.b16 %v2883
    %v3273 = vunpack.c.l.b16 %v2884
    %v3274 = vunpack.c.h.b16 %v2884
    %v3275 = vunpack.c.l.b16 %v2885
    %v3276 = vunpack.c.h.b16 %v2885
    %v3277 = vunpack.c.l.b16 %v2886
    %v3278 = vunpack.c.h.b16 %v2886
    %v3279 = vunpack.c.l.b16 %v2887
    %v3280 = vunpack.c.h.b16 %v2887
    %v3281 = vunpack.c.l.b16 %v2888
    %v3282 = vunpack.c.h.b16 %v2888
    %v3283 = vunpack.c.l.b16 %v2889
    %v3284 = vunpack.c.h.b16 %v2889
    %v3285 = vunpack.c.l.b16 %v2890
    %v3286 = vunpack.c.h.b16 %v2890
    %v3287 = vunpack.c.l.b16 %v2891
    %v3288 = vunpack.c.h.b16 %v2891
    %v3289 = vunpack.c.l.b16 %v2892
    %v3290 = vunpack.c.h.b16 %v2892
    %v3291 = vunpack.c.l.b16 %v2893
    %v3292 = vunpack.c.h.b16 %v2893
    %v3293 = vunpack.c.l.b16 %v2894
    %v3294 = vunpack.c.h.b16 %v2894
    %v3295 = vpack.c.b16 %v3043, %v3039
    %v3296 = vpack.c.b16 %v3044, %v3040
    %v3297 = vpack.c.b16 %v3045, %v3041
    %v3298 = vpack.c.b16 %v3046, %v3042
    %v3299 = vpack.c.b16 %v3051, %v3047
    %v3300 = vpack.c.b16 %v3052, %v3048
    %v3301 = vpack.c.b16 %v3053, %v3049
    %v3302 = vpack.c.b16 %v3054, %v3050
    %v3303 = vpack.c.b16 %v3059, %v3055
    %v3304 = vpack.c.b16 %v3060, %v3056
    %v3305 = vpack.c.b16 %v3061, %v3057
    %v3306 = vpack.c.b16 %v3062, %v3058
    %v3307 = vpack.c.b16 %v3067, %v3063
    %v3308 = vpack.c.b16 %v3068, %v3064
    %v3309 = vpack.c.b16 %v3069, %v3065
    %v3310 = vpack.c.b16 %v3070, %v3066
    %v3311 = vpack.c.b16 %v3075, %v3071
    %v3312 = vpack.c.b16 %v3076, %v3072
    %v3313 = vpack.c.b16 %v3077, %v3073
    %v3314 = vpack.c.b16 %v3078, %v3074
    %v3315 = vpack.c.b16 %v3083, %v3079
    %v3316 = vpack.c.b16 %v3084, %v3080
    %v3317 = vpack.c.b16 %v3085, %v3081
    %v3318 = vpack.c.b16 %v3086, %v3082
    %v3319 = vpack.c.b16 %v3091, %v3087
    %v3320 = vpack.c.b16 %v3092, %v3088
    %v3321 = vpack.c.b16 %v3093, %v3089
    %v3322 = vpack.c.b16 %v3094, %v3090
    %v3323 = vpack.c.b16 %v3099, %v3095
    %v3324 = vpack.c.b16 %v3100, %v3096
    %v3325 = vpack.c.b16 %v3101, %v3097
    %v3326 = vpack.c.b16 %v3102, %v3098
    %v3327 = vpack.c.b16 %v3107, %v3103
    %v3328 = vpack.c.b16 %v3108, %v3104
    %v3329 = vpack.c.b16 %v3109, %v3105
    %v3330 = vpack.c.b16 %v3110, %v3106
    %v3331 = vpack.c.b16 %v3115, %v3111
    %v3332 = vpack.c.b16 %v3116, %v3112
    %v3333 = vpack.c.b16 %v3117, %v3113
    %v3334 = vpack.c.b16 %v3118, %v3114
    %v3335 = vpack.c.b16 %v3123, %v3119
    %v3336 = vpack.c.b16 %v3124, %v3120
    %v3337 = vpack.c.b16 %v3125, %v3121
    %v3338 = vpack.c.b16 %v3126, %v3122
    %v3339 = vpack.c.b16 %v3131, %v3127
    %v3340 = vpack.c.b16 %v3132, %v3128
    %v3341 = vpack.c.b16 %v3133, %v3129
    %v3342 = vpack.c.b16 %v3134, %v3130
    %v3343 = vpack.c.b16 %v3139, %v3135
    %v3344 = vpack.c.b16 %v3140, %v3136
    %v3345 = vpack.c.b16 %v3141, %v3137
    %v3346 = vpack.c.b16 %v3142, %v3138
    %v3347 = vpack.c.b16 %v3147, %v3143
    %v3348 = vpack.c.b16 %v3148, %v3144
    %v3349 = vpack.c.b16 %v3149, %v3145
    %v3350 = vpack.c.b16 %v3150, %v3146
    %v3351 = vpack.c.b16 %v3155, %v3151
    %v3352 = vpack.c.b16 %v3156, %v3152
    %v3353 = vpack.c.b16 %v3157, %v3153
    %v3354 = vpack.c.b16 %v3158, %v3154
    %v3355 = vpack.c.b16 %v3163, %v3159
    %v3356 = vpack.c.b16 %v3164, %v3160
    %v3357 = vpack.c.b16 %v3165, %v3161
    %v3358 = vpack.c.b16 %v3166, %v3162
    %v3359 = vpack.c.b16 %v3171, %v3167
    %v3360 = vpack.c.b16 %v3172, %v3168
    %v3361 = vpack.c.b16 %v3173, %v3169
    %v3362 = vpack.c.b16 %v3174, %v3170
    %v3363 = vpack.c.b16 %v3179, %v3175
    %v3364 = vpack.c.b16 %v3180, %v3176
    %v3365 = vpack.c.b16 %v3181, %v3177
    %v3366 = vpack.c.b16 %v3182, %v3178
    %v3367 = vpack.c.b16 %v3187, %v3183
    %v3368 = vpack.c.b16 %v3188, %v3184
    %v3369 = vpack.c.b16 %v3189, %v3185
    %v3370 = vpack.c.b16 %v3190, %v3186
    %v3371 = vpack.c.b16 %v3195, %v3191
    %v3372 = vpack.c.b16 %v3196, %v3192
    %v3373 = vpack.c.b16 %v3197, %v3193
    %v3374 = vpack.c.b16 %v3198, %v3194
    %v3375 = vpack.c.b16 %v3203, %v3199
    %v3376 = vpack.c.b16 %v3204, %v3200
    %v3377 = vpack.c.b16 %v3205, %v3201
    %v3378 = vpack.c.b16 %v3206, %v3202
    %v3379 = vpack.c.b16 %v3211, %v3207
    %v3380 = vpack.c.b16 %v3212, %v3208
    %v3381 = vpack.c.b16 %v3213, %v3209
    %v3382 = vpack.c.b16 %v3214, %v3210
    %v3383 = vpack.c.b16 %v3219, %v3215
    %v3384 = vpack.c.b16 %v3220, %v3216
    %v3385 = vpack.c.b16 %v3221, %v3217
    %v3386 = vpack.c.b16 %v3222, %v3218
    %v3387 = vpack.c.b16 %v3227, %v3223
    %v3388 = vpack.c.b16 %v3228, %v3224
    %v3389 = vpack.c.b16 %v3229, %v3225
    %v3390 = vpack.c.b16 %v3230, %v3226
    %v3391 = vpack.c.b16 %v3235, %v3231
    %v3392 = vpack.c.b16 %v3236, %v3232
    %v3393 = vpack.c.b16 %v3237, %v3233
    %v3394 = vpack.c.b16 %v3238, %v3234
    %v3395 = vpack.c.b16 %v3243, %v3239
    %v3396 = vpack.c.b16 %v3244, %v3240
    %v3397 = vpack.c.b16 %v3245, %v3241
    %v3398 = vpack.c.b16 %v3246, %v3242
    %v3399 = vpack.c.b16 %v3251, %v3247
    %v3400 = vpack.c.b16 %v3252, %v3248
    %v3401 = vpack.c.b16 %v3253, %v3249
    %v3402 = vpack.c.b16 %v3254, %v3250
    %v3403 = vpack.c.b16 %v3259, %v3255
    %v3404 = vpack.c.b16 %v3260, %v3256
    %v3405 = vpack.c.b16 %v3261, %v3257
    %v3406 = vpack.c.b16 %v3262, %v3258
    %v3407 = vpack.c.b16 %v3267, %v3263
    %v3408 = vpack.c.b16 %v3268, %v3264
    %v3409 = vpack.c.b16 %v3269, %v3265
    %v3410 = vpack.c.b16 %v3270, %v3266
    %v3411 = vpack.c.b16 %v3275, %v3271
    %v3412 = vpack.c.b16 %v3276, %v3272
    %v3413 = vpack.c.b16 %v3277, %v3273
    %v3414 = vpack.c.b16 %v3278, %v3274
    %v3415 = vpack.c.b16 %v3283, %v3279
    %v3416 = vpack.c.b16 %v3284, %v3280
    %v3417 = vpack.c.b16 %v3285, %v3281
    %v3418 = vpack.c.b16 %v3286, %v3282
    %v3419 = vpack.c.b16 %v3291, %v3287
    %v3420 = vpack.c.b16 %v3292, %v3288
    %v3421 = vpack.c.b16 %v3293, %v3289
    %v3422 = vpack.c.b16 %v3294, %v3290
    %3551 = vmatprep.subr.bf16.mxu0 %v3296
    %3552 = vmatpush1.bf16.msra.mxu0 %v3295
    %3553 = vmatprep.subr.bf16.mxu0 %v3300
    %3554 = vmatpush1.bf16.msra.mxu0 %v3299
    %3555 = vmatprep.subr.bf16.mxu0 %v3304
    %3556 = vmatpush1.bf16.msra.mxu0 %v3303
    %3557 = vmatprep.subr.bf16.mxu0 %v3308
    %3558 = vmatpush1.bf16.msra.mxu0 %v3307
    %3559 = vmatprep.subr.bf16.mxu0 %v3312
    %3560 = vmatpush1.bf16.msra.mxu0 %v3311
    %3561 = vmatprep.subr.bf16.mxu0 %v3316
    %3562 = vmatpush1.bf16.msra.mxu0 %v3315
    %3563 = vmatprep.subr.bf16.mxu0 %v3320
    %3564 = vmatpush1.bf16.msra.mxu0 %v3319
    %3565 = vmatprep.subr.bf16.mxu0 %v3324
    %3566 = vmatpush1.bf16.msra.mxu0 %v3323
    %3567 = vmatprep.subr.bf16.mxu0 %v3328
    %3568 = vmatpush1.bf16.msra.mxu0 %v3327
    %3569 = vmatprep.subr.bf16.mxu0 %v3332
    %3570 = vmatpush1.bf16.msra.mxu0 %v3331
    %3571 = vmatprep.subr.bf16.mxu0 %v3336
    %3572 = vmatpush1.bf16.msra.mxu0 %v3335
    %3573 = vmatprep.subr.bf16.mxu0 %v3340
    %3574 = vmatpush1.bf16.msra.mxu0 %v3339
    %3575 = vmatprep.subr.bf16.mxu0 %v3344
    %3576 = vmatpush1.bf16.msra.mxu0 %v3343
    %3577 = vmatprep.subr.bf16.mxu0 %v3348
    %3578 = vmatpush1.bf16.msra.mxu0 %v3347
    %3579 = vmatprep.subr.bf16.mxu0 %v3352
    %3580 = vmatpush1.bf16.msra.mxu0 %v3351
    %3581 = vmatprep.subr.bf16.mxu0 %v3356
    %3582 = vmatpush1.bf16.msra.mxu0 %v3355
    %3583 = vmatprep.mubr.bf16.mxu0 %v2764
    %3584 = vmatmul.mubr.bf16.gmra.mrb[0].mxu0 %v2763
    %v3585 = vpop.f32.mrb[0].mxu0
    %v3586 = vadd.f32 %v2898, %v3585
    %v3587 = vpop.f32.mrb[0].mxu0
    %v3588 = vadd.f32 %v2902, %v3587
    %v3589 = vpop.f32.mrb[0].mxu0
    %v3590 = vpop.f32.mrb[0].mxu0
    %3591 = vdwg.mxu0
    %3592 = vmatprep.subr.bf16.mxu0 %v3360
    %3593 = vmatpush1.bf16.msra.mxu0 %v3359
    %3594 = vmatprep.subr.bf16.mxu0 %v3364
    %3595 = vmatpush1.bf16.msra.mxu0 %v3363
    %3596 = vmatprep.subr.bf16.mxu0 %v3368
    %3597 = vmatpush1.bf16.msra.mxu0 %v3367
    %3598 = vmatprep.subr.bf16.mxu0 %v3372
    %3599 = vmatpush1.bf16.msra.mxu0 %v3371
    %3600 = vmatprep.subr.bf16.mxu0 %v3376
    %3601 = vmatpush1.bf16.msra.mxu0 %v3375
    %3602 = vmatprep.subr.bf16.mxu0 %v3380
    %3603 = vmatpush1.bf16.msra.mxu0 %v3379
    %3604 = vmatprep.subr.bf16.mxu0 %v3384
    %3605 = vmatpush1.bf16.msra.mxu0 %v3383
    %3606 = vmatprep.subr.bf16.mxu0 %v3388
    %3607 = vmatpush1.bf16.msra.mxu0 %v3387
    %3608 = vmatprep.subr.bf16.mxu0 %v3392
    %3609 = vmatpush1.bf16.msra.mxu0 %v3391
    %3610 = vmatprep.subr.bf16.mxu0 %v3396
    %3611 = vmatpush1.bf16.msra.mxu0 %v3395
    %3612 = vmatprep.subr.bf16.mxu0 %v3400
    %3613 = vmatpush1.bf16.msra.mxu0 %v3399
    %3614 = vmatprep.subr.bf16.mxu0 %v3404
    %3615 = vmatpush1.bf16.msra.mxu0 %v3403
    %3616 = vmatprep.subr.bf16.mxu0 %v3408
    %3617 = vmatpush1.bf16.msra.mxu0 %v3407
    %3618 = vmatprep.subr.bf16.mxu0 %v3412
    %3619 = vmatpush1.bf16.msra.mxu0 %v3411
    %3620 = vmatprep.subr.bf16.mxu0 %v3416
    %3621 = vmatpush1.bf16.msra.mxu0 %v3415
    %3622 = vmatprep.subr.bf16.mxu0 %v3420
    %3623 = vmatpush1.bf16.msra.mxu0 %v3419
    %3624 = vmatprep.mubr.bf16.mxu0 %v2766
    %3625 = vmatmul.mubr.bf16.gmra.mrb[0].mxu0 %v2765
    %v3626 = vpop.f32.mrb[0].mxu0
    %v3627 = vadd.f32 %v3586, %v3626
    %v3628 = vpop.f32.mrb[0].mxu0
    %v3629 = vadd.f32 %v3588, %v3628
    %v3630 = vpop.f32.mrb[0].mxu0
    %v3631 = vpop.f32.mrb[0].mxu0
    %3632 = vdwg.mxu0
    %3633 = vmatprep.subr.bf16.mxu0 %v3298
    %3634 = vmatpush1.bf16.msra.mxu0 %v3297
    %3635 = vmatprep.subr.bf16.mxu0 %v3302
    %3636 = vmatpush1.bf16.msra.mxu0 %v3301
    %3637 = vmatprep.subr.bf16.mxu0 %v3306
    %3638 = vmatpush1.bf16.msra.mxu0 %v3305
    %3639 = vmatprep.subr.bf16.mxu0 %v3310
    %3640 = vmatpush1.bf16.msra.mxu0 %v3309
    %3641 = vmatprep.subr.bf16.mxu0 %v3314
    %3642 = vmatpush1.bf16.msra.mxu0 %v3313
    %3643 = vmatprep.subr.bf16.mxu0 %v3318
    %3644 = vmatpush1.bf16.msra.mxu0 %v3317
    %3645 = vmatprep.subr.bf16.mxu0 %v3322
    %3646 = vmatpush1.bf16.msra.mxu0 %v3321
    %3647 = vmatprep.subr.bf16.mxu0 %v3326
    %3648 = vmatpush1.bf16.msra.mxu0 %v3325
    %3649 = vmatprep.subr.bf16.mxu0 %v3330
    %3650 = vmatpush1.bf16.msra.mxu0 %v3329
    %3651 = vmatprep.subr.bf16.mxu0 %v3334
    %3652 = vmatpush1.bf16.msra.mxu0 %v3333
    %3653 = vmatprep.subr.bf16.mxu0 %v3338
    %3654 = vmatpush1.bf16.msra.mxu0 %v3337
    %3655 = vmatprep.subr.bf16.mxu0 %v3342
    %3656 = vmatpush1.bf16.msra.mxu0 %v3341
    %3657 = vmatprep.subr.bf16.mxu0 %v3346
    %3658 = vmatpush1.bf16.msra.mxu0 %v3345
    %3659 = vmatprep.subr.bf16.mxu0 %v3350
    %3660 = vmatpush1.bf16.msra.mxu0 %v3349
    %3661 = vmatprep.subr.bf16.mxu0 %v3354
    %3662 = vmatpush1.bf16.msra.mxu0 %v3353
    %3663 = vmatprep.subr.bf16.mxu0 %v3358
    %3664 = vmatpush1.bf16.msra.mxu0 %v3357
    %3665 = vmatprep.mubr.bf16.mxu0 %v2764
    %3666 = vmatmul.mubr.bf16.gmra.mrb[0].mxu0 %v2763
    %v3667 = vpop.f32.mrb[0].mxu0
    %v3668 = vadd.f32 %v2906, %v3667
    %v3669 = vpop.f32.mrb[0].mxu0
    %v3670 = vadd.f32 %v2910, %v3669
    %v3671 = vpop.f32.mrb[0].mxu0
    %v3672 = vpop.f32.mrb[0].mxu0
    %3673 = vdwg.mxu0
    %3674 = vmatprep.subr.bf16.mxu0 %v3362
    %3675 = vmatpush1.bf16.msra.mxu0 %v3361
    %3676 = vmatprep.subr.bf16.mxu0 %v3366
    %3677 = vmatpush1.bf16.msra.mxu0 %v3365
    %3678 = vmatprep.subr.bf16.mxu0 %v3370
    %3679 = vmatpush1.bf16.msra.mxu0 %v3369
    %3680 = vmatprep.subr.bf16.mxu0 %v3374
    %3681 = vmatpush1.bf16.msra.mxu0 %v3373
    %3682 = vmatprep.subr.bf16.mxu0 %v3378
    %3683 = vmatpush1.bf16.msra.mxu0 %v3377
    %3684 = vmatprep.subr.bf16.mxu0 %v3382
    %3685 = vmatpush1.bf16.msra.mxu0 %v3381
    %3686 = vmatprep.subr.bf16.mxu0 %v3386
    %3687 = vmatpush1.bf16.msra.mxu0 %v3385
    %3688 = vmatprep.subr.bf16.mxu0 %v3390
    %3689 = vmatpush1.bf16.msra.mxu0 %v3389
    %3690 = vmatprep.subr.bf16.mxu0 %v3394
    %3691 = vmatpush1.bf16.msra.mxu0 %v3393
    %3692 = vmatprep.subr.bf16.mxu0 %v3398
    %3693 = vmatpush1.bf16.msra.mxu0 %v3397
    %3694 = vmatprep.subr.bf16.mxu0 %v3402
    %3695 = vmatpush1.bf16.msra.mxu0 %v3401
    %3696 = vmatprep.subr.bf16.mxu0 %v3406
    %3697 = vmatpush1.bf16.msra.mxu0 %v3405
    %3698 = vmatprep.subr.bf16.mxu0 %v3410
    %3699 = vmatpush1.bf16.msra.mxu0 %v3409
    %3700 = vmatprep.subr.bf16.mxu0 %v3414
    %3701 = vmatpush1.bf16.msra.mxu0 %v3413
    %3702 = vmatprep.subr.bf16.mxu0 %v3418
    %3703 = vmatpush1.bf16.msra.mxu0 %v3417
    %3704 = vmatprep.subr.bf16.mxu0 %v3422
    %3705 = vmatpush1.bf16.msra.mxu0 %v3421
    %3706 = vmatprep.mubr.bf16.mxu0 %v2766
    %3707 = vmatmul.mubr.bf16.gmra.mrb[0].mxu0 %v2765
    %v3708 = vpop.f32.mrb[0].mxu0
    %v3709 = vadd.f32 %v3668, %v3708
    %v3710 = vpop.f32.mrb[0].mxu0
    %v3711 = vadd.f32 %v3670, %v3710
    %v3712 = vpop.f32.mrb[0].mxu0
    %v3713 = vpop.f32.mrb[0].mxu0
    %3714 = vdwg.mxu0
    %vm3715 = vcmp.gt.f32.partialorder %v3627, 0.0
    %vm3716 = vcmp.gt.f32.partialorder %v3629, 0.0
    %vm3717 = vcmp.gt.f32.partialorder %v3709, 0.0
    %vm3718 = vcmp.gt.f32.partialorder %v3711, 0.0
    %v3719 = vmul.f32 %v3627, 0.2
    %v3720 = vmul.f32 %v3629, 0.2
    %v3721 = vmul.f32 %v3709, 0.2
    %v3722 = vmul.f32 %v3711, 0.2
    %v3723 = vsel %vm3715, %v3627, %v3719
    %v3724 = vsel %vm3716, %v3629, %v3720
    %v3725 = vsel %vm3717, %v3709, %v3721
    %v3726 = vsel %vm3718, %v3711, %v3722
    %v3727 = vlaneseq
    %v3728 = vshrl.u32 %v3727, 7
    %v3729 = vsub.s32 3, %v3728
    %v3730 = vrot.slane %v67, %v3729
    %v3731 = vlaneseq
    %v3732 = vshrl.u32 %v3731, 7
    %v3733 = vsub.s32 3, %v3732
    %v3734 = vrot.slane %v68, %v3733
    %v3735 = vlaneseq
    %v3736 = vshrl.u32 %v3735, 7
    %v3737 = vsub.s32 3, %v3736
    %v3738 = vrot.slane %v69, %v3737
    %v3739 = vlaneseq
    %v3740 = vshrl.u32 %v3739, 7
    %v3741 = vsub.s32 3, %v3740
    %v3742 = vrot.slane %v70, %v3741
    %v3743 = vmul.f32 %v3723, %v3730
    %v3744 = vmul.f32 %v3724, %v3734
    %v3745 = vmul.f32 %v3725, %v3738
    %v3746 = vmul.f32 %v3726, %v3742
    %v3747 = vadd.f32 %v3743, %v3744
    %v3748 = vadd.f32 %v3747, %v3745
    %v3749 = vadd.f32 %v3748, %v3746
    %3750 = vadd.xlane.f32.xlu0 %v3749
    %v3751 = vpop.xlane.xlu0 %3750
    %v3752 = vlaneseq
    %v3753 = vshrl.u32 %v3752, 7
    %v3754 = vsub.s32 4, %v3753
    %v3755 = vrot.slane %v67, %v3754
    %v3756 = vadd.f32 %v3751, %v3755
    %v3757 = vxor.u32 %v3756, 2147483648
    %v3758 = vmul.f32 %v3757, 1.442695
    %v3759 = vpow.pop %v3758
    %v3760 = vadd.f32 %v3759, 1.0
    %v3761 = vrcp.pop %v3760
    %v3762 = vmul.f32 1.0, %v3761
    %vm3763 = vcmask 7168
    %3764 = vst.msk [vmem:[%s7] sm:$0xff] %vm3763, %v3762
    // Predicated region
    $region42: #{cdiscriminator_forward.1} parent=1 // pred_check
      _
    $region43: #{cdiscriminator_forward.1} parent=1 // pred_check_branch
      %3766 = sbr.rel (0) target = $region45
    $region44: #{cdiscriminator_forward.1} parent=1 // pred_region
      _
    $region45: #{cdiscriminator_forward.1} parent=1 // pred_fallthru
      _
    // Predicated region
    $region46: #{cdiscriminator_forward.1} parent=1 // pred_check
      _
    $region47: #{cdiscriminator_forward.1} parent=1 // pred_check_branch
      %3768 = sbr.rel (0) target = $region49
    $region48: #{cdiscriminator_forward.1} parent=1 // pred_region
      _
    $region49: #{cdiscriminator_forward.1} parent=1 // pred_fallthru
      _
    %3769 = vsyncpa [#allocation3], 1
    %3770 = vsyncpa [#allocation5], 1

</llo_original>
